<compile_context>
chip_gen: v5e
topology: v5e:2x2
jax: 0.10.0
libtpu: 0.0.40
codegen_flags: <defaults>
</compile_context>

<pallas_src>
import numpy as np
import jax
import jax.numpy as jnp
from jax import lax
from jax.experimental import pallas as pl
from jax.experimental.pallas import tpu as pltpu


def rae_kernel(kids_ref, emb_ref, w_enc_ref, b_enc_ref, w_dec_ref, b_dec_ref,
               j_ref):
    """TB trees per grid step, batched along the matmul M (sublane) dimension.

    kids_ref : VMEM (TB, 2*(L-1)) int32, 0-based child indices of the L-1
               internal nodes of each tree, flattened [k1_0,k2_0,k1_1,...].
    emb_ref  : VMEM (L, TB, E)  leaf embeddings (leaf-major layout).
    w_enc_ref: VMEM (2E, E)     encoder weight (transposed nn.Linear weight).
    b_enc_ref: VMEM (1, E)
    w_dec_ref: VMEM (E, 2E)     fused [decoder_1 | decoder_2] weights.
    b_dec_ref: VMEM (1, 2E)     fused decoder biases.
    j_ref    : VMEM (TB, 128)   per-tree loss J broadcast across 128 lanes.
    """
    L, TB, E = emb_ref.shape

    w_enc = w_enc_ref[...]          # (2E, E)
    b_enc = b_enc_ref[...]          # (1, E)
    w_dec = w_dec_ref[...]          # (E, 2E)
    b_dec = b_dec_ref[...]          # (1, 2E)
    kids = kids_ref[...]            # (TB, 2*(L-1)) int32

    # Node-feature table kept entirely in vregs: nf[n] is the (TB, E) feature
    # of node n for all TB trees.  Leaves 0..L-1 come straight from emb.
    nf = [emb_ref[n] for n in range(L)]

    # Single fused squared-error accumulator: cols 0:E track y1-c1, E:2E y2-c2.
    err = jnp.zeros((TB, 2 * E), jnp.float32)

    for i in range(L - 1):          # internal node L+i, static unrolled loop
        k1 = kids[:, 2 * i:2 * i + 1]          # (TB, 1) int32
        k2 = kids[:, 2 * i + 1:2 * i + 2]      # (TB, 1) int32

        # Branchless gather: a valid tree's node L+i only references nodes
        # < L+i, all of which are already in vregs.
        c1 = nf[0]
        c2 = nf[0]
        for n in range(1, L + i):
            c1 = jnp.where(k1 == n, nf[n], c1)
            c2 = jnp.where(k2 == n, nf[n], c2)

        c_cat = jnp.concatenate([c1, c2], axis=-1)        # (TB, 2E)

        # encode: tanh(Linear(cat(c1, c2))) then L2-normalise (rsqrt on EUP).
        pz = jnp.dot(c_cat, w_enc, preferred_element_type=jnp.float32) + b_enc
        p_un = jnp.tanh(pz)
        p = p_un * lax.rsqrt(jnp.sum(p_un * p_un, axis=-1, keepdims=True))
        nf.append(p)                                       # parent stays in vregs

        # fused decode: one (TB,E)@(E,2E) matmul + one tanh, then per-half norm.
        y = jnp.tanh(jnp.dot(p, w_dec, preferred_element_type=jnp.float32)
                     + b_dec)                              # (TB, 2E)
        y1 = y[:, 0:E]
        y2 = y[:, E:2 * E]
        y1n = y1 * lax.rsqrt(jnp.sum(y1 * y1, axis=-1, keepdims=True))
        y2n = y2 * lax.rsqrt(jnp.sum(y2 * y2, axis=-1, keepdims=True))

        d = jnp.concatenate([y1n, y2n], axis=-1) - c_cat   # (TB, 2E)
        err = err + d * d

    # One cross-lane reduce per tree, written as a lane-dense 128-wide block.
    J = 0.5 * jnp.sum(err, axis=-1, keepdims=True)         # (TB, 1)
    j_ref[...] = jnp.broadcast_to(J, j_ref.shape)


def rae_forward_batched(word_embeddings, kids, params, tb=8):
    """Batched wrapper: returns per-tree reconstruction loss J, shape (B,).

    word_embeddings : (B, L, E) float32 leaf embeddings
    kids            : (B, 2L-1, 2) int32, 1-based child indices (as in module)
    params          : (w_enc (2E,E), b_enc (1,E), w_d1 (E,E), b_d1 (1,E),
                       w_d2 (E,E), b_d2 (1,E))  -- nn.Linear weights transposed
    tb              : trees per grid step (batch tile on the matmul M dim)
    """
    B, L, E = word_embeddings.shape
    assert B % tb == 0, "B must be a multiple of the tree tile tb"
    w_enc, b_enc, w_d1, b_d1, w_d2, b_d2 = params

    # Fuse the two decoders into one matmul.
    w_dec = jnp.concatenate([w_d1, w_d2], axis=1)   # (E, 2E)
    b_dec = jnp.concatenate([b_d1, b_d2], axis=1)   # (1, 2E)

    # Internal-node kid indices only, 0-based, flattened per tree: (B, 2(L-1)).
    kids_int = (kids[:, L:, :].astype(jnp.int32) - 1).reshape(B, 2 * (L - 1))

    # Leaf-major layout so each leaf is a contiguous (tb, E) block in-kernel.
    emb_t = jnp.transpose(word_embeddings, (1, 0, 2))   # (L, B, E)

    out = pl.pallas_call(
        rae_kernel,
        out_shape=jax.ShapeDtypeStruct((B, 128), jnp.float32),
        grid_spec=pltpu.PrefetchScalarGridSpec(
            num_scalar_prefetch=0,
            grid=(B // tb,),
            in_specs=[
                pl.BlockSpec((tb, 2 * (L - 1)), lambda b: (b, 0)),   # kids
                pl.BlockSpec((L, tb, E), lambda b: (0, b, 0)),       # emb
                pl.BlockSpec((2 * E, E), lambda b: (0, 0)),          # w_enc
                pl.BlockSpec((1, E), lambda b: (0, 0)),              # b_enc
                pl.BlockSpec((E, 2 * E), lambda b: (0, 0)),          # w_dec
                pl.BlockSpec((1, 2 * E), lambda b: (0, 0)),          # b_dec
            ],
            out_specs=pl.BlockSpec((tb, 128), lambda b: (b, 0)),
        ),
        compiler_params=pltpu.CompilerParams(
            dimension_semantics=("parallel",)),
    )(kids_int, emb_t, w_enc, b_enc, w_dec, b_dec)
    return out[:, 0]


def rae_forward_ref(word_embedding_matrix, kids_np, params):
    """NumPy float64 reference mirroring the PyTorch forward (is_unfold=0)."""
    w_enc, b_enc, w_d1, b_d1, w_d2, b_d2 = [
        np.asarray(p, np.float64) for p in params]
    emb = np.asarray(word_embedding_matrix, np.float64)
    L, E = emb.shape
    nf = np.concatenate([emb, np.zeros((L - 1, E), np.float64)], axis=0)
    J = 0.0
    for index in range(L, 2 * L - 1):
        k1 = int(kids_np[index, 0]) - 1
        k2 = int(kids_np[index, 1]) - 1
        c1 = nf[k1]
        c2 = nf[k2]
        pu = np.tanh(np.concatenate([c1, c2]) @ w_enc + b_enc[0])
        p = pu / np.linalg.norm(pu)
        nf[index] = p
        y1 = np.tanh(p @ w_d1 + b_d1[0])
        y2 = np.tanh(p @ w_d2 + b_d2[0])
        y1 = y1 / np.linalg.norm(y1)
        y2 = y2 / np.linalg.norm(y2)
        J = J + 0.5 * (np.sum((y1 - c1) ** 2) + np.sum((y2 - c2) ** 2))
    return J


if __name__ == "__main__":
    TB = 8                 # trees per grid step (matmul M tile)
    B = 16                 # batch of trees -> grid=(2,), even for v7x's 2 TCs
    sentence_len = 8       # leaves per tree
    embedding_size = 32    # hidden == embedding (module sets hidden_size = embedding_size)
    L, E = sentence_len, embedding_size

    key = jax.random.PRNGKey(0)
    k_emb, k_we, k_be, k_w1, k_b1, k_w2, k_b2 = jax.random.split(key, 7)

    word_embeddings = jax.random.normal(k_emb, (B, L, E), jnp.float32)

    # Deterministic parameter init (nn.Linear shapes, stored transposed: (in, out)).
    w_enc = 0.1 * jax.random.normal(k_we, (2 * E, E), jnp.float32)
    b_enc = 0.1 * jax.random.normal(k_be, (1, E), jnp.float32)
    w_d1 = 0.1 * jax.random.normal(k_w1, (E, E), jnp.float32)
    b_d1 = 0.1 * jax.random.normal(k_b1, (1, E), jnp.float32)
    w_d2 = 0.1 * jax.random.normal(k_w2, (E, E), jnp.float32)
    b_d2 = 0.1 * jax.random.normal(k_b2, (1, E), jnp.float32)
    params = (w_enc, b_enc, w_d1, b_d1, w_d2, b_d2)

    # Build one merge tree per sentence (1-based kid indices, bottom-up valid).
    kids_np = np.zeros((B, 2 * L - 1, 2), dtype=np.int32)

    def left_chain(k):
        k[L] = [1, 2]
        for i in range(1, L - 1):
            k[L + i] = [L + i, i + 2]

    def balanced(k):              # requires L a power of two (L=8 here)
        nodes = list(range(1, L + 1))
        nxt = L + 1
        while len(nodes) > 1:
            new = []
            for j in range(0, len(nodes), 2):
                k[nxt - 1] = [nodes[j], nodes[j + 1]]
                new.append(nxt)
                nxt += 1
            nodes = new

    def right_chain(k):
        k[L] = [L - 1, L]
        for i in range(1, L - 1):
            k[L + i] = [L - 1 - i, L + i]

    builders = [left_chain, balanced, right_chain]
    for b in range(B):
        builders[b % len(builders)](kids_np[b])

    kids = jnp.asarray(kids_np)

    J = jax.block_until_ready(
        rae_forward_batched(word_embeddings, kids, params, tb=TB))

    emb_np = np.asarray(word_embeddings)
    params_np = [np.asarray(p) for p in params]
    for b in range(B):
        J_ref = rae_forward_ref(emb_np[b], kids_np[b], params_np)
        np.testing.assert_allclose(np.float64(J[b]), J_ref, rtol=1e-3, atol=1e-3)

    print("KERNEL_OK")
</pallas_src>

<mosaic_0001>
module attributes {stable_mosaic.version = 11 : i64} {
  func.func @rae_kernel(%arg0: i32, %arg1: memref<8x14xi32, #tpu.memory_space<vmem>>, %arg2: memref<8x8x32xf32, #tpu.memory_space<vmem>>, %arg3: memref<64x32xf32, #tpu.memory_space<vmem>>, %arg4: memref<1x32xf32, #tpu.memory_space<vmem>>, %arg5: memref<32x64xf32, #tpu.memory_space<vmem>>, %arg6: memref<1x64xf32, #tpu.memory_space<vmem>>, %arg7: memref<8x128xf32, #tpu.memory_space<vmem>>) attributes {dimension_semantics = [#tpu.dimension_semantics<parallel>], iteration_bounds = array<i64: 2>, scalar_prefetch = 0 : i64, scratch_operands = 0 : i64, tpu.core_type = #tpu.core_type<tc>, window_params = [{transform_indices = @transform_0, window_bounds = array<i64: 8, 14>}, {transform_indices = @transform_1, window_bounds = array<i64: 8, 8, 32>}, {pipeline_mode = #tpu.pipeline_mode<synchronous>, transform_indices = @transform_2, window_bounds = array<i64: 64, 32>}, {pipeline_mode = #tpu.pipeline_mode<synchronous>, transform_indices = @transform_3, window_bounds = array<i64: 1, 32>}, {pipeline_mode = #tpu.pipeline_mode<synchronous>, transform_indices = @transform_4, window_bounds = array<i64: 32, 64>}, {pipeline_mode = #tpu.pipeline_mode<synchronous>, transform_indices = @transform_5, window_bounds = array<i64: 1, 64>}, {transform_indices = @transform_6, window_bounds = array<i64: 8, 128>}]} {
    %c0 = arith.constant 0 : index
    %c0_0 = arith.constant 0 : index
    %0 = vector.load %arg3[%c0, %c0_0] : memref<64x32xf32, #tpu.memory_space<vmem>>, vector<64x32xf32>
    %c0_1 = arith.constant 0 : index
    %c0_2 = arith.constant 0 : index
    %1 = vector.load %arg4[%c0_1, %c0_2] : memref<1x32xf32, #tpu.memory_space<vmem>>, vector<1x32xf32>
    %c0_3 = arith.constant 0 : index
    %c0_4 = arith.constant 0 : index
    %2 = vector.load %arg5[%c0_3, %c0_4] : memref<32x64xf32, #tpu.memory_space<vmem>>, vector<32x64xf32>
    %c0_5 = arith.constant 0 : index
    %c0_6 = arith.constant 0 : index
    %3 = vector.load %arg6[%c0_5, %c0_6] : memref<1x64xf32, #tpu.memory_space<vmem>>, vector<1x64xf32>
    %c0_7 = arith.constant 0 : index
    %c0_8 = arith.constant 0 : index
    %4 = vector.load %arg1[%c0_7, %c0_8] : memref<8x14xi32, #tpu.memory_space<vmem>>, vector<8x14xi32>
    %c0_9 = arith.constant 0 : index
    %c0_10 = arith.constant 0 : index
    %c0_11 = arith.constant 0 : index
    %5 = vector.load %arg2[%c0_9, %c0_10, %c0_11] : memref<8x8x32xf32, #tpu.memory_space<vmem>>, vector<1x8x32xf32>
    %6 = vector.shape_cast %5 : vector<1x8x32xf32> to vector<8x32xf32>
    %c1 = arith.constant 1 : index
    %c0_12 = arith.constant 0 : index
    %c0_13 = arith.constant 0 : index
    %7 = vector.load %arg2[%c1, %c0_12, %c0_13] : memref<8x8x32xf32, #tpu.memory_space<vmem>>, vector<1x8x32xf32>
    %8 = vector.shape_cast %7 : vector<1x8x32xf32> to vector<8x32xf32>
    %c2 = arith.constant 2 : index
    %c0_14 = arith.constant 0 : index
    %c0_15 = arith.constant 0 : index
    %9 = vector.load %arg2[%c2, %c0_14, %c0_15] : memref<8x8x32xf32, #tpu.memory_space<vmem>>, vector<1x8x32xf32>
    %10 = vector.shape_cast %9 : vector<1x8x32xf32> to vector<8x32xf32>
    %c3 = arith.constant 3 : index
    %c0_16 = arith.constant 0 : index
    %c0_17 = arith.constant 0 : index
    %11 = vector.load %arg2[%c3, %c0_16, %c0_17] : memref<8x8x32xf32, #tpu.memory_space<vmem>>, vector<1x8x32xf32>
    %12 = vector.shape_cast %11 : vector<1x8x32xf32> to vector<8x32xf32>
    %c4 = arith.constant 4 : index
    %c0_18 = arith.constant 0 : index
    %c0_19 = arith.constant 0 : index
    %13 = vector.load %arg2[%c4, %c0_18, %c0_19] : memref<8x8x32xf32, #tpu.memory_space<vmem>>, vector<1x8x32xf32>
    %14 = vector.shape_cast %13 : vector<1x8x32xf32> to vector<8x32xf32>
    %c5 = arith.constant 5 : index
    %c0_20 = arith.constant 0 : index
    %c0_21 = arith.constant 0 : index
    %15 = vector.load %arg2[%c5, %c0_20, %c0_21] : memref<8x8x32xf32, #tpu.memory_space<vmem>>, vector<1x8x32xf32>
    %16 = vector.shape_cast %15 : vector<1x8x32xf32> to vector<8x32xf32>
    %c6 = arith.constant 6 : index
    %c0_22 = arith.constant 0 : index
    %c0_23 = arith.constant 0 : index
    %17 = vector.load %arg2[%c6, %c0_22, %c0_23] : memref<8x8x32xf32, #tpu.memory_space<vmem>>, vector<1x8x32xf32>
    %18 = vector.shape_cast %17 : vector<1x8x32xf32> to vector<8x32xf32>
    %c7 = arith.constant 7 : index
    %c0_24 = arith.constant 0 : index
    %c0_25 = arith.constant 0 : index
    %19 = vector.load %arg2[%c7, %c0_24, %c0_25] : memref<8x8x32xf32, #tpu.memory_space<vmem>>, vector<1x8x32xf32>
    %20 = vector.shape_cast %19 : vector<1x8x32xf32> to vector<8x32xf32>
    %cst = arith.constant 0.000000e+00 : f32
    %21 = vector.broadcast %cst : f32 to vector<8x64xf32>
    %22 = vector.extract_strided_slice %4 {offsets = [0, 0], sizes = [8, 1], strides = [1, 1]} : vector<8x14xi32> to vector<8x1xi32>
    %23 = vector.extract_strided_slice %4 {offsets = [0, 1], sizes = [8, 1], strides = [1, 1]} : vector<8x14xi32> to vector<8x1xi32>
    %c1_i32 = arith.constant 1 : i32
    %24 = vector.broadcast %c1_i32 : i32 to vector<8x1xi32>
    %25 = arith.cmpi eq, %22, %24 : vector<8x1xi32>
    %26 = vector.shape_cast %25 : vector<8x1xi1> to vector<8x1xi1>
    %27 = vector.broadcast %26 : vector<8x1xi1> to vector<8x32xi1>
    %28 = arith.select %27, %8, %6 : vector<8x32xi1>, vector<8x32xf32>
    %c1_i32_26 = arith.constant 1 : i32
    %29 = vector.broadcast %c1_i32_26 : i32 to vector<8x1xi32>
    %30 = arith.cmpi eq, %23, %29 : vector<8x1xi32>
    %31 = vector.shape_cast %30 : vector<8x1xi1> to vector<8x1xi1>
    %32 = vector.broadcast %31 : vector<8x1xi1> to vector<8x32xi1>
    %33 = arith.select %32, %8, %6 : vector<8x32xi1>, vector<8x32xf32>
    %c2_i32 = arith.constant 2 : i32
    %34 = vector.broadcast %c2_i32 : i32 to vector<8x1xi32>
    %35 = arith.cmpi eq, %22, %34 : vector<8x1xi32>
    %36 = vector.shape_cast %35 : vector<8x1xi1> to vector<8x1xi1>
    %37 = vector.broadcast %36 : vector<8x1xi1> to vector<8x32xi1>
    %38 = arith.select %37, %10, %28 : vector<8x32xi1>, vector<8x32xf32>
    %c2_i32_27 = arith.constant 2 : i32
    %39 = vector.broadcast %c2_i32_27 : i32 to vector<8x1xi32>
    %40 = arith.cmpi eq, %23, %39 : vector<8x1xi32>
    %41 = vector.shape_cast %40 : vector<8x1xi1> to vector<8x1xi1>
    %42 = vector.broadcast %41 : vector<8x1xi1> to vector<8x32xi1>
    %43 = arith.select %42, %10, %33 : vector<8x32xi1>, vector<8x32xf32>
    %c3_i32 = arith.constant 3 : i32
    %44 = vector.broadcast %c3_i32 : i32 to vector<8x1xi32>
    %45 = arith.cmpi eq, %22, %44 : vector<8x1xi32>
    %46 = vector.shape_cast %45 : vector<8x1xi1> to vector<8x1xi1>
    %47 = vector.broadcast %46 : vector<8x1xi1> to vector<8x32xi1>
    %48 = arith.select %47, %12, %38 : vector<8x32xi1>, vector<8x32xf32>
    %c3_i32_28 = arith.constant 3 : i32
    %49 = vector.broadcast %c3_i32_28 : i32 to vector<8x1xi32>
    %50 = arith.cmpi eq, %23, %49 : vector<8x1xi32>
    %51 = vector.shape_cast %50 : vector<8x1xi1> to vector<8x1xi1>
    %52 = vector.broadcast %51 : vector<8x1xi1> to vector<8x32xi1>
    %53 = arith.select %52, %12, %43 : vector<8x32xi1>, vector<8x32xf32>
    %c4_i32 = arith.constant 4 : i32
    %54 = vector.broadcast %c4_i32 : i32 to vector<8x1xi32>
    %55 = arith.cmpi eq, %22, %54 : vector<8x1xi32>
    %56 = vector.shape_cast %55 : vector<8x1xi1> to vector<8x1xi1>
    %57 = vector.broadcast %56 : vector<8x1xi1> to vector<8x32xi1>
    %58 = arith.select %57, %14, %48 : vector<8x32xi1>, vector<8x32xf32>
    %c4_i32_29 = arith.constant 4 : i32
    %59 = vector.broadcast %c4_i32_29 : i32 to vector<8x1xi32>
    %60 = arith.cmpi eq, %23, %59 : vector<8x1xi32>
    %61 = vector.shape_cast %60 : vector<8x1xi1> to vector<8x1xi1>
    %62 = vector.broadcast %61 : vector<8x1xi1> to vector<8x32xi1>
    %63 = arith.select %62, %14, %53 : vector<8x32xi1>, vector<8x32xf32>
    %c5_i32 = arith.constant 5 : i32
    %64 = vector.broadcast %c5_i32 : i32 to vector<8x1xi32>
    %65 = arith.cmpi eq, %22, %64 : vector<8x1xi32>
    %66 = vector.shape_cast %65 : vector<8x1xi1> to vector<8x1xi1>
    %67 = vector.broadcast %66 : vector<8x1xi1> to vector<8x32xi1>
    %68 = arith.select %67, %16, %58 : vector<8x32xi1>, vector<8x32xf32>
    %c5_i32_30 = arith.constant 5 : i32
    %69 = vector.broadcast %c5_i32_30 : i32 to vector<8x1xi32>
    %70 = arith.cmpi eq, %23, %69 : vector<8x1xi32>
    %71 = vector.shape_cast %70 : vector<8x1xi1> to vector<8x1xi1>
    %72 = vector.broadcast %71 : vector<8x1xi1> to vector<8x32xi1>
    %73 = arith.select %72, %16, %63 : vector<8x32xi1>, vector<8x32xf32>
    %c6_i32 = arith.constant 6 : i32
    %74 = vector.broadcast %c6_i32 : i32 to vector<8x1xi32>
    %75 = arith.cmpi eq, %22, %74 : vector<8x1xi32>
    %76 = vector.shape_cast %75 : vector<8x1xi1> to vector<8x1xi1>
    %77 = vector.broadcast %76 : vector<8x1xi1> to vector<8x32xi1>
    %78 = arith.select %77, %18, %68 : vector<8x32xi1>, vector<8x32xf32>
    %c6_i32_31 = arith.constant 6 : i32
    %79 = vector.broadcast %c6_i32_31 : i32 to vector<8x1xi32>
    %80 = arith.cmpi eq, %23, %79 : vector<8x1xi32>
    %81 = vector.shape_cast %80 : vector<8x1xi1> to vector<8x1xi1>
    %82 = vector.broadcast %81 : vector<8x1xi1> to vector<8x32xi1>
    %83 = arith.select %82, %18, %73 : vector<8x32xi1>, vector<8x32xf32>
    %c7_i32 = arith.constant 7 : i32
    %84 = vector.broadcast %c7_i32 : i32 to vector<8x1xi32>
    %85 = arith.cmpi eq, %22, %84 : vector<8x1xi32>
    %86 = vector.shape_cast %85 : vector<8x1xi1> to vector<8x1xi1>
    %87 = vector.broadcast %86 : vector<8x1xi1> to vector<8x32xi1>
    %88 = arith.select %87, %20, %78 : vector<8x32xi1>, vector<8x32xf32>
    %c7_i32_32 = arith.constant 7 : i32
    %89 = vector.broadcast %c7_i32_32 : i32 to vector<8x1xi32>
    %90 = arith.cmpi eq, %23, %89 : vector<8x1xi32>
    %91 = vector.shape_cast %90 : vector<8x1xi1> to vector<8x1xi1>
    %92 = vector.broadcast %91 : vector<8x1xi1> to vector<8x32xi1>
    %93 = arith.select %92, %20, %83 : vector<8x32xi1>, vector<8x32xf32>
    %94 = tpu.concatenate %88, %93 in 1 : vector<8x32xf32>, vector<8x32xf32> -> vector<8x64xf32>
    %cst_33 = arith.constant dense<0.000000e+00> : vector<8x32xf32>
    %95 = tpu.matmul %94, %0, %cst_33 {dimension_numbers = #tpu.dot_dimension_numbers<[1], [0], [0], [1], [0, 0, 1, 1], [], []>} : vector<8x64xf32>, vector<64x32xf32>, vector<8x32xf32> -> vector<8x32xf32>
    %96 = vector.broadcast %1 : vector<1x32xf32> to vector<8x32xf32>
    %97 = arith.addf %95, %96 : vector<8x32xf32>
    %98 = math.tanh %97 : vector<8x32xf32>
    %99 = arith.mulf %98, %98 : vector<8x32xf32>
    %cst_34 = arith.constant dense<0.000000e+00> : vector<8xf32>
    %100 = vector.multi_reduction <add>, %99, %cst_34 [1] : vector<8x32xf32> to vector<8xf32>
    %101 = vector.shape_cast %100 : vector<8xf32> to vector<8x1xf32>
    %102 = math.rsqrt %101 : vector<8x1xf32>
    %103 = vector.broadcast %102 : vector<8x1xf32> to vector<8x32xf32>
    %104 = arith.mulf %98, %103 : vector<8x32xf32>
    %cst_35 = arith.constant dense<0.000000e+00> : vector<8x64xf32>
    %105 = tpu.matmul %104, %2, %cst_35 {dimension_numbers = #tpu.dot_dimension_numbers<[1], [0], [0], [1], [0, 0, 1, 1], [], []>} : vector<8x32xf32>, vector<32x64xf32>, vector<8x64xf32> -> vector<8x64xf32>
    %106 = vector.broadcast %3 : vector<1x64xf32> to vector<8x64xf32>
    %107 = arith.addf %105, %106 : vector<8x64xf32>
    %108 = math.tanh %107 : vector<8x64xf32>
    %109 = vector.extract_strided_slice %108 {offsets = [0, 0], sizes = [8, 32], strides = [1, 1]} : vector<8x64xf32> to vector<8x32xf32>
    %110 = vector.extract_strided_slice %108 {offsets = [0, 32], sizes = [8, 32], strides = [1, 1]} : vector<8x64xf32> to vector<8x32xf32>
    %111 = arith.mulf %109, %109 : vector<8x32xf32>
    %cst_36 = arith.constant dense<0.000000e+00> : vector<8xf32>
    %112 = vector.multi_reduction <add>, %111, %cst_36 [1] : vector<8x32xf32> to vector<8xf32>
    %113 = vector.shape_cast %112 : vector<8xf32> to vector<8x1xf32>
    %114 = math.rsqrt %113 : vector<8x1xf32>
    %115 = vector.broadcast %114 : vector<8x1xf32> to vector<8x32xf32>
    %116 = arith.mulf %109, %115 : vector<8x32xf32>
    %117 = arith.mulf %110, %110 : vector<8x32xf32>
    %cst_37 = arith.constant dense<0.000000e+00> : vector<8xf32>
    %118 = vector.multi_reduction <add>, %117, %cst_37 [1] : vector<8x32xf32> to vector<8xf32>
    %119 = vector.shape_cast %118 : vector<8xf32> to vector<8x1xf32>
    %120 = math.rsqrt %119 : vector<8x1xf32>
    %121 = vector.broadcast %120 : vector<8x1xf32> to vector<8x32xf32>
    %122 = arith.mulf %110, %121 : vector<8x32xf32>
    %123 = tpu.concatenate %116, %122 in 1 : vector<8x32xf32>, vector<8x32xf32> -> vector<8x64xf32>
    %124 = arith.subf %123, %94 : vector<8x64xf32>
    %125 = arith.mulf %124, %124 : vector<8x64xf32>
    %126 = arith.addf %21, %125 : vector<8x64xf32>
    %127 = vector.extract_strided_slice %4 {offsets = [0, 2], sizes = [8, 1], strides = [1, 1]} : vector<8x14xi32> to vector<8x1xi32>
    %128 = vector.extract_strided_slice %4 {offsets = [0, 3], sizes = [8, 1], strides = [1, 1]} : vector<8x14xi32> to vector<8x1xi32>
    %c1_i32_38 = arith.constant 1 : i32
    %129 = vector.broadcast %c1_i32_38 : i32 to vector<8x1xi32>
    %130 = arith.cmpi eq, %127, %129 : vector<8x1xi32>
    %131 = vector.shape_cast %130 : vector<8x1xi1> to vector<8x1xi1>
    %132 = vector.broadcast %131 : vector<8x1xi1> to vector<8x32xi1>
    %133 = arith.select %132, %8, %6 : vector<8x32xi1>, vector<8x32xf32>
    %c1_i32_39 = arith.constant 1 : i32
    %134 = vector.broadcast %c1_i32_39 : i32 to vector<8x1xi32>
    %135 = arith.cmpi eq, %128, %134 : vector<8x1xi32>
    %136 = vector.shape_cast %135 : vector<8x1xi1> to vector<8x1xi1>
    %137 = vector.broadcast %136 : vector<8x1xi1> to vector<8x32xi1>
    %138 = arith.select %137, %8, %6 : vector<8x32xi1>, vector<8x32xf32>
    %c2_i32_40 = arith.constant 2 : i32
    %139 = vector.broadcast %c2_i32_40 : i32 to vector<8x1xi32>
    %140 = arith.cmpi eq, %127, %139 : vector<8x1xi32>
    %141 = vector.shape_cast %140 : vector<8x1xi1> to vector<8x1xi1>
    %142 = vector.broadcast %141 : vector<8x1xi1> to vector<8x32xi1>
    %143 = arith.select %142, %10, %133 : vector<8x32xi1>, vector<8x32xf32>
    %c2_i32_41 = arith.constant 2 : i32
    %144 = vector.broadcast %c2_i32_41 : i32 to vector<8x1xi32>
    %145 = arith.cmpi eq, %128, %144 : vector<8x1xi32>
    %146 = vector.shape_cast %145 : vector<8x1xi1> to vector<8x1xi1>
    %147 = vector.broadcast %146 : vector<8x1xi1> to vector<8x32xi1>
    %148 = arith.select %147, %10, %138 : vector<8x32xi1>, vector<8x32xf32>
    %c3_i32_42 = arith.constant 3 : i32
    %149 = vector.broadcast %c3_i32_42 : i32 to vector<8x1xi32>
    %150 = arith.cmpi eq, %127, %149 : vector<8x1xi32>
    %151 = vector.shape_cast %150 : vector<8x1xi1> to vector<8x1xi1>
    %152 = vector.broadcast %151 : vector<8x1xi1> to vector<8x32xi1>
    %153 = arith.select %152, %12, %143 : vector<8x32xi1>, vector<8x32xf32>
    %c3_i32_43 = arith.constant 3 : i32
    %154 = vector.broadcast %c3_i32_43 : i32 to vector<8x1xi32>
    %155 = arith.cmpi eq, %128, %154 : vector<8x1xi32>
    %156 = vector.shape_cast %155 : vector<8x1xi1> to vector<8x1xi1>
    %157 = vector.broadcast %156 : vector<8x1xi1> to vector<8x32xi1>
    %158 = arith.select %157, %12, %148 : vector<8x32xi1>, vector<8x32xf32>
    %c4_i32_44 = arith.constant 4 : i32
    %159 = vector.broadcast %c4_i32_44 : i32 to vector<8x1xi32>
    %160 = arith.cmpi eq, %127, %159 : vector<8x1xi32>
    %161 = vector.shape_cast %160 : vector<8x1xi1> to vector<8x1xi1>
    %162 = vector.broadcast %161 : vector<8x1xi1> to vector<8x32xi1>
    %163 = arith.select %162, %14, %153 : vector<8x32xi1>, vector<8x32xf32>
    %c4_i32_45 = arith.constant 4 : i32
    %164 = vector.broadcast %c4_i32_45 : i32 to vector<8x1xi32>
    %165 = arith.cmpi eq, %128, %164 : vector<8x1xi32>
    %166 = vector.shape_cast %165 : vector<8x1xi1> to vector<8x1xi1>
    %167 = vector.broadcast %166 : vector<8x1xi1> to vector<8x32xi1>
    %168 = arith.select %167, %14, %158 : vector<8x32xi1>, vector<8x32xf32>
    %c5_i32_46 = arith.constant 5 : i32
    %169 = vector.broadcast %c5_i32_46 : i32 to vector<8x1xi32>
    %170 = arith.cmpi eq, %127, %169 : vector<8x1xi32>
    %171 = vector.shape_cast %170 : vector<8x1xi1> to vector<8x1xi1>
    %172 = vector.broadcast %171 : vector<8x1xi1> to vector<8x32xi1>
    %173 = arith.select %172, %16, %163 : vector<8x32xi1>, vector<8x32xf32>
    %c5_i32_47 = arith.constant 5 : i32
    %174 = vector.broadcast %c5_i32_47 : i32 to vector<8x1xi32>
    %175 = arith.cmpi eq, %128, %174 : vector<8x1xi32>
    %176 = vector.shape_cast %175 : vector<8x1xi1> to vector<8x1xi1>
    %177 = vector.broadcast %176 : vector<8x1xi1> to vector<8x32xi1>
    %178 = arith.select %177, %16, %168 : vector<8x32xi1>, vector<8x32xf32>
    %c6_i32_48 = arith.constant 6 : i32
    %179 = vector.broadcast %c6_i32_48 : i32 to vector<8x1xi32>
    %180 = arith.cmpi eq, %127, %179 : vector<8x1xi32>
    %181 = vector.shape_cast %180 : vector<8x1xi1> to vector<8x1xi1>
    %182 = vector.broadcast %181 : vector<8x1xi1> to vector<8x32xi1>
    %183 = arith.select %182, %18, %173 : vector<8x32xi1>, vector<8x32xf32>
    %c6_i32_49 = arith.constant 6 : i32
    %184 = vector.broadcast %c6_i32_49 : i32 to vector<8x1xi32>
    %185 = arith.cmpi eq, %128, %184 : vector<8x1xi32>
    %186 = vector.shape_cast %185 : vector<8x1xi1> to vector<8x1xi1>
    %187 = vector.broadcast %186 : vector<8x1xi1> to vector<8x32xi1>
    %188 = arith.select %187, %18, %178 : vector<8x32xi1>, vector<8x32xf32>
    %c7_i32_50 = arith.constant 7 : i32
    %189 = vector.broadcast %c7_i32_50 : i32 to vector<8x1xi32>
    %190 = arith.cmpi eq, %127, %189 : vector<8x1xi32>
    %191 = vector.shape_cast %190 : vector<8x1xi1> to vector<8x1xi1>
    %192 = vector.broadcast %191 : vector<8x1xi1> to vector<8x32xi1>
    %193 = arith.select %192, %20, %183 : vector<8x32xi1>, vector<8x32xf32>
    %c7_i32_51 = arith.constant 7 : i32
    %194 = vector.broadcast %c7_i32_51 : i32 to vector<8x1xi32>
    %195 = arith.cmpi eq, %128, %194 : vector<8x1xi32>
    %196 = vector.shape_cast %195 : vector<8x1xi1> to vector<8x1xi1>
    %197 = vector.broadcast %196 : vector<8x1xi1> to vector<8x32xi1>
    %198 = arith.select %197, %20, %188 : vector<8x32xi1>, vector<8x32xf32>
    %c8_i32 = arith.constant 8 : i32
    %199 = vector.broadcast %c8_i32 : i32 to vector<8x1xi32>
    %200 = arith.cmpi eq, %127, %199 : vector<8x1xi32>
    %201 = vector.shape_cast %200 : vector<8x1xi1> to vector<8x1xi1>
    %202 = vector.broadcast %201 : vector<8x1xi1> to vector<8x32xi1>
    %203 = arith.select %202, %104, %193 : vector<8x32xi1>, vector<8x32xf32>
    %c8_i32_52 = arith.constant 8 : i32
    %204 = vector.broadcast %c8_i32_52 : i32 to vector<8x1xi32>
    %205 = arith.cmpi eq, %128, %204 : vector<8x1xi32>
    %206 = vector.shape_cast %205 : vector<8x1xi1> to vector<8x1xi1>
    %207 = vector.broadcast %206 : vector<8x1xi1> to vector<8x32xi1>
    %208 = arith.select %207, %104, %198 : vector<8x32xi1>, vector<8x32xf32>
    %209 = tpu.concatenate %203, %208 in 1 : vector<8x32xf32>, vector<8x32xf32> -> vector<8x64xf32>
    %cst_53 = arith.constant dense<0.000000e+00> : vector<8x32xf32>
    %210 = tpu.matmul %209, %0, %cst_53 {dimension_numbers = #tpu.dot_dimension_numbers<[1], [0], [0], [1], [0, 0, 1, 1], [], []>} : vector<8x64xf32>, vector<64x32xf32>, vector<8x32xf32> -> vector<8x32xf32>
    %211 = vector.broadcast %1 : vector<1x32xf32> to vector<8x32xf32>
    %212 = arith.addf %210, %211 : vector<8x32xf32>
    %213 = math.tanh %212 : vector<8x32xf32>
    %214 = arith.mulf %213, %213 : vector<8x32xf32>
    %cst_54 = arith.constant dense<0.000000e+00> : vector<8xf32>
    %215 = vector.multi_reduction <add>, %214, %cst_54 [1] : vector<8x32xf32> to vector<8xf32>
    %216 = vector.shape_cast %215 : vector<8xf32> to vector<8x1xf32>
    %217 = math.rsqrt %216 : vector<8x1xf32>
    %218 = vector.broadcast %217 : vector<8x1xf32> to vector<8x32xf32>
    %219 = arith.mulf %213, %218 : vector<8x32xf32>
    %cst_55 = arith.constant dense<0.000000e+00> : vector<8x64xf32>
    %220 = tpu.matmul %219, %2, %cst_55 {dimension_numbers = #tpu.dot_dimension_numbers<[1], [0], [0], [1], [0, 0, 1, 1], [], []>} : vector<8x32xf32>, vector<32x64xf32>, vector<8x64xf32> -> vector<8x64xf32>
    %221 = vector.broadcast %3 : vector<1x64xf32> to vector<8x64xf32>
    %222 = arith.addf %220, %221 : vector<8x64xf32>
    %223 = math.tanh %222 : vector<8x64xf32>
    %224 = vector.extract_strided_slice %223 {offsets = [0, 0], sizes = [8, 32], strides = [1, 1]} : vector<8x64xf32> to vector<8x32xf32>
    %225 = vector.extract_strided_slice %223 {offsets = [0, 32], sizes = [8, 32], strides = [1, 1]} : vector<8x64xf32> to vector<8x32xf32>
    %226 = arith.mulf %224, %224 : vector<8x32xf32>
    %cst_56 = arith.constant dense<0.000000e+00> : vector<8xf32>
    %227 = vector.multi_reduction <add>, %226, %cst_56 [1] : vector<8x32xf32> to vector<8xf32>
    %228 = vector.shape_cast %227 : vector<8xf32> to vector<8x1xf32>
    %229 = math.rsqrt %228 : vector<8x1xf32>
    %230 = vector.broadcast %229 : vector<8x1xf32> to vector<8x32xf32>
    %231 = arith.mulf %224, %230 : vector<8x32xf32>
    %232 = arith.mulf %225, %225 : vector<8x32xf32>
    %cst_57 = arith.constant dense<0.000000e+00> : vector<8xf32>
    %233 = vector.multi_reduction <add>, %232, %cst_57 [1] : vector<8x32xf32> to vector<8xf32>
    %234 = vector.shape_cast %233 : vector<8xf32> to vector<8x1xf32>
    %235 = math.rsqrt %234 : vector<8x1xf32>
    %236 = vector.broadcast %235 : vector<8x1xf32> to vector<8x32xf32>
    %237 = arith.mulf %225, %236 : vector<8x32xf32>
    %238 = tpu.concatenate %231, %237 in 1 : vector<8x32xf32>, vector<8x32xf32> -> vector<8x64xf32>
    %239 = arith.subf %238, %209 : vector<8x64xf32>
    %240 = arith.mulf %239, %239 : vector<8x64xf32>
    %241 = arith.addf %126, %240 : vector<8x64xf32>
    %242 = vector.extract_strided_slice %4 {offsets = [0, 4], sizes = [8, 1], strides = [1, 1]} : vector<8x14xi32> to vector<8x1xi32>
    %243 = vector.extract_strided_slice %4 {offsets = [0, 5], sizes = [8, 1], strides = [1, 1]} : vector<8x14xi32> to vector<8x1xi32>
    %c1_i32_58 = arith.constant 1 : i32
    %244 = vector.broadcast %c1_i32_58 : i32 to vector<8x1xi32>
    %245 = arith.cmpi eq, %242, %244 : vector<8x1xi32>
    %246 = vector.shape_cast %245 : vector<8x1xi1> to vector<8x1xi1>
    %247 = vector.broadcast %246 : vector<8x1xi1> to vector<8x32xi1>
    %248 = arith.select %247, %8, %6 : vector<8x32xi1>, vector<8x32xf32>
    %c1_i32_59 = arith.constant 1 : i32
    %249 = vector.broadcast %c1_i32_59 : i32 to vector<8x1xi32>
    %250 = arith.cmpi eq, %243, %249 : vector<8x1xi32>
    %251 = vector.shape_cast %250 : vector<8x1xi1> to vector<8x1xi1>
    %252 = vector.broadcast %251 : vector<8x1xi1> to vector<8x32xi1>
    %253 = arith.select %252, %8, %6 : vector<8x32xi1>, vector<8x32xf32>
    %c2_i32_60 = arith.constant 2 : i32
    %254 = vector.broadcast %c2_i32_60 : i32 to vector<8x1xi32>
    %255 = arith.cmpi eq, %242, %254 : vector<8x1xi32>
    %256 = vector.shape_cast %255 : vector<8x1xi1> to vector<8x1xi1>
    %257 = vector.broadcast %256 : vector<8x1xi1> to vector<8x32xi1>
    %258 = arith.select %257, %10, %248 : vector<8x32xi1>, vector<8x32xf32>
    %c2_i32_61 = arith.constant 2 : i32
    %259 = vector.broadcast %c2_i32_61 : i32 to vector<8x1xi32>
    %260 = arith.cmpi eq, %243, %259 : vector<8x1xi32>
    %261 = vector.shape_cast %260 : vector<8x1xi1> to vector<8x1xi1>
    %262 = vector.broadcast %261 : vector<8x1xi1> to vector<8x32xi1>
    %263 = arith.select %262, %10, %253 : vector<8x32xi1>, vector<8x32xf32>
    %c3_i32_62 = arith.constant 3 : i32
    %264 = vector.broadcast %c3_i32_62 : i32 to vector<8x1xi32>
    %265 = arith.cmpi eq, %242, %264 : vector<8x1xi32>
    %266 = vector.shape_cast %265 : vector<8x1xi1> to vector<8x1xi1>
    %267 = vector.broadcast %266 : vector<8x1xi1> to vector<8x32xi1>
    %268 = arith.select %267, %12, %258 : vector<8x32xi1>, vector<8x32xf32>
    %c3_i32_63 = arith.constant 3 : i32
    %269 = vector.broadcast %c3_i32_63 : i32 to vector<8x1xi32>
    %270 = arith.cmpi eq, %243, %269 : vector<8x1xi32>
    %271 = vector.shape_cast %270 : vector<8x1xi1> to vector<8x1xi1>
    %272 = vector.broadcast %271 : vector<8x1xi1> to vector<8x32xi1>
    %273 = arith.select %272, %12, %263 : vector<8x32xi1>, vector<8x32xf32>
    %c4_i32_64 = arith.constant 4 : i32
    %274 = vector.broadcast %c4_i32_64 : i32 to vector<8x1xi32>
    %275 = arith.cmpi eq, %242, %274 : vector<8x1xi32>
    %276 = vector.shape_cast %275 : vector<8x1xi1> to vector<8x1xi1>
    %277 = vector.broadcast %276 : vector<8x1xi1> to vector<8x32xi1>
    %278 = arith.select %277, %14, %268 : vector<8x32xi1>, vector<8x32xf32>
    %c4_i32_65 = arith.constant 4 : i32
    %279 = vector.broadcast %c4_i32_65 : i32 to vector<8x1xi32>
    %280 = arith.cmpi eq, %243, %279 : vector<8x1xi32>
    %281 = vector.shape_cast %280 : vector<8x1xi1> to vector<8x1xi1>
    %282 = vector.broadcast %281 : vector<8x1xi1> to vector<8x32xi1>
    %283 = arith.select %282, %14, %273 : vector<8x32xi1>, vector<8x32xf32>
    %c5_i32_66 = arith.constant 5 : i32
    %284 = vector.broadcast %c5_i32_66 : i32 to vector<8x1xi32>
    %285 = arith.cmpi eq, %242, %284 : vector<8x1xi32>
    %286 = vector.shape_cast %285 : vector<8x1xi1> to vector<8x1xi1>
    %287 = vector.broadcast %286 : vector<8x1xi1> to vector<8x32xi1>
    %288 = arith.select %287, %16, %278 : vector<8x32xi1>, vector<8x32xf32>
    %c5_i32_67 = arith.constant 5 : i32
    %289 = vector.broadcast %c5_i32_67 : i32 to vector<8x1xi32>
    %290 = arith.cmpi eq, %243, %289 : vector<8x1xi32>
    %291 = vector.shape_cast %290 : vector<8x1xi1> to vector<8x1xi1>
    %292 = vector.broadcast %291 : vector<8x1xi1> to vector<8x32xi1>
    %293 = arith.select %292, %16, %283 : vector<8x32xi1>, vector<8x32xf32>
    %c6_i32_68 = arith.constant 6 : i32
    %294 = vector.broadcast %c6_i32_68 : i32 to vector<8x1xi32>
    %295 = arith.cmpi eq, %242, %294 : vector<8x1xi32>
    %296 = vector.shape_cast %295 : vector<8x1xi1> to vector<8x1xi1>
    %297 = vector.broadcast %296 : vector<8x1xi1> to vector<8x32xi1>
    %298 = arith.select %297, %18, %288 : vector<8x32xi1>, vector<8x32xf32>
    %c6_i32_69 = arith.constant 6 : i32
    %299 = vector.broadcast %c6_i32_69 : i32 to vector<8x1xi32>
    %300 = arith.cmpi eq, %243, %299 : vector<8x1xi32>
    %301 = vector.shape_cast %300 : vector<8x1xi1> to vector<8x1xi1>
    %302 = vector.broadcast %301 : vector<8x1xi1> to vector<8x32xi1>
    %303 = arith.select %302, %18, %293 : vector<8x32xi1>, vector<8x32xf32>
    %c7_i32_70 = arith.constant 7 : i32
    %304 = vector.broadcast %c7_i32_70 : i32 to vector<8x1xi32>
    %305 = arith.cmpi eq, %242, %304 : vector<8x1xi32>
    %306 = vector.shape_cast %305 : vector<8x1xi1> to vector<8x1xi1>
    %307 = vector.broadcast %306 : vector<8x1xi1> to vector<8x32xi1>
    %308 = arith.select %307, %20, %298 : vector<8x32xi1>, vector<8x32xf32>
    %c7_i32_71 = arith.constant 7 : i32
    %309 = vector.broadcast %c7_i32_71 : i32 to vector<8x1xi32>
    %310 = arith.cmpi eq, %243, %309 : vector<8x1xi32>
    %311 = vector.shape_cast %310 : vector<8x1xi1> to vector<8x1xi1>
    %312 = vector.broadcast %311 : vector<8x1xi1> to vector<8x32xi1>
    %313 = arith.select %312, %20, %303 : vector<8x32xi1>, vector<8x32xf32>
    %c8_i32_72 = arith.constant 8 : i32
    %314 = vector.broadcast %c8_i32_72 : i32 to vector<8x1xi32>
    %315 = arith.cmpi eq, %242, %314 : vector<8x1xi32>
    %316 = vector.shape_cast %315 : vector<8x1xi1> to vector<8x1xi1>
    %317 = vector.broadcast %316 : vector<8x1xi1> to vector<8x32xi1>
    %318 = arith.select %317, %104, %308 : vector<8x32xi1>, vector<8x32xf32>
    %c8_i32_73 = arith.constant 8 : i32
    %319 = vector.broadcast %c8_i32_73 : i32 to vector<8x1xi32>
    %320 = arith.cmpi eq, %243, %319 : vector<8x1xi32>
    %321 = vector.shape_cast %320 : vector<8x1xi1> to vector<8x1xi1>
    %322 = vector.broadcast %321 : vector<8x1xi1> to vector<8x32xi1>
    %323 = arith.select %322, %104, %313 : vector<8x32xi1>, vector<8x32xf32>
    %c9_i32 = arith.constant 9 : i32
    %324 = vector.broadcast %c9_i32 : i32 to vector<8x1xi32>
    %325 = arith.cmpi eq, %242, %324 : vector<8x1xi32>
    %326 = vector.shape_cast %325 : vector<8x1xi1> to vector<8x1xi1>
    %327 = vector.broadcast %326 : vector<8x1xi1> to vector<8x32xi1>
    %328 = arith.select %327, %219, %318 : vector<8x32xi1>, vector<8x32xf32>
    %c9_i32_74 = arith.constant 9 : i32
    %329 = vector.broadcast %c9_i32_74 : i32 to vector<8x1xi32>
    %330 = arith.cmpi eq, %243, %329 : vector<8x1xi32>
    %331 = vector.shape_cast %330 : vector<8x1xi1> to vector<8x1xi1>
    %332 = vector.broadcast %331 : vector<8x1xi1> to vector<8x32xi1>
    %333 = arith.select %332, %219, %323 : vector<8x32xi1>, vector<8x32xf32>
    %334 = tpu.concatenate %328, %333 in 1 : vector<8x32xf32>, vector<8x32xf32> -> vector<8x64xf32>
    %cst_75 = arith.constant dense<0.000000e+00> : vector<8x32xf32>
    %335 = tpu.matmul %334, %0, %cst_75 {dimension_numbers = #tpu.dot_dimension_numbers<[1], [0], [0], [1], [0, 0, 1, 1], [], []>} : vector<8x64xf32>, vector<64x32xf32>, vector<8x32xf32> -> vector<8x32xf32>
    %336 = vector.broadcast %1 : vector<1x32xf32> to vector<8x32xf32>
    %337 = arith.addf %335, %336 : vector<8x32xf32>
    %338 = math.tanh %337 : vector<8x32xf32>
    %339 = arith.mulf %338, %338 : vector<8x32xf32>
    %cst_76 = arith.constant dense<0.000000e+00> : vector<8xf32>
    %340 = vector.multi_reduction <add>, %339, %cst_76 [1] : vector<8x32xf32> to vector<8xf32>
    %341 = vector.shape_cast %340 : vector<8xf32> to vector<8x1xf32>
    %342 = math.rsqrt %341 : vector<8x1xf32>
    %343 = vector.broadcast %342 : vector<8x1xf32> to vector<8x32xf32>
    %344 = arith.mulf %338, %343 : vector<8x32xf32>
    %cst_77 = arith.constant dense<0.000000e+00> : vector<8x64xf32>
    %345 = tpu.matmul %344, %2, %cst_77 {dimension_numbers = #tpu.dot_dimension_numbers<[1], [0], [0], [1], [0, 0, 1, 1], [], []>} : vector<8x32xf32>, vector<32x64xf32>, vector<8x64xf32> -> vector<8x64xf32>
    %346 = vector.broadcast %3 : vector<1x64xf32> to vector<8x64xf32>
    %347 = arith.addf %345, %346 : vector<8x64xf32>
    %348 = math.tanh %347 : vector<8x64xf32>
    %349 = vector.extract_strided_slice %348 {offsets = [0, 0], sizes = [8, 32], strides = [1, 1]} : vector<8x64xf32> to vector<8x32xf32>
    %350 = vector.extract_strided_slice %348 {offsets = [0, 32], sizes = [8, 32], strides = [1, 1]} : vector<8x64xf32> to vector<8x32xf32>
    %351 = arith.mulf %349, %349 : vector<8x32xf32>
    %cst_78 = arith.constant dense<0.000000e+00> : vector<8xf32>
    %352 = vector.multi_reduction <add>, %351, %cst_78 [1] : vector<8x32xf32> to vector<8xf32>
    %353 = vector.shape_cast %352 : vector<8xf32> to vector<8x1xf32>
    %354 = math.rsqrt %353 : vector<8x1xf32>
    %355 = vector.broadcast %354 : vector<8x1xf32> to vector<8x32xf32>
    %356 = arith.mulf %349, %355 : vector<8x32xf32>
    %357 = arith.mulf %350, %350 : vector<8x32xf32>
    %cst_79 = arith.constant dense<0.000000e+00> : vector<8xf32>
    %358 = vector.multi_reduction <add>, %357, %cst_79 [1] : vector<8x32xf32> to vector<8xf32>
    %359 = vector.shape_cast %358 : vector<8xf32> to vector<8x1xf32>
    %360 = math.rsqrt %359 : vector<8x1xf32>
    %361 = vector.broadcast %360 : vector<8x1xf32> to vector<8x32xf32>
    %362 = arith.mulf %350, %361 : vector<8x32xf32>
    %363 = tpu.concatenate %356, %362 in 1 : vector<8x32xf32>, vector<8x32xf32> -> vector<8x64xf32>
    %364 = arith.subf %363, %334 : vector<8x64xf32>
    %365 = arith.mulf %364, %364 : vector<8x64xf32>
    %366 = arith.addf %241, %365 : vector<8x64xf32>
    %367 = vector.extract_strided_slice %4 {offsets = [0, 6], sizes = [8, 1], strides = [1, 1]} : vector<8x14xi32> to vector<8x1xi32>
    %368 = vector.extract_strided_slice %4 {offsets = [0, 7], sizes = [8, 1], strides = [1, 1]} : vector<8x14xi32> to vector<8x1xi32>
    %c1_i32_80 = arith.constant 1 : i32
    %369 = vector.broadcast %c1_i32_80 : i32 to vector<8x1xi32>
    %370 = arith.cmpi eq, %367, %369 : vector<8x1xi32>
    %371 = vector.shape_cast %370 : vector<8x1xi1> to vector<8x1xi1>
    %372 = vector.broadcast %371 : vector<8x1xi1> to vector<8x32xi1>
    %373 = arith.select %372, %8, %6 : vector<8x32xi1>, vector<8x32xf32>
    %c1_i32_81 = arith.constant 1 : i32
    %374 = vector.broadcast %c1_i32_81 : i32 to vector<8x1xi32>
    %375 = arith.cmpi eq, %368, %374 : vector<8x1xi32>
    %376 = vector.shape_cast %375 : vector<8x1xi1> to vector<8x1xi1>
    %377 = vector.broadcast %376 : vector<8x1xi1> to vector<8x32xi1>
    %378 = arith.select %377, %8, %6 : vector<8x32xi1>, vector<8x32xf32>
    %c2_i32_82 = arith.constant 2 : i32
    %379 = vector.broadcast %c2_i32_82 : i32 to vector<8x1xi32>
    %380 = arith.cmpi eq, %367, %379 : vector<8x1xi32>
    %381 = vector.shape_cast %380 : vector<8x1xi1> to vector<8x1xi1>
    %382 = vector.broadcast %381 : vector<8x1xi1> to vector<8x32xi1>
    %383 = arith.select %382, %10, %373 : vector<8x32xi1>, vector<8x32xf32>
    %c2_i32_83 = arith.constant 2 : i32
    %384 = vector.broadcast %c2_i32_83 : i32 to vector<8x1xi32>
    %385 = arith.cmpi eq, %368, %384 : vector<8x1xi32>
    %386 = vector.shape_cast %385 : vector<8x1xi1> to vector<8x1xi1>
    %387 = vector.broadcast %386 : vector<8x1xi1> to vector<8x32xi1>
    %388 = arith.select %387, %10, %378 : vector<8x32xi1>, vector<8x32xf32>
    %c3_i32_84 = arith.constant 3 : i32
    %389 = vector.broadcast %c3_i32_84 : i32 to vector<8x1xi32>
    %390 = arith.cmpi eq, %367, %389 : vector<8x1xi32>
    %391 = vector.shape_cast %390 : vector<8x1xi1> to vector<8x1xi1>
    %392 = vector.broadcast %391 : vector<8x1xi1> to vector<8x32xi1>
    %393 = arith.select %392, %12, %383 : vector<8x32xi1>, vector<8x32xf32>
    %c3_i32_85 = arith.constant 3 : i32
    %394 = vector.broadcast %c3_i32_85 : i32 to vector<8x1xi32>
    %395 = arith.cmpi eq, %368, %394 : vector<8x1xi32>
    %396 = vector.shape_cast %395 : vector<8x1xi1> to vector<8x1xi1>
    %397 = vector.broadcast %396 : vector<8x1xi1> to vector<8x32xi1>
    %398 = arith.select %397, %12, %388 : vector<8x32xi1>, vector<8x32xf32>
    %c4_i32_86 = arith.constant 4 : i32
    %399 = vector.broadcast %c4_i32_86 : i32 to vector<8x1xi32>
    %400 = arith.cmpi eq, %367, %399 : vector<8x1xi32>
    %401 = vector.shape_cast %400 : vector<8x1xi1> to vector<8x1xi1>
    %402 = vector.broadcast %401 : vector<8x1xi1> to vector<8x32xi1>
    %403 = arith.select %402, %14, %393 : vector<8x32xi1>, vector<8x32xf32>
    %c4_i32_87 = arith.constant 4 : i32
    %404 = vector.broadcast %c4_i32_87 : i32 to vector<8x1xi32>
    %405 = arith.cmpi eq, %368, %404 : vector<8x1xi32>
    %406 = vector.shape_cast %405 : vector<8x1xi1> to vector<8x1xi1>
    %407 = vector.broadcast %406 : vector<8x1xi1> to vector<8x32xi1>
    %408 = arith.select %407, %14, %398 : vector<8x32xi1>, vector<8x32xf32>
    %c5_i32_88 = arith.constant 5 : i32
    %409 = vector.broadcast %c5_i32_88 : i32 to vector<8x1xi32>
    %410 = arith.cmpi eq, %367, %409 : vector<8x1xi32>
    %411 = vector.shape_cast %410 : vector<8x1xi1> to vector<8x1xi1>
    %412 = vector.broadcast %411 : vector<8x1xi1> to vector<8x32xi1>
    %413 = arith.select %412, %16, %403 : vector<8x32xi1>, vector<8x32xf32>
    %c5_i32_89 = arith.constant 5 : i32
    %414 = vector.broadcast %c5_i32_89 : i32 to vector<8x1xi32>
    %415 = arith.cmpi eq, %368, %414 : vector<8x1xi32>
    %416 = vector.shape_cast %415 : vector<8x1xi1> to vector<8x1xi1>
    %417 = vector.broadcast %416 : vector<8x1xi1> to vector<8x32xi1>
    %418 = arith.select %417, %16, %408 : vector<8x32xi1>, vector<8x32xf32>
    %c6_i32_90 = arith.constant 6 : i32
    %419 = vector.broadcast %c6_i32_90 : i32 to vector<8x1xi32>
    %420 = arith.cmpi eq, %367, %419 : vector<8x1xi32>
    %421 = vector.shape_cast %420 : vector<8x1xi1> to vector<8x1xi1>
    %422 = vector.broadcast %421 : vector<8x1xi1> to vector<8x32xi1>
    %423 = arith.select %422, %18, %413 : vector<8x32xi1>, vector<8x32xf32>
    %c6_i32_91 = arith.constant 6 : i32
    %424 = vector.broadcast %c6_i32_91 : i32 to vector<8x1xi32>
    %425 = arith.cmpi eq, %368, %424 : vector<8x1xi32>
    %426 = vector.shape_cast %425 : vector<8x1xi1> to vector<8x1xi1>
    %427 = vector.broadcast %426 : vector<8x1xi1> to vector<8x32xi1>
    %428 = arith.select %427, %18, %418 : vector<8x32xi1>, vector<8x32xf32>
    %c7_i32_92 = arith.constant 7 : i32
    %429 = vector.broadcast %c7_i32_92 : i32 to vector<8x1xi32>
    %430 = arith.cmpi eq, %367, %429 : vector<8x1xi32>
    %431 = vector.shape_cast %430 : vector<8x1xi1> to vector<8x1xi1>
    %432 = vector.broadcast %431 : vector<8x1xi1> to vector<8x32xi1>
    %433 = arith.select %432, %20, %423 : vector<8x32xi1>, vector<8x32xf32>
    %c7_i32_93 = arith.constant 7 : i32
    %434 = vector.broadcast %c7_i32_93 : i32 to vector<8x1xi32>
    %435 = arith.cmpi eq, %368, %434 : vector<8x1xi32>
    %436 = vector.shape_cast %435 : vector<8x1xi1> to vector<8x1xi1>
    %437 = vector.broadcast %436 : vector<8x1xi1> to vector<8x32xi1>
    %438 = arith.select %437, %20, %428 : vector<8x32xi1>, vector<8x32xf32>
    %c8_i32_94 = arith.constant 8 : i32
    %439 = vector.broadcast %c8_i32_94 : i32 to vector<8x1xi32>
    %440 = arith.cmpi eq, %367, %439 : vector<8x1xi32>
    %441 = vector.shape_cast %440 : vector<8x1xi1> to vector<8x1xi1>
    %442 = vector.broadcast %441 : vector<8x1xi1> to vector<8x32xi1>
    %443 = arith.select %442, %104, %433 : vector<8x32xi1>, vector<8x32xf32>
    %c8_i32_95 = arith.constant 8 : i32
    %444 = vector.broadcast %c8_i32_95 : i32 to vector<8x1xi32>
    %445 = arith.cmpi eq, %368, %444 : vector<8x1xi32>
    %446 = vector.shape_cast %445 : vector<8x1xi1> to vector<8x1xi1>
    %447 = vector.broadcast %446 : vector<8x1xi1> to vector<8x32xi1>
    %448 = arith.select %447, %104, %438 : vector<8x32xi1>, vector<8x32xf32>
    %c9_i32_96 = arith.constant 9 : i32
    %449 = vector.broadcast %c9_i32_96 : i32 to vector<8x1xi32>
    %450 = arith.cmpi eq, %367, %449 : vector<8x1xi32>
    %451 = vector.shape_cast %450 : vector<8x1xi1> to vector<8x1xi1>
    %452 = vector.broadcast %451 : vector<8x1xi1> to vector<8x32xi1>
    %453 = arith.select %452, %219, %443 : vector<8x32xi1>, vector<8x32xf32>
    %c9_i32_97 = arith.constant 9 : i32
    %454 = vector.broadcast %c9_i32_97 : i32 to vector<8x1xi32>
    %455 = arith.cmpi eq, %368, %454 : vector<8x1xi32>
    %456 = vector.shape_cast %455 : vector<8x1xi1> to vector<8x1xi1>
    %457 = vector.broadcast %456 : vector<8x1xi1> to vector<8x32xi1>
    %458 = arith.select %457, %219, %448 : vector<8x32xi1>, vector<8x32xf32>
    %c10_i32 = arith.constant 10 : i32
    %459 = vector.broadcast %c10_i32 : i32 to vector<8x1xi32>
    %460 = arith.cmpi eq, %367, %459 : vector<8x1xi32>
    %461 = vector.shape_cast %460 : vector<8x1xi1> to vector<8x1xi1>
    %462 = vector.broadcast %461 : vector<8x1xi1> to vector<8x32xi1>
    %463 = arith.select %462, %344, %453 : vector<8x32xi1>, vector<8x32xf32>
    %c10_i32_98 = arith.constant 10 : i32
    %464 = vector.broadcast %c10_i32_98 : i32 to vector<8x1xi32>
    %465 = arith.cmpi eq, %368, %464 : vector<8x1xi32>
    %466 = vector.shape_cast %465 : vector<8x1xi1> to vector<8x1xi1>
    %467 = vector.broadcast %466 : vector<8x1xi1> to vector<8x32xi1>
    %468 = arith.select %467, %344, %458 : vector<8x32xi1>, vector<8x32xf32>
    %469 = tpu.concatenate %463, %468 in 1 : vector<8x32xf32>, vector<8x32xf32> -> vector<8x64xf32>
    %cst_99 = arith.constant dense<0.000000e+00> : vector<8x32xf32>
    %470 = tpu.matmul %469, %0, %cst_99 {dimension_numbers = #tpu.dot_dimension_numbers<[1], [0], [0], [1], [0, 0, 1, 1], [], []>} : vector<8x64xf32>, vector<64x32xf32>, vector<8x32xf32> -> vector<8x32xf32>
    %471 = vector.broadcast %1 : vector<1x32xf32> to vector<8x32xf32>
    %472 = arith.addf %470, %471 : vector<8x32xf32>
    %473 = math.tanh %472 : vector<8x32xf32>
    %474 = arith.mulf %473, %473 : vector<8x32xf32>
    %cst_100 = arith.constant dense<0.000000e+00> : vector<8xf32>
    %475 = vector.multi_reduction <add>, %474, %cst_100 [1] : vector<8x32xf32> to vector<8xf32>
    %476 = vector.shape_cast %475 : vector<8xf32> to vector<8x1xf32>
    %477 = math.rsqrt %476 : vector<8x1xf32>
    %478 = vector.broadcast %477 : vector<8x1xf32> to vector<8x32xf32>
    %479 = arith.mulf %473, %478 : vector<8x32xf32>
    %cst_101 = arith.constant dense<0.000000e+00> : vector<8x64xf32>
    %480 = tpu.matmul %479, %2, %cst_101 {dimension_numbers = #tpu.dot_dimension_numbers<[1], [0], [0], [1], [0, 0, 1, 1], [], []>} : vector<8x32xf32>, vector<32x64xf32>, vector<8x64xf32> -> vector<8x64xf32>
    %481 = vector.broadcast %3 : vector<1x64xf32> to vector<8x64xf32>
    %482 = arith.addf %480, %481 : vector<8x64xf32>
    %483 = math.tanh %482 : vector<8x64xf32>
    %484 = vector.extract_strided_slice %483 {offsets = [0, 0], sizes = [8, 32], strides = [1, 1]} : vector<8x64xf32> to vector<8x32xf32>
    %485 = vector.extract_strided_slice %483 {offsets = [0, 32], sizes = [8, 32], strides = [1, 1]} : vector<8x64xf32> to vector<8x32xf32>
    %486 = arith.mulf %484, %484 : vector<8x32xf32>
    %cst_102 = arith.constant dense<0.000000e+00> : vector<8xf32>
    %487 = vector.multi_reduction <add>, %486, %cst_102 [1] : vector<8x32xf32> to vector<8xf32>
    %488 = vector.shape_cast %487 : vector<8xf32> to vector<8x1xf32>
    %489 = math.rsqrt %488 : vector<8x1xf32>
    %490 = vector.broadcast %489 : vector<8x1xf32> to vector<8x32xf32>
    %491 = arith.mulf %484, %490 : vector<8x32xf32>
    %492 = arith.mulf %485, %485 : vector<8x32xf32>
    %cst_103 = arith.constant dense<0.000000e+00> : vector<8xf32>
    %493 = vector.multi_reduction <add>, %492, %cst_103 [1] : vector<8x32xf32> to vector<8xf32>
    %494 = vector.shape_cast %493 : vector<8xf32> to vector<8x1xf32>
    %495 = math.rsqrt %494 : vector<8x1xf32>
    %496 = vector.broadcast %495 : vector<8x1xf32> to vector<8x32xf32>
    %497 = arith.mulf %485, %496 : vector<8x32xf32>
    %498 = tpu.concatenate %491, %497 in 1 : vector<8x32xf32>, vector<8x32xf32> -> vector<8x64xf32>
    %499 = arith.subf %498, %469 : vector<8x64xf32>
    %500 = arith.mulf %499, %499 : vector<8x64xf32>
    %501 = arith.addf %366, %500 : vector<8x64xf32>
    %502 = vector.extract_strided_slice %4 {offsets = [0, 8], sizes = [8, 1], strides = [1, 1]} : vector<8x14xi32> to vector<8x1xi32>
    %503 = vector.extract_strided_slice %4 {offsets = [0, 9], sizes = [8, 1], strides = [1, 1]} : vector<8x14xi32> to vector<8x1xi32>
    %c1_i32_104 = arith.constant 1 : i32
    %504 = vector.broadcast %c1_i32_104 : i32 to vector<8x1xi32>
    %505 = arith.cmpi eq, %502, %504 : vector<8x1xi32>
    %506 = vector.shape_cast %505 : vector<8x1xi1> to vector<8x1xi1>
    %507 = vector.broadcast %506 : vector<8x1xi1> to vector<8x32xi1>
    %508 = arith.select %507, %8, %6 : vector<8x32xi1>, vector<8x32xf32>
    %c1_i32_105 = arith.constant 1 : i32
    %509 = vector.broadcast %c1_i32_105 : i32 to vector<8x1xi32>
    %510 = arith.cmpi eq, %503, %509 : vector<8x1xi32>
    %511 = vector.shape_cast %510 : vector<8x1xi1> to vector<8x1xi1>
    %512 = vector.broadcast %511 : vector<8x1xi1> to vector<8x32xi1>
    %513 = arith.select %512, %8, %6 : vector<8x32xi1>, vector<8x32xf32>
    %c2_i32_106 = arith.constant 2 : i32
    %514 = vector.broadcast %c2_i32_106 : i32 to vector<8x1xi32>
    %515 = arith.cmpi eq, %502, %514 : vector<8x1xi32>
    %516 = vector.shape_cast %515 : vector<8x1xi1> to vector<8x1xi1>
    %517 = vector.broadcast %516 : vector<8x1xi1> to vector<8x32xi1>
    %518 = arith.select %517, %10, %508 : vector<8x32xi1>, vector<8x32xf32>
    %c2_i32_107 = arith.constant 2 : i32
    %519 = vector.broadcast %c2_i32_107 : i32 to vector<8x1xi32>
    %520 = arith.cmpi eq, %503, %519 : vector<8x1xi32>
    %521 = vector.shape_cast %520 : vector<8x1xi1> to vector<8x1xi1>
    %522 = vector.broadcast %521 : vector<8x1xi1> to vector<8x32xi1>
    %523 = arith.select %522, %10, %513 : vector<8x32xi1>, vector<8x32xf32>
    %c3_i32_108 = arith.constant 3 : i32
    %524 = vector.broadcast %c3_i32_108 : i32 to vector<8x1xi32>
    %525 = arith.cmpi eq, %502, %524 : vector<8x1xi32>
    %526 = vector.shape_cast %525 : vector<8x1xi1> to vector<8x1xi1>
    %527 = vector.broadcast %526 : vector<8x1xi1> to vector<8x32xi1>
    %528 = arith.select %527, %12, %518 : vector<8x32xi1>, vector<8x32xf32>
    %c3_i32_109 = arith.constant 3 : i32
    %529 = vector.broadcast %c3_i32_109 : i32 to vector<8x1xi32>
    %530 = arith.cmpi eq, %503, %529 : vector<8x1xi32>
    %531 = vector.shape_cast %530 : vector<8x1xi1> to vector<8x1xi1>
    %532 = vector.broadcast %531 : vector<8x1xi1> to vector<8x32xi1>
    %533 = arith.select %532, %12, %523 : vector<8x32xi1>, vector<8x32xf32>
    %c4_i32_110 = arith.constant 4 : i32
    %534 = vector.broadcast %c4_i32_110 : i32 to vector<8x1xi32>
    %535 = arith.cmpi eq, %502, %534 : vector<8x1xi32>
    %536 = vector.shape_cast %535 : vector<8x1xi1> to vector<8x1xi1>
    %537 = vector.broadcast %536 : vector<8x1xi1> to vector<8x32xi1>
    %538 = arith.select %537, %14, %528 : vector<8x32xi1>, vector<8x32xf32>
    %c4_i32_111 = arith.constant 4 : i32
    %539 = vector.broadcast %c4_i32_111 : i32 to vector<8x1xi32>
    %540 = arith.cmpi eq, %503, %539 : vector<8x1xi32>
    %541 = vector.shape_cast %540 : vector<8x1xi1> to vector<8x1xi1>
    %542 = vector.broadcast %541 : vector<8x1xi1> to vector<8x32xi1>
    %543 = arith.select %542, %14, %533 : vector<8x32xi1>, vector<8x32xf32>
    %c5_i32_112 = arith.constant 5 : i32
    %544 = vector.broadcast %c5_i32_112 : i32 to vector<8x1xi32>
    %545 = arith.cmpi eq, %502, %544 : vector<8x1xi32>
    %546 = vector.shape_cast %545 : vector<8x1xi1> to vector<8x1xi1>
    %547 = vector.broadcast %546 : vector<8x1xi1> to vector<8x32xi1>
    %548 = arith.select %547, %16, %538 : vector<8x32xi1>, vector<8x32xf32>
    %c5_i32_113 = arith.constant 5 : i32
    %549 = vector.broadcast %c5_i32_113 : i32 to vector<8x1xi32>
    %550 = arith.cmpi eq, %503, %549 : vector<8x1xi32>
    %551 = vector.shape_cast %550 : vector<8x1xi1> to vector<8x1xi1>
    %552 = vector.broadcast %551 : vector<8x1xi1> to vector<8x32xi1>
    %553 = arith.select %552, %16, %543 : vector<8x32xi1>, vector<8x32xf32>
    %c6_i32_114 = arith.constant 6 : i32
    %554 = vector.broadcast %c6_i32_114 : i32 to vector<8x1xi32>
    %555 = arith.cmpi eq, %502, %554 : vector<8x1xi32>
    %556 = vector.shape_cast %555 : vector<8x1xi1> to vector<8x1xi1>
    %557 = vector.broadcast %556 : vector<8x1xi1> to vector<8x32xi1>
    %558 = arith.select %557, %18, %548 : vector<8x32xi1>, vector<8x32xf32>
    %c6_i32_115 = arith.constant 6 : i32
    %559 = vector.broadcast %c6_i32_115 : i32 to vector<8x1xi32>
    %560 = arith.cmpi eq, %503, %559 : vector<8x1xi32>
    %561 = vector.shape_cast %560 : vector<8x1xi1> to vector<8x1xi1>
    %562 = vector.broadcast %561 : vector<8x1xi1> to vector<8x32xi1>
    %563 = arith.select %562, %18, %553 : vector<8x32xi1>, vector<8x32xf32>
    %c7_i32_116 = arith.constant 7 : i32
    %564 = vector.broadcast %c7_i32_116 : i32 to vector<8x1xi32>
    %565 = arith.cmpi eq, %502, %564 : vector<8x1xi32>
    %566 = vector.shape_cast %565 : vector<8x1xi1> to vector<8x1xi1>
    %567 = vector.broadcast %566 : vector<8x1xi1> to vector<8x32xi1>
    %568 = arith.select %567, %20, %558 : vector<8x32xi1>, vector<8x32xf32>
    %c7_i32_117 = arith.constant 7 : i32
    %569 = vector.broadcast %c7_i32_117 : i32 to vector<8x1xi32>
    %570 = arith.cmpi eq, %503, %569 : vector<8x1xi32>
    %571 = vector.shape_cast %570 : vector<8x1xi1> to vector<8x1xi1>
    %572 = vector.broadcast %571 : vector<8x1xi1> to vector<8x32xi1>
    %573 = arith.select %572, %20, %563 : vector<8x32xi1>, vector<8x32xf32>
    %c8_i32_118 = arith.constant 8 : i32
    %574 = vector.broadcast %c8_i32_118 : i32 to vector<8x1xi32>
    %575 = arith.cmpi eq, %502, %574 : vector<8x1xi32>
    %576 = vector.shape_cast %575 : vector<8x1xi1> to vector<8x1xi1>
    %577 = vector.broadcast %576 : vector<8x1xi1> to vector<8x32xi1>
    %578 = arith.select %577, %104, %568 : vector<8x32xi1>, vector<8x32xf32>
    %c8_i32_119 = arith.constant 8 : i32
    %579 = vector.broadcast %c8_i32_119 : i32 to vector<8x1xi32>
    %580 = arith.cmpi eq, %503, %579 : vector<8x1xi32>
    %581 = vector.shape_cast %580 : vector<8x1xi1> to vector<8x1xi1>
    %582 = vector.broadcast %581 : vector<8x1xi1> to vector<8x32xi1>
    %583 = arith.select %582, %104, %573 : vector<8x32xi1>, vector<8x32xf32>
    %c9_i32_120 = arith.constant 9 : i32
    %584 = vector.broadcast %c9_i32_120 : i32 to vector<8x1xi32>
    %585 = arith.cmpi eq, %502, %584 : vector<8x1xi32>
    %586 = vector.shape_cast %585 : vector<8x1xi1> to vector<8x1xi1>
    %587 = vector.broadcast %586 : vector<8x1xi1> to vector<8x32xi1>
    %588 = arith.select %587, %219, %578 : vector<8x32xi1>, vector<8x32xf32>
    %c9_i32_121 = arith.constant 9 : i32
    %589 = vector.broadcast %c9_i32_121 : i32 to vector<8x1xi32>
    %590 = arith.cmpi eq, %503, %589 : vector<8x1xi32>
    %591 = vector.shape_cast %590 : vector<8x1xi1> to vector<8x1xi1>
    %592 = vector.broadcast %591 : vector<8x1xi1> to vector<8x32xi1>
    %593 = arith.select %592, %219, %583 : vector<8x32xi1>, vector<8x32xf32>
    %c10_i32_122 = arith.constant 10 : i32
    %594 = vector.broadcast %c10_i32_122 : i32 to vector<8x1xi32>
    %595 = arith.cmpi eq, %502, %594 : vector<8x1xi32>
    %596 = vector.shape_cast %595 : vector<8x1xi1> to vector<8x1xi1>
    %597 = vector.broadcast %596 : vector<8x1xi1> to vector<8x32xi1>
    %598 = arith.select %597, %344, %588 : vector<8x32xi1>, vector<8x32xf32>
    %c10_i32_123 = arith.constant 10 : i32
    %599 = vector.broadcast %c10_i32_123 : i32 to vector<8x1xi32>
    %600 = arith.cmpi eq, %503, %599 : vector<8x1xi32>
    %601 = vector.shape_cast %600 : vector<8x1xi1> to vector<8x1xi1>
    %602 = vector.broadcast %601 : vector<8x1xi1> to vector<8x32xi1>
    %603 = arith.select %602, %344, %593 : vector<8x32xi1>, vector<8x32xf32>
    %c11_i32 = arith.constant 11 : i32
    %604 = vector.broadcast %c11_i32 : i32 to vector<8x1xi32>
    %605 = arith.cmpi eq, %502, %604 : vector<8x1xi32>
    %606 = vector.shape_cast %605 : vector<8x1xi1> to vector<8x1xi1>
    %607 = vector.broadcast %606 : vector<8x1xi1> to vector<8x32xi1>
    %608 = arith.select %607, %479, %598 : vector<8x32xi1>, vector<8x32xf32>
    %c11_i32_124 = arith.constant 11 : i32
    %609 = vector.broadcast %c11_i32_124 : i32 to vector<8x1xi32>
    %610 = arith.cmpi eq, %503, %609 : vector<8x1xi32>
    %611 = vector.shape_cast %610 : vector<8x1xi1> to vector<8x1xi1>
    %612 = vector.broadcast %611 : vector<8x1xi1> to vector<8x32xi1>
    %613 = arith.select %612, %479, %603 : vector<8x32xi1>, vector<8x32xf32>
    %614 = tpu.concatenate %608, %613 in 1 : vector<8x32xf32>, vector<8x32xf32> -> vector<8x64xf32>
    %cst_125 = arith.constant dense<0.000000e+00> : vector<8x32xf32>
    %615 = tpu.matmul %614, %0, %cst_125 {dimension_numbers = #tpu.dot_dimension_numbers<[1], [0], [0], [1], [0, 0, 1, 1], [], []>} : vector<8x64xf32>, vector<64x32xf32>, vector<8x32xf32> -> vector<8x32xf32>
    %616 = vector.broadcast %1 : vector<1x32xf32> to vector<8x32xf32>
    %617 = arith.addf %615, %616 : vector<8x32xf32>
    %618 = math.tanh %617 : vector<8x32xf32>
    %619 = arith.mulf %618, %618 : vector<8x32xf32>
    %cst_126 = arith.constant dense<0.000000e+00> : vector<8xf32>
    %620 = vector.multi_reduction <add>, %619, %cst_126 [1] : vector<8x32xf32> to vector<8xf32>
    %621 = vector.shape_cast %620 : vector<8xf32> to vector<8x1xf32>
    %622 = math.rsqrt %621 : vector<8x1xf32>
    %623 = vector.broadcast %622 : vector<8x1xf32> to vector<8x32xf32>
    %624 = arith.mulf %618, %623 : vector<8x32xf32>
    %cst_127 = arith.constant dense<0.000000e+00> : vector<8x64xf32>
    %625 = tpu.matmul %624, %2, %cst_127 {dimension_numbers = #tpu.dot_dimension_numbers<[1], [0], [0], [1], [0, 0, 1, 1], [], []>} : vector<8x32xf32>, vector<32x64xf32>, vector<8x64xf32> -> vector<8x64xf32>
    %626 = vector.broadcast %3 : vector<1x64xf32> to vector<8x64xf32>
    %627 = arith.addf %625, %626 : vector<8x64xf32>
    %628 = math.tanh %627 : vector<8x64xf32>
    %629 = vector.extract_strided_slice %628 {offsets = [0, 0], sizes = [8, 32], strides = [1, 1]} : vector<8x64xf32> to vector<8x32xf32>
    %630 = vector.extract_strided_slice %628 {offsets = [0, 32], sizes = [8, 32], strides = [1, 1]} : vector<8x64xf32> to vector<8x32xf32>
    %631 = arith.mulf %629, %629 : vector<8x32xf32>
    %cst_128 = arith.constant dense<0.000000e+00> : vector<8xf32>
    %632 = vector.multi_reduction <add>, %631, %cst_128 [1] : vector<8x32xf32> to vector<8xf32>
    %633 = vector.shape_cast %632 : vector<8xf32> to vector<8x1xf32>
    %634 = math.rsqrt %633 : vector<8x1xf32>
    %635 = vector.broadcast %634 : vector<8x1xf32> to vector<8x32xf32>
    %636 = arith.mulf %629, %635 : vector<8x32xf32>
    %637 = arith.mulf %630, %630 : vector<8x32xf32>
    %cst_129 = arith.constant dense<0.000000e+00> : vector<8xf32>
    %638 = vector.multi_reduction <add>, %637, %cst_129 [1] : vector<8x32xf32> to vector<8xf32>
    %639 = vector.shape_cast %638 : vector<8xf32> to vector<8x1xf32>
    %640 = math.rsqrt %639 : vector<8x1xf32>
    %641 = vector.broadcast %640 : vector<8x1xf32> to vector<8x32xf32>
    %642 = arith.mulf %630, %641 : vector<8x32xf32>
    %643 = tpu.concatenate %636, %642 in 1 : vector<8x32xf32>, vector<8x32xf32> -> vector<8x64xf32>
    %644 = arith.subf %643, %614 : vector<8x64xf32>
    %645 = arith.mulf %644, %644 : vector<8x64xf32>
    %646 = arith.addf %501, %645 : vector<8x64xf32>
    %647 = vector.extract_strided_slice %4 {offsets = [0, 10], sizes = [8, 1], strides = [1, 1]} : vector<8x14xi32> to vector<8x1xi32>
    %648 = vector.extract_strided_slice %4 {offsets = [0, 11], sizes = [8, 1], strides = [1, 1]} : vector<8x14xi32> to vector<8x1xi32>
    %c1_i32_130 = arith.constant 1 : i32
    %649 = vector.broadcast %c1_i32_130 : i32 to vector<8x1xi32>
    %650 = arith.cmpi eq, %647, %649 : vector<8x1xi32>
    %651 = vector.shape_cast %650 : vector<8x1xi1> to vector<8x1xi1>
    %652 = vector.broadcast %651 : vector<8x1xi1> to vector<8x32xi1>
    %653 = arith.select %652, %8, %6 : vector<8x32xi1>, vector<8x32xf32>
    %c1_i32_131 = arith.constant 1 : i32
    %654 = vector.broadcast %c1_i32_131 : i32 to vector<8x1xi32>
    %655 = arith.cmpi eq, %648, %654 : vector<8x1xi32>
    %656 = vector.shape_cast %655 : vector<8x1xi1> to vector<8x1xi1>
    %657 = vector.broadcast %656 : vector<8x1xi1> to vector<8x32xi1>
    %658 = arith.select %657, %8, %6 : vector<8x32xi1>, vector<8x32xf32>
    %c2_i32_132 = arith.constant 2 : i32
    %659 = vector.broadcast %c2_i32_132 : i32 to vector<8x1xi32>
    %660 = arith.cmpi eq, %647, %659 : vector<8x1xi32>
    %661 = vector.shape_cast %660 : vector<8x1xi1> to vector<8x1xi1>
    %662 = vector.broadcast %661 : vector<8x1xi1> to vector<8x32xi1>
    %663 = arith.select %662, %10, %653 : vector<8x32xi1>, vector<8x32xf32>
    %c2_i32_133 = arith.constant 2 : i32
    %664 = vector.broadcast %c2_i32_133 : i32 to vector<8x1xi32>
    %665 = arith.cmpi eq, %648, %664 : vector<8x1xi32>
    %666 = vector.shape_cast %665 : vector<8x1xi1> to vector<8x1xi1>
    %667 = vector.broadcast %666 : vector<8x1xi1> to vector<8x32xi1>
    %668 = arith.select %667, %10, %658 : vector<8x32xi1>, vector<8x32xf32>
    %c3_i32_134 = arith.constant 3 : i32
    %669 = vector.broadcast %c3_i32_134 : i32 to vector<8x1xi32>
    %670 = arith.cmpi eq, %647, %669 : vector<8x1xi32>
    %671 = vector.shape_cast %670 : vector<8x1xi1> to vector<8x1xi1>
    %672 = vector.broadcast %671 : vector<8x1xi1> to vector<8x32xi1>
    %673 = arith.select %672, %12, %663 : vector<8x32xi1>, vector<8x32xf32>
    %c3_i32_135 = arith.constant 3 : i32
    %674 = vector.broadcast %c3_i32_135 : i32 to vector<8x1xi32>
    %675 = arith.cmpi eq, %648, %674 : vector<8x1xi32>
    %676 = vector.shape_cast %675 : vector<8x1xi1> to vector<8x1xi1>
    %677 = vector.broadcast %676 : vector<8x1xi1> to vector<8x32xi1>
    %678 = arith.select %677, %12, %668 : vector<8x32xi1>, vector<8x32xf32>
    %c4_i32_136 = arith.constant 4 : i32
    %679 = vector.broadcast %c4_i32_136 : i32 to vector<8x1xi32>
    %680 = arith.cmpi eq, %647, %679 : vector<8x1xi32>
    %681 = vector.shape_cast %680 : vector<8x1xi1> to vector<8x1xi1>
    %682 = vector.broadcast %681 : vector<8x1xi1> to vector<8x32xi1>
    %683 = arith.select %682, %14, %673 : vector<8x32xi1>, vector<8x32xf32>
    %c4_i32_137 = arith.constant 4 : i32
    %684 = vector.broadcast %c4_i32_137 : i32 to vector<8x1xi32>
    %685 = arith.cmpi eq, %648, %684 : vector<8x1xi32>
    %686 = vector.shape_cast %685 : vector<8x1xi1> to vector<8x1xi1>
    %687 = vector.broadcast %686 : vector<8x1xi1> to vector<8x32xi1>
    %688 = arith.select %687, %14, %678 : vector<8x32xi1>, vector<8x32xf32>
    %c5_i32_138 = arith.constant 5 : i32
    %689 = vector.broadcast %c5_i32_138 : i32 to vector<8x1xi32>
    %690 = arith.cmpi eq, %647, %689 : vector<8x1xi32>
    %691 = vector.shape_cast %690 : vector<8x1xi1> to vector<8x1xi1>
    %692 = vector.broadcast %691 : vector<8x1xi1> to vector<8x32xi1>
    %693 = arith.select %692, %16, %683 : vector<8x32xi1>, vector<8x32xf32>
    %c5_i32_139 = arith.constant 5 : i32
    %694 = vector.broadcast %c5_i32_139 : i32 to vector<8x1xi32>
    %695 = arith.cmpi eq, %648, %694 : vector<8x1xi32>
    %696 = vector.shape_cast %695 : vector<8x1xi1> to vector<8x1xi1>
    %697 = vector.broadcast %696 : vector<8x1xi1> to vector<8x32xi1>
    %698 = arith.select %697, %16, %688 : vector<8x32xi1>, vector<8x32xf32>
    %c6_i32_140 = arith.constant 6 : i32
    %699 = vector.broadcast %c6_i32_140 : i32 to vector<8x1xi32>
    %700 = arith.cmpi eq, %647, %699 : vector<8x1xi32>
    %701 = vector.shape_cast %700 : vector<8x1xi1> to vector<8x1xi1>
    %702 = vector.broadcast %701 : vector<8x1xi1> to vector<8x32xi1>
    %703 = arith.select %702, %18, %693 : vector<8x32xi1>, vector<8x32xf32>
    %c6_i32_141 = arith.constant 6 : i32
    %704 = vector.broadcast %c6_i32_141 : i32 to vector<8x1xi32>
    %705 = arith.cmpi eq, %648, %704 : vector<8x1xi32>
    %706 = vector.shape_cast %705 : vector<8x1xi1> to vector<8x1xi1>
    %707 = vector.broadcast %706 : vector<8x1xi1> to vector<8x32xi1>
    %708 = arith.select %707, %18, %698 : vector<8x32xi1>, vector<8x32xf32>
    %c7_i32_142 = arith.constant 7 : i32
    %709 = vector.broadcast %c7_i32_142 : i32 to vector<8x1xi32>
    %710 = arith.cmpi eq, %647, %709 : vector<8x1xi32>
    %711 = vector.shape_cast %710 : vector<8x1xi1> to vector<8x1xi1>
    %712 = vector.broadcast %711 : vector<8x1xi1> to vector<8x32xi1>
    %713 = arith.select %712, %20, %703 : vector<8x32xi1>, vector<8x32xf32>
    %c7_i32_143 = arith.constant 7 : i32
    %714 = vector.broadcast %c7_i32_143 : i32 to vector<8x1xi32>
    %715 = arith.cmpi eq, %648, %714 : vector<8x1xi32>
    %716 = vector.shape_cast %715 : vector<8x1xi1> to vector<8x1xi1>
    %717 = vector.broadcast %716 : vector<8x1xi1> to vector<8x32xi1>
    %718 = arith.select %717, %20, %708 : vector<8x32xi1>, vector<8x32xf32>
    %c8_i32_144 = arith.constant 8 : i32
    %719 = vector.broadcast %c8_i32_144 : i32 to vector<8x1xi32>
    %720 = arith.cmpi eq, %647, %719 : vector<8x1xi32>
    %721 = vector.shape_cast %720 : vector<8x1xi1> to vector<8x1xi1>
    %722 = vector.broadcast %721 : vector<8x1xi1> to vector<8x32xi1>
    %723 = arith.select %722, %104, %713 : vector<8x32xi1>, vector<8x32xf32>
    %c8_i32_145 = arith.constant 8 : i32
    %724 = vector.broadcast %c8_i32_145 : i32 to vector<8x1xi32>
    %725 = arith.cmpi eq, %648, %724 : vector<8x1xi32>
    %726 = vector.shape_cast %725 : vector<8x1xi1> to vector<8x1xi1>
    %727 = vector.broadcast %726 : vector<8x1xi1> to vector<8x32xi1>
    %728 = arith.select %727, %104, %718 : vector<8x32xi1>, vector<8x32xf32>
    %c9_i32_146 = arith.constant 9 : i32
    %729 = vector.broadcast %c9_i32_146 : i32 to vector<8x1xi32>
    %730 = arith.cmpi eq, %647, %729 : vector<8x1xi32>
    %731 = vector.shape_cast %730 : vector<8x1xi1> to vector<8x1xi1>
    %732 = vector.broadcast %731 : vector<8x1xi1> to vector<8x32xi1>
    %733 = arith.select %732, %219, %723 : vector<8x32xi1>, vector<8x32xf32>
    %c9_i32_147 = arith.constant 9 : i32
    %734 = vector.broadcast %c9_i32_147 : i32 to vector<8x1xi32>
    %735 = arith.cmpi eq, %648, %734 : vector<8x1xi32>
    %736 = vector.shape_cast %735 : vector<8x1xi1> to vector<8x1xi1>
    %737 = vector.broadcast %736 : vector<8x1xi1> to vector<8x32xi1>
    %738 = arith.select %737, %219, %728 : vector<8x32xi1>, vector<8x32xf32>
    %c10_i32_148 = arith.constant 10 : i32
    %739 = vector.broadcast %c10_i32_148 : i32 to vector<8x1xi32>
    %740 = arith.cmpi eq, %647, %739 : vector<8x1xi32>
    %741 = vector.shape_cast %740 : vector<8x1xi1> to vector<8x1xi1>
    %742 = vector.broadcast %741 : vector<8x1xi1> to vector<8x32xi1>
    %743 = arith.select %742, %344, %733 : vector<8x32xi1>, vector<8x32xf32>
    %c10_i32_149 = arith.constant 10 : i32
    %744 = vector.broadcast %c10_i32_149 : i32 to vector<8x1xi32>
    %745 = arith.cmpi eq, %648, %744 : vector<8x1xi32>
    %746 = vector.shape_cast %745 : vector<8x1xi1> to vector<8x1xi1>
    %747 = vector.broadcast %746 : vector<8x1xi1> to vector<8x32xi1>
    %748 = arith.select %747, %344, %738 : vector<8x32xi1>, vector<8x32xf32>
    %c11_i32_150 = arith.constant 11 : i32
    %749 = vector.broadcast %c11_i32_150 : i32 to vector<8x1xi32>
    %750 = arith.cmpi eq, %647, %749 : vector<8x1xi32>
    %751 = vector.shape_cast %750 : vector<8x1xi1> to vector<8x1xi1>
    %752 = vector.broadcast %751 : vector<8x1xi1> to vector<8x32xi1>
    %753 = arith.select %752, %479, %743 : vector<8x32xi1>, vector<8x32xf32>
    %c11_i32_151 = arith.constant 11 : i32
    %754 = vector.broadcast %c11_i32_151 : i32 to vector<8x1xi32>
    %755 = arith.cmpi eq, %648, %754 : vector<8x1xi32>
    %756 = vector.shape_cast %755 : vector<8x1xi1> to vector<8x1xi1>
    %757 = vector.broadcast %756 : vector<8x1xi1> to vector<8x32xi1>
    %758 = arith.select %757, %479, %748 : vector<8x32xi1>, vector<8x32xf32>
    %c12_i32 = arith.constant 12 : i32
    %759 = vector.broadcast %c12_i32 : i32 to vector<8x1xi32>
    %760 = arith.cmpi eq, %647, %759 : vector<8x1xi32>
    %761 = vector.shape_cast %760 : vector<8x1xi1> to vector<8x1xi1>
    %762 = vector.broadcast %761 : vector<8x1xi1> to vector<8x32xi1>
    %763 = arith.select %762, %624, %753 : vector<8x32xi1>, vector<8x32xf32>
    %c12_i32_152 = arith.constant 12 : i32
    %764 = vector.broadcast %c12_i32_152 : i32 to vector<8x1xi32>
    %765 = arith.cmpi eq, %648, %764 : vector<8x1xi32>
    %766 = vector.shape_cast %765 : vector<8x1xi1> to vector<8x1xi1>
    %767 = vector.broadcast %766 : vector<8x1xi1> to vector<8x32xi1>
    %768 = arith.select %767, %624, %758 : vector<8x32xi1>, vector<8x32xf32>
    %769 = tpu.concatenate %763, %768 in 1 : vector<8x32xf32>, vector<8x32xf32> -> vector<8x64xf32>
    %cst_153 = arith.constant dense<0.000000e+00> : vector<8x32xf32>
    %770 = tpu.matmul %769, %0, %cst_153 {dimension_numbers = #tpu.dot_dimension_numbers<[1], [0], [0], [1], [0, 0, 1, 1], [], []>} : vector<8x64xf32>, vector<64x32xf32>, vector<8x32xf32> -> vector<8x32xf32>
    %771 = vector.broadcast %1 : vector<1x32xf32> to vector<8x32xf32>
    %772 = arith.addf %770, %771 : vector<8x32xf32>
    %773 = math.tanh %772 : vector<8x32xf32>
    %774 = arith.mulf %773, %773 : vector<8x32xf32>
    %cst_154 = arith.constant dense<0.000000e+00> : vector<8xf32>
    %775 = vector.multi_reduction <add>, %774, %cst_154 [1] : vector<8x32xf32> to vector<8xf32>
    %776 = vector.shape_cast %775 : vector<8xf32> to vector<8x1xf32>
    %777 = math.rsqrt %776 : vector<8x1xf32>
    %778 = vector.broadcast %777 : vector<8x1xf32> to vector<8x32xf32>
    %779 = arith.mulf %773, %778 : vector<8x32xf32>
    %cst_155 = arith.constant dense<0.000000e+00> : vector<8x64xf32>
    %780 = tpu.matmul %779, %2, %cst_155 {dimension_numbers = #tpu.dot_dimension_numbers<[1], [0], [0], [1], [0, 0, 1, 1], [], []>} : vector<8x32xf32>, vector<32x64xf32>, vector<8x64xf32> -> vector<8x64xf32>
    %781 = vector.broadcast %3 : vector<1x64xf32> to vector<8x64xf32>
    %782 = arith.addf %780, %781 : vector<8x64xf32>
    %783 = math.tanh %782 : vector<8x64xf32>
    %784 = vector.extract_strided_slice %783 {offsets = [0, 0], sizes = [8, 32], strides = [1, 1]} : vector<8x64xf32> to vector<8x32xf32>
    %785 = vector.extract_strided_slice %783 {offsets = [0, 32], sizes = [8, 32], strides = [1, 1]} : vector<8x64xf32> to vector<8x32xf32>
    %786 = arith.mulf %784, %784 : vector<8x32xf32>
    %cst_156 = arith.constant dense<0.000000e+00> : vector<8xf32>
    %787 = vector.multi_reduction <add>, %786, %cst_156 [1] : vector<8x32xf32> to vector<8xf32>
    %788 = vector.shape_cast %787 : vector<8xf32> to vector<8x1xf32>
    %789 = math.rsqrt %788 : vector<8x1xf32>
    %790 = vector.broadcast %789 : vector<8x1xf32> to vector<8x32xf32>
    %791 = arith.mulf %784, %790 : vector<8x32xf32>
    %792 = arith.mulf %785, %785 : vector<8x32xf32>
    %cst_157 = arith.constant dense<0.000000e+00> : vector<8xf32>
    %793 = vector.multi_reduction <add>, %792, %cst_157 [1] : vector<8x32xf32> to vector<8xf32>
    %794 = vector.shape_cast %793 : vector<8xf32> to vector<8x1xf32>
    %795 = math.rsqrt %794 : vector<8x1xf32>
    %796 = vector.broadcast %795 : vector<8x1xf32> to vector<8x32xf32>
    %797 = arith.mulf %785, %796 : vector<8x32xf32>
    %798 = tpu.concatenate %791, %797 in 1 : vector<8x32xf32>, vector<8x32xf32> -> vector<8x64xf32>
    %799 = arith.subf %798, %769 : vector<8x64xf32>
    %800 = arith.mulf %799, %799 : vector<8x64xf32>
    %801 = arith.addf %646, %800 : vector<8x64xf32>
    %802 = vector.extract_strided_slice %4 {offsets = [0, 12], sizes = [8, 1], strides = [1, 1]} : vector<8x14xi32> to vector<8x1xi32>
    %803 = vector.extract_strided_slice %4 {offsets = [0, 13], sizes = [8, 1], strides = [1, 1]} : vector<8x14xi32> to vector<8x1xi32>
    %c1_i32_158 = arith.constant 1 : i32
    %804 = vector.broadcast %c1_i32_158 : i32 to vector<8x1xi32>
    %805 = arith.cmpi eq, %802, %804 : vector<8x1xi32>
    %806 = vector.shape_cast %805 : vector<8x1xi1> to vector<8x1xi1>
    %807 = vector.broadcast %806 : vector<8x1xi1> to vector<8x32xi1>
    %808 = arith.select %807, %8, %6 : vector<8x32xi1>, vector<8x32xf32>
    %c1_i32_159 = arith.constant 1 : i32
    %809 = vector.broadcast %c1_i32_159 : i32 to vector<8x1xi32>
    %810 = arith.cmpi eq, %803, %809 : vector<8x1xi32>
    %811 = vector.shape_cast %810 : vector<8x1xi1> to vector<8x1xi1>
    %812 = vector.broadcast %811 : vector<8x1xi1> to vector<8x32xi1>
    %813 = arith.select %812, %8, %6 : vector<8x32xi1>, vector<8x32xf32>
    %c2_i32_160 = arith.constant 2 : i32
    %814 = vector.broadcast %c2_i32_160 : i32 to vector<8x1xi32>
    %815 = arith.cmpi eq, %802, %814 : vector<8x1xi32>
    %816 = vector.shape_cast %815 : vector<8x1xi1> to vector<8x1xi1>
    %817 = vector.broadcast %816 : vector<8x1xi1> to vector<8x32xi1>
    %818 = arith.select %817, %10, %808 : vector<8x32xi1>, vector<8x32xf32>
    %c2_i32_161 = arith.constant 2 : i32
    %819 = vector.broadcast %c2_i32_161 : i32 to vector<8x1xi32>
    %820 = arith.cmpi eq, %803, %819 : vector<8x1xi32>
    %821 = vector.shape_cast %820 : vector<8x1xi1> to vector<8x1xi1>
    %822 = vector.broadcast %821 : vector<8x1xi1> to vector<8x32xi1>
    %823 = arith.select %822, %10, %813 : vector<8x32xi1>, vector<8x32xf32>
    %c3_i32_162 = arith.constant 3 : i32
    %824 = vector.broadcast %c3_i32_162 : i32 to vector<8x1xi32>
    %825 = arith.cmpi eq, %802, %824 : vector<8x1xi32>
    %826 = vector.shape_cast %825 : vector<8x1xi1> to vector<8x1xi1>
    %827 = vector.broadcast %826 : vector<8x1xi1> to vector<8x32xi1>
    %828 = arith.select %827, %12, %818 : vector<8x32xi1>, vector<8x32xf32>
    %c3_i32_163 = arith.constant 3 : i32
    %829 = vector.broadcast %c3_i32_163 : i32 to vector<8x1xi32>
    %830 = arith.cmpi eq, %803, %829 : vector<8x1xi32>
    %831 = vector.shape_cast %830 : vector<8x1xi1> to vector<8x1xi1>
    %832 = vector.broadcast %831 : vector<8x1xi1> to vector<8x32xi1>
    %833 = arith.select %832, %12, %823 : vector<8x32xi1>, vector<8x32xf32>
    %c4_i32_164 = arith.constant 4 : i32
    %834 = vector.broadcast %c4_i32_164 : i32 to vector<8x1xi32>
    %835 = arith.cmpi eq, %802, %834 : vector<8x1xi32>
    %836 = vector.shape_cast %835 : vector<8x1xi1> to vector<8x1xi1>
    %837 = vector.broadcast %836 : vector<8x1xi1> to vector<8x32xi1>
    %838 = arith.select %837, %14, %828 : vector<8x32xi1>, vector<8x32xf32>
    %c4_i32_165 = arith.constant 4 : i32
    %839 = vector.broadcast %c4_i32_165 : i32 to vector<8x1xi32>
    %840 = arith.cmpi eq, %803, %839 : vector<8x1xi32>
    %841 = vector.shape_cast %840 : vector<8x1xi1> to vector<8x1xi1>
    %842 = vector.broadcast %841 : vector<8x1xi1> to vector<8x32xi1>
    %843 = arith.select %842, %14, %833 : vector<8x32xi1>, vector<8x32xf32>
    %c5_i32_166 = arith.constant 5 : i32
    %844 = vector.broadcast %c5_i32_166 : i32 to vector<8x1xi32>
    %845 = arith.cmpi eq, %802, %844 : vector<8x1xi32>
    %846 = vector.shape_cast %845 : vector<8x1xi1> to vector<8x1xi1>
    %847 = vector.broadcast %846 : vector<8x1xi1> to vector<8x32xi1>
    %848 = arith.select %847, %16, %838 : vector<8x32xi1>, vector<8x32xf32>
    %c5_i32_167 = arith.constant 5 : i32
    %849 = vector.broadcast %c5_i32_167 : i32 to vector<8x1xi32>
    %850 = arith.cmpi eq, %803, %849 : vector<8x1xi32>
    %851 = vector.shape_cast %850 : vector<8x1xi1> to vector<8x1xi1>
    %852 = vector.broadcast %851 : vector<8x1xi1> to vector<8x32xi1>
    %853 = arith.select %852, %16, %843 : vector<8x32xi1>, vector<8x32xf32>
    %c6_i32_168 = arith.constant 6 : i32
    %854 = vector.broadcast %c6_i32_168 : i32 to vector<8x1xi32>
    %855 = arith.cmpi eq, %802, %854 : vector<8x1xi32>
    %856 = vector.shape_cast %855 : vector<8x1xi1> to vector<8x1xi1>
    %857 = vector.broadcast %856 : vector<8x1xi1> to vector<8x32xi1>
    %858 = arith.select %857, %18, %848 : vector<8x32xi1>, vector<8x32xf32>
    %c6_i32_169 = arith.constant 6 : i32
    %859 = vector.broadcast %c6_i32_169 : i32 to vector<8x1xi32>
    %860 = arith.cmpi eq, %803, %859 : vector<8x1xi32>
    %861 = vector.shape_cast %860 : vector<8x1xi1> to vector<8x1xi1>
    %862 = vector.broadcast %861 : vector<8x1xi1> to vector<8x32xi1>
    %863 = arith.select %862, %18, %853 : vector<8x32xi1>, vector<8x32xf32>
    %c7_i32_170 = arith.constant 7 : i32
    %864 = vector.broadcast %c7_i32_170 : i32 to vector<8x1xi32>
    %865 = arith.cmpi eq, %802, %864 : vector<8x1xi32>
    %866 = vector.shape_cast %865 : vector<8x1xi1> to vector<8x1xi1>
    %867 = vector.broadcast %866 : vector<8x1xi1> to vector<8x32xi1>
    %868 = arith.select %867, %20, %858 : vector<8x32xi1>, vector<8x32xf32>
    %c7_i32_171 = arith.constant 7 : i32
    %869 = vector.broadcast %c7_i32_171 : i32 to vector<8x1xi32>
    %870 = arith.cmpi eq, %803, %869 : vector<8x1xi32>
    %871 = vector.shape_cast %870 : vector<8x1xi1> to vector<8x1xi1>
    %872 = vector.broadcast %871 : vector<8x1xi1> to vector<8x32xi1>
    %873 = arith.select %872, %20, %863 : vector<8x32xi1>, vector<8x32xf32>
    %c8_i32_172 = arith.constant 8 : i32
    %874 = vector.broadcast %c8_i32_172 : i32 to vector<8x1xi32>
    %875 = arith.cmpi eq, %802, %874 : vector<8x1xi32>
    %876 = vector.shape_cast %875 : vector<8x1xi1> to vector<8x1xi1>
    %877 = vector.broadcast %876 : vector<8x1xi1> to vector<8x32xi1>
    %878 = arith.select %877, %104, %868 : vector<8x32xi1>, vector<8x32xf32>
    %c8_i32_173 = arith.constant 8 : i32
    %879 = vector.broadcast %c8_i32_173 : i32 to vector<8x1xi32>
    %880 = arith.cmpi eq, %803, %879 : vector<8x1xi32>
    %881 = vector.shape_cast %880 : vector<8x1xi1> to vector<8x1xi1>
    %882 = vector.broadcast %881 : vector<8x1xi1> to vector<8x32xi1>
    %883 = arith.select %882, %104, %873 : vector<8x32xi1>, vector<8x32xf32>
    %c9_i32_174 = arith.constant 9 : i32
    %884 = vector.broadcast %c9_i32_174 : i32 to vector<8x1xi32>
    %885 = arith.cmpi eq, %802, %884 : vector<8x1xi32>
    %886 = vector.shape_cast %885 : vector<8x1xi1> to vector<8x1xi1>
    %887 = vector.broadcast %886 : vector<8x1xi1> to vector<8x32xi1>
    %888 = arith.select %887, %219, %878 : vector<8x32xi1>, vector<8x32xf32>
    %c9_i32_175 = arith.constant 9 : i32
    %889 = vector.broadcast %c9_i32_175 : i32 to vector<8x1xi32>
    %890 = arith.cmpi eq, %803, %889 : vector<8x1xi32>
    %891 = vector.shape_cast %890 : vector<8x1xi1> to vector<8x1xi1>
    %892 = vector.broadcast %891 : vector<8x1xi1> to vector<8x32xi1>
    %893 = arith.select %892, %219, %883 : vector<8x32xi1>, vector<8x32xf32>
    %c10_i32_176 = arith.constant 10 : i32
    %894 = vector.broadcast %c10_i32_176 : i32 to vector<8x1xi32>
    %895 = arith.cmpi eq, %802, %894 : vector<8x1xi32>
    %896 = vector.shape_cast %895 : vector<8x1xi1> to vector<8x1xi1>
    %897 = vector.broadcast %896 : vector<8x1xi1> to vector<8x32xi1>
    %898 = arith.select %897, %344, %888 : vector<8x32xi1>, vector<8x32xf32>
    %c10_i32_177 = arith.constant 10 : i32
    %899 = vector.broadcast %c10_i32_177 : i32 to vector<8x1xi32>
    %900 = arith.cmpi eq, %803, %899 : vector<8x1xi32>
    %901 = vector.shape_cast %900 : vector<8x1xi1> to vector<8x1xi1>
    %902 = vector.broadcast %901 : vector<8x1xi1> to vector<8x32xi1>
    %903 = arith.select %902, %344, %893 : vector<8x32xi1>, vector<8x32xf32>
    %c11_i32_178 = arith.constant 11 : i32
    %904 = vector.broadcast %c11_i32_178 : i32 to vector<8x1xi32>
    %905 = arith.cmpi eq, %802, %904 : vector<8x1xi32>
    %906 = vector.shape_cast %905 : vector<8x1xi1> to vector<8x1xi1>
    %907 = vector.broadcast %906 : vector<8x1xi1> to vector<8x32xi1>
    %908 = arith.select %907, %479, %898 : vector<8x32xi1>, vector<8x32xf32>
    %c11_i32_179 = arith.constant 11 : i32
    %909 = vector.broadcast %c11_i32_179 : i32 to vector<8x1xi32>
    %910 = arith.cmpi eq, %803, %909 : vector<8x1xi32>
    %911 = vector.shape_cast %910 : vector<8x1xi1> to vector<8x1xi1>
    %912 = vector.broadcast %911 : vector<8x1xi1> to vector<8x32xi1>
    %913 = arith.select %912, %479, %903 : vector<8x32xi1>, vector<8x32xf32>
    %c12_i32_180 = arith.constant 12 : i32
    %914 = vector.broadcast %c12_i32_180 : i32 to vector<8x1xi32>
    %915 = arith.cmpi eq, %802, %914 : vector<8x1xi32>
    %916 = vector.shape_cast %915 : vector<8x1xi1> to vector<8x1xi1>
    %917 = vector.broadcast %916 : vector<8x1xi1> to vector<8x32xi1>
    %918 = arith.select %917, %624, %908 : vector<8x32xi1>, vector<8x32xf32>
    %c12_i32_181 = arith.constant 12 : i32
    %919 = vector.broadcast %c12_i32_181 : i32 to vector<8x1xi32>
    %920 = arith.cmpi eq, %803, %919 : vector<8x1xi32>
    %921 = vector.shape_cast %920 : vector<8x1xi1> to vector<8x1xi1>
    %922 = vector.broadcast %921 : vector<8x1xi1> to vector<8x32xi1>
    %923 = arith.select %922, %624, %913 : vector<8x32xi1>, vector<8x32xf32>
    %c13_i32 = arith.constant 13 : i32
    %924 = vector.broadcast %c13_i32 : i32 to vector<8x1xi32>
    %925 = arith.cmpi eq, %802, %924 : vector<8x1xi32>
    %926 = vector.shape_cast %925 : vector<8x1xi1> to vector<8x1xi1>
    %927 = vector.broadcast %926 : vector<8x1xi1> to vector<8x32xi1>
    %928 = arith.select %927, %779, %918 : vector<8x32xi1>, vector<8x32xf32>
    %c13_i32_182 = arith.constant 13 : i32
    %929 = vector.broadcast %c13_i32_182 : i32 to vector<8x1xi32>
    %930 = arith.cmpi eq, %803, %929 : vector<8x1xi32>
    %931 = vector.shape_cast %930 : vector<8x1xi1> to vector<8x1xi1>
    %932 = vector.broadcast %931 : vector<8x1xi1> to vector<8x32xi1>
    %933 = arith.select %932, %779, %923 : vector<8x32xi1>, vector<8x32xf32>
    %934 = tpu.concatenate %928, %933 in 1 : vector<8x32xf32>, vector<8x32xf32> -> vector<8x64xf32>
    %cst_183 = arith.constant dense<0.000000e+00> : vector<8x32xf32>
    %935 = tpu.matmul %934, %0, %cst_183 {dimension_numbers = #tpu.dot_dimension_numbers<[1], [0], [0], [1], [0, 0, 1, 1], [], []>} : vector<8x64xf32>, vector<64x32xf32>, vector<8x32xf32> -> vector<8x32xf32>
    %936 = vector.broadcast %1 : vector<1x32xf32> to vector<8x32xf32>
    %937 = arith.addf %935, %936 : vector<8x32xf32>
    %938 = math.tanh %937 : vector<8x32xf32>
    %939 = arith.mulf %938, %938 : vector<8x32xf32>
    %cst_184 = arith.constant dense<0.000000e+00> : vector<8xf32>
    %940 = vector.multi_reduction <add>, %939, %cst_184 [1] : vector<8x32xf32> to vector<8xf32>
    %941 = vector.shape_cast %940 : vector<8xf32> to vector<8x1xf32>
    %942 = math.rsqrt %941 : vector<8x1xf32>
    %943 = vector.broadcast %942 : vector<8x1xf32> to vector<8x32xf32>
    %944 = arith.mulf %938, %943 : vector<8x32xf32>
    %cst_185 = arith.constant dense<0.000000e+00> : vector<8x64xf32>
    %945 = tpu.matmul %944, %2, %cst_185 {dimension_numbers = #tpu.dot_dimension_numbers<[1], [0], [0], [1], [0, 0, 1, 1], [], []>} : vector<8x32xf32>, vector<32x64xf32>, vector<8x64xf32> -> vector<8x64xf32>
    %946 = vector.broadcast %3 : vector<1x64xf32> to vector<8x64xf32>
    %947 = arith.addf %945, %946 : vector<8x64xf32>
    %948 = math.tanh %947 : vector<8x64xf32>
    %949 = vector.extract_strided_slice %948 {offsets = [0, 0], sizes = [8, 32], strides = [1, 1]} : vector<8x64xf32> to vector<8x32xf32>
    %950 = vector.extract_strided_slice %948 {offsets = [0, 32], sizes = [8, 32], strides = [1, 1]} : vector<8x64xf32> to vector<8x32xf32>
    %951 = arith.mulf %949, %949 : vector<8x32xf32>
    %cst_186 = arith.constant dense<0.000000e+00> : vector<8xf32>
    %952 = vector.multi_reduction <add>, %951, %cst_186 [1] : vector<8x32xf32> to vector<8xf32>
    %953 = vector.shape_cast %952 : vector<8xf32> to vector<8x1xf32>
    %954 = math.rsqrt %953 : vector<8x1xf32>
    %955 = vector.broadcast %954 : vector<8x1xf32> to vector<8x32xf32>
    %956 = arith.mulf %949, %955 : vector<8x32xf32>
    %957 = arith.mulf %950, %950 : vector<8x32xf32>
    %cst_187 = arith.constant dense<0.000000e+00> : vector<8xf32>
    %958 = vector.multi_reduction <add>, %957, %cst_187 [1] : vector<8x32xf32> to vector<8xf32>
    %959 = vector.shape_cast %958 : vector<8xf32> to vector<8x1xf32>
    %960 = math.rsqrt %959 : vector<8x1xf32>
    %961 = vector.broadcast %960 : vector<8x1xf32> to vector<8x32xf32>
    %962 = arith.mulf %950, %961 : vector<8x32xf32>
    %963 = tpu.concatenate %956, %962 in 1 : vector<8x32xf32>, vector<8x32xf32> -> vector<8x64xf32>
    %964 = arith.subf %963, %934 : vector<8x64xf32>
    %965 = arith.mulf %964, %964 : vector<8x64xf32>
    %966 = arith.addf %801, %965 : vector<8x64xf32>
    %cst_188 = arith.constant dense<0.000000e+00> : vector<8xf32>
    %967 = vector.multi_reduction <add>, %966, %cst_188 [1] : vector<8x64xf32> to vector<8xf32>
    %968 = vector.shape_cast %967 : vector<8xf32> to vector<8x1xf32>
    %cst_189 = arith.constant 5.000000e-01 : f32
    %969 = vector.broadcast %cst_189 : f32 to vector<8x1xf32>
    %970 = arith.mulf %969, %968 : vector<8x1xf32>
    %971 = vector.shape_cast %970 : vector<8x1xf32> to vector<8x1xf32>
    %972 = vector.broadcast %971 : vector<8x1xf32> to vector<8x128xf32>
    %c0_190 = arith.constant 0 : index
    %c0_191 = arith.constant 0 : index
    %973 = vector.load %arg7[%c0_190, %c0_191] : memref<8x128xf32, #tpu.memory_space<vmem>>, vector<8x128xf32>
    tpu.vector_store %arg7[%c0_190, %c0_191], %972 {strides = array<i32>} : memref<8x128xf32, #tpu.memory_space<vmem>>, vector<8x128xf32>,
    return
  }
  func.func @transform_0(%arg0: i32) -> (i32, i32) {
    %c0_i32 = arith.constant 0 : i32
    %c0_i32_0 = arith.constant 0 : i32
    return %arg0, %c0_i32 : i32, i32
  }
  func.func @transform_1(%arg0: i32) -> (i32, i32, i32) {
    %c0_i32 = arith.constant 0 : i32
    %c0_i32_0 = arith.constant 0 : i32
    %c0_i32_1 = arith.constant 0 : i32
    return %c0_i32, %arg0, %c0_i32_0 : i32, i32, i32
  }
  func.func @transform_2(%arg0: i32) -> (i32, i32) {
    %c0_i32 = arith.constant 0 : i32
    %c0_i32_0 = arith.constant 0 : i32
    %c0_i32_1 = arith.constant 0 : i32
    return %c0_i32, %c0_i32_0 : i32, i32
  }
  func.func @transform_3(%arg0: i32) -> (i32, i32) {
    %c0_i32 = arith.constant 0 : i32
    %c0_i32_0 = arith.constant 0 : i32
    %c0_i32_1 = arith.constant 0 : i32
    return %c0_i32, %c0_i32_0 : i32, i32
  }
  func.func @transform_4(%arg0: i32) -> (i32, i32) {
    %c0_i32 = arith.constant 0 : i32
    %c0_i32_0 = arith.constant 0 : i32
    %c0_i32_1 = arith.constant 0 : i32
    return %c0_i32, %c0_i32_0 : i32, i32
  }
  func.func @transform_5(%arg0: i32) -> (i32, i32) {
    %c0_i32 = arith.constant 0 : i32
    %c0_i32_0 = arith.constant 0 : i32
    %c0_i32_1 = arith.constant 0 : i32
    return %c0_i32, %c0_i32_0 : i32, i32
  }
  func.func @transform_6(%arg0: i32) -> (i32, i32) {
    %c0_i32 = arith.constant 0 : i32
    %c0_i32_0 = arith.constant 0 : i32
    return %arg0, %c0_i32 : i32, i32
  }
}

</mosaic_0001>

<llo_original>
// kernel: tpu_custom_call.1
$region0: #{tpu_custom_call.1}
  #allocation0 [shape = 'u32[]', space=smem, size = 0x4, offset = 0x4, fixed_abs, tag = 'smem constant byte address 0x4 - core index']
  #allocation1 [shape = 'u32[72,128]{1,0:T(1,128)}', space=vmem, size = 0x9000, scoped, tag = 'internal scratch']
  %s0 = inlined_call_operand.vmem [shape: s32[16,14], index: 0, kind: input, shape index: {}]
  %s1 = inlined_call_operand.hbm [shape: f32[8,16,32], index: 1, kind: input, shape index: {}]
  %s2 = inlined_call_operand.vmem [shape: f32[64,32], index: 2, kind: input, shape index: {}]
  %s3 = inlined_call_operand.vmem [shape: f32[1,32], index: 3, kind: input, shape index: {}]
  %s4 = inlined_call_operand.vmem [shape: f32[32,64], index: 4, kind: input, shape index: {}]
  %s5 = inlined_call_operand.vmem [shape: f32[1,64], index: 5, kind: input, shape index: {}]
  %s6 = inlined_call_operand.hbm [shape: f32[16,128], index: 6, kind: output, shape index: {}]
  %s7 = sld [smem:[#allocation0]]
  $region61: #{tpu_custom_call.1} parent=0
    _
  %s9 = ssub.s32 1, %s7
  %s10 = scalar_select 0, %s9, %s7
  $region1: #{tpu_custom_call.1} parent=0
    #allocation2 [shape = 'u8[65536]{0}', space=vmem, size = 0x10000, scoped, tag = 'input window, operand 1']
    #allocation3 [shape = 's32[2]{0}', space=sflag, size = 0x8, scoped, tag = 'scoped memory for tpu_custom_call.1']
    #allocation4 [shape = 's32[2]{0}', space=sflag, size = 0x8, scoped, tag = 'scoped memory for tpu_custom_call.1']
    #allocation5 [shape = 'u8[8192]{0}', space=vmem, size = 0x2000, scoped, tag = 'output window, operand 0']
    %11 = vsyncpa [#allocation3], 0
    %s12 = scalar_lea.sflag [#allocation3], 1
    %13 = vsyncpa %s12, 0
    %14 = vsyncpa [#allocation4], 0
    %s15 = scalar_lea.sflag [#allocation4], 1
    %16 = vsyncpa %s15, 0
    loop: start=0, step=1, limit=4
    $region2: #{tpu_custom_call.1} parent=1 // loop_pre_header
      _
    $region3: #{tpu_custom_call.1} parent=1 // loop_header
      %s18 = sphi 0, %s22
      %p19 = scmp.ge.s32.totalorder %s18, 4
      %s28 = sphi 0, %s30
      %s31 = sphi 0, %s28
      %s32 = sphi 0, %s31
      %s48 = sphi 0, %s32
      %s54 = sphi 0, %s56
      %s57 = sphi 0, %s54
      %s58 = sphi 0, %s57
      %s74 = sphi 0, %s58
      %s78 = sphi 0, %s78
      %s80 = sphi 0, %s78
      %s81 = sphi 0, %s80
      %s95 = sphi 0, %s81
      %s99 = sphi 0, %s99
      %s101 = sphi 0, %s99
      %s102 = sphi 0, %s101
      %s116 = sphi 0, %s102
      %s120 = sphi 0, %s120
      %s122 = sphi 0, %s120
      %s123 = sphi 0, %s122
      %s137 = sphi 0, %s123
      %s141 = sphi 0, %s141
      %s143 = sphi 0, %s141
      %s144 = sphi 0, %s143
      %s158 = sphi 0, %s144
      %s164 = sphi 0, %s166
      %s167 = sphi 0, %s164
      %s168 = sphi 0, %s167
      %s184 = sphi 0, %s168
    $region4: #{tpu_custom_call.1} parent=1 // loop_header_branch
      %21 = sbr.rel (%p19) target = $region8
    $region5: #{tpu_custom_call.1} parent=1 // loop_body
      %s23 = ssub.s32 %s18, 1
      %s24 = ssub.s32 %s18, 2
      %s25 = sadd.s32 %s18, 1
      %s26 = ssub.s32 %s18, %s25
      %p27 = scmp.eq.s32.totalorder %s26, 0
      %s29 = sadd.s32 %s28, 1
      %s30 = scalar_select %p27, %s28, %s29
      %p33 = pneg %p27
      %p34 = scmp.eq.s32.totalorder %s18, 1
      %p35 = por %p33, %p34
      %p36 = scmp.ne.s32.totalorder %s28, %s31
      %p37 = scmp.eq.s32.totalorder %s18, 0
      %p38 = por %p36, %p37
      %p39 = scmp.ne.s32.totalorder %s28, %s31
      %p40 = scmp.eq.s32.totalorder %s23, 1
      %p41 = por %p39, %p40
      %p42 = scmp.ne.s32.totalorder %s31, %s32
      %p43 = scmp.eq.s32.totalorder %s23, 0
      %p44 = por %p42, %p43
      %p45 = scmp.ne.s32.totalorder %s31, %s32
      %p46 = scmp.eq.s32.totalorder %s24, 1
      %p47 = por %p45, %p46
      %p49 = scmp.ne.s32.totalorder %s32, %s48
      %p50 = scmp.eq.s32.totalorder %s24, 0
      %p51 = por %p49, %p50
      %s52 = ssub.s32 %s18, %s25
      %p53 = scmp.eq.s32.totalorder %s52, 0
      %s55 = sadd.s32 %s54, 1
      %s56 = scalar_select %p53, %s54, %s55
      %p59 = pneg %p53
      %p60 = scmp.eq.s32.totalorder %s18, 1
      %p61 = por %p59, %p60
      %p62 = scmp.ne.s32.totalorder %s54, %s57
      %p63 = scmp.eq.s32.totalorder %s18, 0
      %p64 = por %p62, %p63
      %p65 = scmp.ne.s32.totalorder %s54, %s57
      %p66 = scmp.eq.s32.totalorder %s23, 1
      %p67 = por %p65, %p66
      %p68 = scmp.ne.s32.totalorder %s57, %s58
      %p69 = scmp.eq.s32.totalorder %s23, 0
      %p70 = por %p68, %p69
      %p71 = scmp.ne.s32.totalorder %s57, %s58
      %p72 = scmp.eq.s32.totalorder %s24, 1
      %p73 = por %p71, %p72
      %p75 = scmp.ne.s32.totalorder %s58, %s74
      %p76 = scmp.eq.s32.totalorder %s24, 0
      %p77 = por %p75, %p76
      %s79 = sadd.s32 %s78, 1
      %p82 = scmp.eq.s32.totalorder %s18, 1
      %p83 = scmp.ne.s32.totalorder %s78, %s80
      %p84 = scmp.eq.s32.totalorder %s18, 0
      %p85 = por %p83, %p84
      %p86 = scmp.ne.s32.totalorder %s78, %s80
      %p87 = scmp.eq.s32.totalorder %s23, 1
      %p88 = por %p86, %p87
      %p89 = scmp.ne.s32.totalorder %s80, %s81
      %p90 = scmp.eq.s32.totalorder %s23, 0
      %p91 = por %p89, %p90
      %p92 = scmp.ne.s32.totalorder %s80, %s81
      %p93 = scmp.eq.s32.totalorder %s24, 1
      %p94 = por %p92, %p93
      %p96 = scmp.ne.s32.totalorder %s81, %s95
      %p97 = scmp.eq.s32.totalorder %s24, 0
      %p98 = por %p96, %p97
      %s100 = sadd.s32 %s99, 1
      %p103 = scmp.eq.s32.totalorder %s18, 1
      %p104 = scmp.ne.s32.totalorder %s99, %s101
      %p105 = scmp.eq.s32.totalorder %s18, 0
      %p106 = por %p104, %p105
      %p107 = scmp.ne.s32.totalorder %s99, %s101
      %p108 = scmp.eq.s32.totalorder %s23, 1
      %p109 = por %p107, %p108
      %p110 = scmp.ne.s32.totalorder %s101, %s102
      %p111 = scmp.eq.s32.totalorder %s23, 0
      %p112 = por %p110, %p111
      %p113 = scmp.ne.s32.totalorder %s101, %s102
      %p114 = scmp.eq.s32.totalorder %s24, 1
      %p115 = por %p113, %p114
      %p117 = scmp.ne.s32.totalorder %s102, %s116
      %p118 = scmp.eq.s32.totalorder %s24, 0
      %p119 = por %p117, %p118
      %s121 = sadd.s32 %s120, 1
      %p124 = scmp.eq.s32.totalorder %s18, 1
      %p125 = scmp.ne.s32.totalorder %s120, %s122
      %p126 = scmp.eq.s32.totalorder %s18, 0
      %p127 = por %p125, %p126
      %p128 = scmp.ne.s32.totalorder %s120, %s122
      %p129 = scmp.eq.s32.totalorder %s23, 1
      %p130 = por %p128, %p129
      %p131 = scmp.ne.s32.totalorder %s122, %s123
      %p132 = scmp.eq.s32.totalorder %s23, 0
      %p133 = por %p131, %p132
      %p134 = scmp.ne.s32.totalorder %s122, %s123
      %p135 = scmp.eq.s32.totalorder %s24, 1
      %p136 = por %p134, %p135
      %p138 = scmp.ne.s32.totalorder %s123, %s137
      %p139 = scmp.eq.s32.totalorder %s24, 0
      %p140 = por %p138, %p139
      %s142 = sadd.s32 %s141, 1
      %p145 = scmp.eq.s32.totalorder %s18, 1
      %p146 = scmp.ne.s32.totalorder %s141, %s143
      %p147 = scmp.eq.s32.totalorder %s18, 0
      %p148 = por %p146, %p147
      %p149 = scmp.ne.s32.totalorder %s141, %s143
      %p150 = scmp.eq.s32.totalorder %s23, 1
      %p151 = por %p149, %p150
      %p152 = scmp.ne.s32.totalorder %s143, %s144
      %p153 = scmp.eq.s32.totalorder %s23, 0
      %p154 = por %p152, %p153
      %p155 = scmp.ne.s32.totalorder %s143, %s144
      %p156 = scmp.eq.s32.totalorder %s24, 1
      %p157 = por %p155, %p156
      %p159 = scmp.ne.s32.totalorder %s144, %s158
      %p160 = scmp.eq.s32.totalorder %s24, 0
      %p161 = por %p159, %p160
      %s162 = ssub.s32 %s18, %s25
      %p163 = scmp.eq.s32.totalorder %s162, 0
      %s165 = sadd.s32 %s164, 1
      %s166 = scalar_select %p163, %s164, %s165
      %p169 = pneg %p163
      %p170 = scmp.eq.s32.totalorder %s18, 1
      %p171 = por %p169, %p170
      %p172 = scmp.ne.s32.totalorder %s164, %s167
      %p173 = scmp.eq.s32.totalorder %s18, 0
      %p174 = por %p172, %p173
      %p175 = scmp.ne.s32.totalorder %s164, %s167
      %p176 = scmp.eq.s32.totalorder %s23, 1
      %p177 = por %p175, %p176
      %p178 = scmp.ne.s32.totalorder %s167, %s168
      %p179 = scmp.eq.s32.totalorder %s23, 0
      %p180 = por %p178, %p179
      %p181 = scmp.ne.s32.totalorder %s167, %s168
      %p182 = scmp.eq.s32.totalorder %s24, 1
      %p183 = por %p181, %p182
      %p185 = scmp.ne.s32.totalorder %s168, %s184
      %p186 = scmp.eq.s32.totalorder %s24, 0
      %p187 = por %p185, %p186
      %p188 = scmp.le.s32.totalorder 1, %s18
      %p189 = scmp.lt.s32.totalorder %s18, 3
      %p190 = pnand %p188, %p189
      %p191 = pneg %p190
      // Predicated region
      $region9: #{tpu_custom_call.1} parent=5 // pred_check
        _
      $region10: #{tpu_custom_call.1} parent=5 // pred_check_branch
        %193 = sbr.rel (%p190) target = $region12
      $region11: #{tpu_custom_call.1} parent=5 // pred_region
        %s194 = ssub.s32 %s18, 1
        // Predicated region
        $region13: #{tpu_custom_call.1} parent=11 // pred_check
          %p195 = pneg %p91
        $region14: #{tpu_custom_call.1} parent=11 // pred_check_branch
          %197 = sbr.rel (%p195) target = $region16
        $region15: #{tpu_custom_call.1} parent=11 // pred_region
          _
        $region16: #{tpu_custom_call.1} parent=11 // pred_fallthru
          _
        // Predicated region
        $region17: #{tpu_custom_call.1} parent=11 // pred_check
          %p198 = pneg %p112
        $region18: #{tpu_custom_call.1} parent=11 // pred_check_branch
          %200 = sbr.rel (%p198) target = $region20
        $region19: #{tpu_custom_call.1} parent=11 // pred_region
          _
        $region20: #{tpu_custom_call.1} parent=11 // pred_fallthru
          _
        // Predicated region
        $region21: #{tpu_custom_call.1} parent=11 // pred_check
          %p201 = pneg %p133
        $region22: #{tpu_custom_call.1} parent=11 // pred_check_branch
          %203 = sbr.rel (%p201) target = $region24
        $region23: #{tpu_custom_call.1} parent=11 // pred_region
          _
        $region24: #{tpu_custom_call.1} parent=11 // pred_fallthru
          _
        // Predicated region
        $region25: #{tpu_custom_call.1} parent=11 // pred_check
          %p204 = pneg %p154
        $region26: #{tpu_custom_call.1} parent=11 // pred_check_branch
          %206 = sbr.rel (%p204) target = $region28
        $region27: #{tpu_custom_call.1} parent=11 // pred_region
          _
        $region28: #{tpu_custom_call.1} parent=11 // pred_fallthru
          _
      $region12: #{tpu_custom_call.1} parent=5 // pred_fallthru
        _
      %p207 = scmp.lt.s32.totalorder %s18, 2
      // Predicated region
      $region29: #{tpu_custom_call.1} parent=5 // pred_check
        %p208 = pneg %p207
      $region30: #{tpu_custom_call.1} parent=5 // pred_check_branch
        %210 = sbr.rel (%p208) target = $region32
      $region31: #{tpu_custom_call.1} parent=5 // pred_region
        // Predicated region
        $region33: #{tpu_custom_call.1} parent=31 // pred_check
          %p211 = pneg %p38
        $region34: #{tpu_custom_call.1} parent=31 // pred_check_branch
          %213 = sbr.rel (%p211) target = $region36
        $region35: #{tpu_custom_call.1} parent=31 // pred_region
          %p214 = scmp.lt.s32.totalorder %s18, 1
          %s215 = scalar_select %p214, %s18, 1
          %s216 = smul.addr %s215, 8
          %s217 = scalar_lea.vmem %s0, %s216
        $region36: #{tpu_custom_call.1} parent=31 // pred_fallthru
          _
        // Predicated region
        $region37: #{tpu_custom_call.1} parent=31 // pred_check
          %p218 = pneg %p64
        $region38: #{tpu_custom_call.1} parent=31 // pred_check_branch
          %220 = sbr.rel (%p218) target = $region40
        $region39: #{tpu_custom_call.1} parent=31 // pred_region
          %s221 = sand.u32 %s54, 1
          %s222 = scalar_lea.sflag [#allocation3], %s221
          %s223 = sand.u32 %s54, 1
          %s224 = smul.addr %s223, 64
          %s225 = scalar_lea.vmem [#allocation2], %s224
          %227 = vsyncadd %s222, 0
          %s228 = smul.addr %s18, 8
          %s229 = scalar_lea.hbm %s1, %s228
          %s230 = sshll.u32 %s229, 4
          %s231 = int_to_ptr.hbm [resolvable:$true] %s230
          %s232 = sshll.u32 %s225, 4
          %s233 = int_to_ptr.vmem [resolvable:$true] %s232
          %238 = dma.hbm_to_vmem [thread:$0]  %s231, 1024, %s233, %s222, 256, 128, 8
        $region40: #{tpu_custom_call.1} parent=31 // pred_fallthru
          _
      $region32: #{tpu_custom_call.1} parent=5 // pred_fallthru
        _
      %p239 = scmp.le.s32.totalorder 1, %s18
      %p240 = scmp.lt.s32.totalorder %s18, 3
      %p241 = pnand %p239, %p240
      %p242 = pneg %p241
      // Predicated region
      $region41: #{tpu_custom_call.1} parent=5 // pred_check
        _
      $region42: #{tpu_custom_call.1} parent=5 // pred_check_branch
        %244 = sbr.rel (%p241) target = $region44
      $region43: #{tpu_custom_call.1} parent=5 // pred_region
        %s245 = ssub.s32 %s18, 1
        %s246 = sand.u32 %s57, 1
        %s247 = scalar_lea.sflag [#allocation3], %s246
        %s248 = sand.u32 %s57, 1
        %s249 = smul.addr %s248, 64
        %s250 = scalar_lea.vmem [#allocation2], %s249
        // Predicated region
        $region45: #{tpu_custom_call.1} parent=43 // pred_check
          %p251 = pneg %p70
        $region46: #{tpu_custom_call.1} parent=43 // pred_check_branch
          %253 = sbr.rel (%p251) target = $region48
        $region47: #{tpu_custom_call.1} parent=43 // pred_region
          %255 = dma.done %s247, 1024
        $region48: #{tpu_custom_call.1} parent=43 // pred_fallthru
          _
        %p256 = scmp.lt.s32.totalorder %s23, 1
        %s257 = scalar_select %p256, %s23, 1
        %s258 = smul.addr %s257, 8
        %s259 = scalar_lea.vmem %s0, %s258
        %p260 = pneg %p44
        %p261 = pneg %p41
        %s262 = sand.u32 %s57, 1
        %s263 = scalar_lea.sflag [#allocation3], %s262
        %s264 = sand.u32 %s57, 1
        %s265 = smul.addr %s264, 64
        %s266 = scalar_lea.vmem [#allocation2], %s265
        %p267 = pneg %p70
        %p268 = pneg %p67
        %p269 = pneg %p91
        %p270 = pneg %p88
        %p271 = pneg %p112
        %p272 = pneg %p109
        %p273 = pneg %p133
        %p274 = pneg %p130
        %p275 = pneg %p154
        %p276 = pneg %p151
        %p277 = pneg %p180
        %p278 = pneg %p177
        %s279 = sand.u32 %s167, 1
        %s280 = scalar_lea.sflag [#allocation4], %s279
        %s281 = sand.u32 %s167, 1
        %s282 = smul.addr %s281, 8
        %s283 = scalar_lea.vmem [#allocation5], %s282
        %p284 = scmp.lt.s32.totalorder %s23, 1
        %s285 = scalar_select %p284, %s23, 1
        %s286 = smul.addr %s285, 8
        %s287 = scalar_lea.vmem %s0, %s286
        %v288 = vld [vmem:[%s2] sm:$0xff]
        %v289 = vld [vmem:[%s2 + $0x8] sm:$0xff]
        %v290 = vld [vmem:[%s2 + $0x10] sm:$0xff]
        %v291 = vld [vmem:[%s2 + $0x18] sm:$0xff]
        %v292 = vld [vmem:[%s2 + $0x20] sm:$0xff]
        %v293 = vld [vmem:[%s2 + $0x28] sm:$0xff]
        %v294 = vld [vmem:[%s2 + $0x30] sm:$0xff]
        %v295 = vld [vmem:[%s2 + $0x38] sm:$0xff]
        %v296 = vld [vmem:[%s3] sm:$0x1]
        %v297 = vld [vmem:[%s4] sm:$0xff]
        %v298 = vld [vmem:[%s4 + $0x8] sm:$0xff]
        %v299 = vld [vmem:[%s4 + $0x10] sm:$0xff]
        %v300 = vld [vmem:[%s4 + $0x18] sm:$0xff]
        %v301 = vld [vmem:[%s5] sm:$0x1]
        %v302 = vld [vmem:[%s287] sm:$0xff]
        %v303 = vld [vmem:[%s250] sm:$0xff]
        %s304 = scalar_lea.vmem %s250, 8 [#allocation2]
        %v305 = vld [vmem:[%s304] sm:$0xff]
        %s306 = scalar_lea.vmem %s250, 16 [#allocation2]
        %v307 = vld [vmem:[%s306] sm:$0xff]
        %s308 = scalar_lea.vmem %s250, 24 [#allocation2]
        %v309 = vld [vmem:[%s308] sm:$0xff]
        %s310 = scalar_lea.vmem %s250, 32 [#allocation2]
        %v311 = vld [vmem:[%s310] sm:$0xff]
        %s312 = scalar_lea.vmem %s250, 40 [#allocation2]
        %v313 = vld [vmem:[%s312] sm:$0xff]
        %s314 = scalar_lea.vmem %s250, 48 [#allocation2]
        %v315 = vld [vmem:[%s314] sm:$0xff]
        %s316 = scalar_lea.vmem %s250, 56 [#allocation2]
        %v317 = vld [vmem:[%s316] sm:$0xff]
        %vm318 = vcmp.eq.s32.totalorder %v302, 1
        %v319 = vsel %vm318, 1, 0
        %320 = vset.pattern.permute.xlu0 0
        %321 = vperm.xlu0 %320, %v319
        %v322 = vpop.permute.xlu0 %321
        %vm323 = vcmp.eq.s32.totalorder %v322, 1
        %v324 = vsel %vm323, %v305, %v303
        %325 = vset.pattern.permute.xlu0 1
        %326 = vperm.xlu0 %325, %v319
        %v327 = vpop.permute.xlu0 %326
        %vm328 = vcmp.eq.s32.totalorder %v327, 1
        %v329 = vsel %vm328, %v305, %v303
        %vm330 = vcmp.eq.s32.totalorder %v302, 2
        %v331 = vsel %vm330, 1, 0
        %332 = vset.pattern.permute.xlu0 0
        %333 = vperm.xlu0 %332, %v331
        %v334 = vpop.permute.xlu0 %333
        %vm335 = vcmp.eq.s32.totalorder %v334, 1
        %v336 = vsel %vm335, %v307, %v324
        %337 = vset.pattern.permute.xlu0 1
        %338 = vperm.xlu0 %337, %v331
        %v339 = vpop.permute.xlu0 %338
        %vm340 = vcmp.eq.s32.totalorder %v339, 1
        %v341 = vsel %vm340, %v307, %v329
        %vm342 = vcmp.eq.s32.totalorder %v302, 3
        %v343 = vsel %vm342, 1, 0
        %344 = vset.pattern.permute.xlu0 0
        %345 = vperm.xlu0 %344, %v343
        %v346 = vpop.permute.xlu0 %345
        %vm347 = vcmp.eq.s32.totalorder %v346, 1
        %v348 = vsel %vm347, %v309, %v336
        %349 = vset.pattern.permute.xlu0 1
        %350 = vperm.xlu0 %349, %v343
        %v351 = vpop.permute.xlu0 %350
        %vm352 = vcmp.eq.s32.totalorder %v351, 1
        %v353 = vsel %vm352, %v309, %v341
        %vm354 = vcmp.eq.s32.totalorder %v302, 4
        %v355 = vsel %vm354, 1, 0
        %356 = vset.pattern.permute.xlu0 0
        %357 = vperm.xlu0 %356, %v355
        %v358 = vpop.permute.xlu0 %357
        %vm359 = vcmp.eq.s32.totalorder %v358, 1
        %v360 = vsel %vm359, %v311, %v348
        %361 = vset.pattern.permute.xlu0 1
        %362 = vperm.xlu0 %361, %v355
        %v363 = vpop.permute.xlu0 %362
        %vm364 = vcmp.eq.s32.totalorder %v363, 1
        %v365 = vsel %vm364, %v311, %v353
        %vm366 = vcmp.eq.s32.totalorder %v302, 5
        %v367 = vsel %vm366, 1, 0
        %368 = vset.pattern.permute.xlu0 0
        %369 = vperm.xlu0 %368, %v367
        %v370 = vpop.permute.xlu0 %369
        %vm371 = vcmp.eq.s32.totalorder %v370, 1
        %v372 = vsel %vm371, %v313, %v360
        %373 = vset.pattern.permute.xlu0 1
        %374 = vperm.xlu0 %373, %v367
        %v375 = vpop.permute.xlu0 %374
        %vm376 = vcmp.eq.s32.totalorder %v375, 1
        %v377 = vsel %vm376, %v313, %v365
        %vm378 = vcmp.eq.s32.totalorder %v302, 6
        %v379 = vsel %vm378, 1, 0
        %380 = vset.pattern.permute.xlu0 0
        %381 = vperm.xlu0 %380, %v379
        %v382 = vpop.permute.xlu0 %381
        %vm383 = vcmp.eq.s32.totalorder %v382, 1
        %v384 = vsel %vm383, %v315, %v372
        %385 = vset.pattern.permute.xlu0 1
        %386 = vperm.xlu0 %385, %v379
        %v387 = vpop.permute.xlu0 %386
        %vm388 = vcmp.eq.s32.totalorder %v387, 1
        %v389 = vsel %vm388, %v315, %v377
        %vm390 = vcmp.eq.s32.totalorder %v302, 7
        %v391 = vsel %vm390, 1, 0
        %392 = vset.pattern.permute.xlu0 0
        %393 = vperm.xlu0 %392, %v391
        %v394 = vpop.permute.xlu0 %393
        %vm395 = vcmp.eq.s32.totalorder %v394, 1
        %v396 = vsel %vm395, %v317, %v384
        %397 = vset.pattern.permute.xlu0 1
        %398 = vperm.xlu0 %397, %v391
        %v399 = vpop.permute.xlu0 %398
        %vm400 = vcmp.eq.s32.totalorder %v399, 1
        %v401 = vsel %vm400, %v317, %v389
        %403 = vrot.lane.b32.xlu0 %v401, 32
        %v404 = vpop.permute.xlu0 %403
        %vm406 = vcmask 261120
        %v407 = vsel %vm406, %v396, %v404
        %v409 = vperm.slane %v296, 0
        %vm411 = vcmask 523264
        %v413 = vsel %vm411, %v407, 0
        %415 = vmatpush.msra.mxu0 0.0
        %416 = vmatpush.msra.mxu0 0.0
        %417 = vmatpush.msra.mxu0 0.0
        %418 = vmatpush.msra.mxu0 0.0
        %419 = vmatpush.msra.mxu0 0.0
        %420 = vmatpush.msra.mxu0 0.0
        %421 = vmatpush.msra.mxu0 0.0
        %422 = vmatpush.msra.mxu0 0.0
        %423 = vmatpush.msra.mxu0 %v295
        %424 = vmatpush.msra.mxu0 %v294
        %425 = vmatpush.msra.mxu0 %v293
        %426 = vmatpush.msra.mxu0 %v292
        %427 = vmatpush.msra.mxu0 %v291
        %428 = vmatpush.msra.mxu0 %v290
        %429 = vmatpush.msra.mxu0 %v289
        %430 = vmatpush.msra.mxu0 %v288
        %431 = vmatmul.f32.gmra.mxu0 %v413
        %v432 = vpop.f32.mrf.mxu0
        %v433 = vadd.f32 %v409, %v432
        %434 = vdwg.mxu0
        %v435 = vtanh.pop %v433
        %v436 = vmul.f32 %v435, %v435
        %v437 = vsel %vm406, %v436, 0.0
        %438 = vadd.xlane.f32.xlu0 %v437
        %v439 = vpop.xlane.xlu0 %438
        %v440 = vrsqrt.pop %v439
        %v441 = vmul.f32 %v440, %v439
        %v442 = vmul.f32 %v441, %v440
        %v443 = vmul.f32 0.5, %v442
        %v444 = vsub.f32 1.5, %v443
        %v445 = vmul.f32 %v440, %v444
        %vm446 = vweird.f32 %v439
        %vm447 = vweird.f32 %v440
        %vm448 = vmor %vm446, %vm447
        %v449 = vsel %vm448, %v440, %v445
        %v450 = vmul.f32 %v435, %v449
        %v452 = vperm.slane %v301, 0
        %v455 = vsel %vm406, %v450, 0
        %457 = vmatpush.msra.mxu0 0.0
        %458 = vmatpush.msra.mxu0 0.0
        %459 = vmatpush.msra.mxu0 0.0
        %460 = vmatpush.msra.mxu0 0.0
        %461 = vmatpush.msra.mxu0 0.0
        %462 = vmatpush.msra.mxu0 0.0
        %463 = vmatpush.msra.mxu0 0.0
        %464 = vmatpush.msra.mxu0 0.0
        %465 = vmatpush.msra.mxu0 0.0
        %466 = vmatpush.msra.mxu0 0.0
        %467 = vmatpush.msra.mxu0 0.0
        %468 = vmatpush.msra.mxu0 0.0
        %469 = vmatpush.msra.mxu0 %v300
        %470 = vmatpush.msra.mxu0 %v299
        %471 = vmatpush.msra.mxu0 %v298
        %472 = vmatpush.msra.mxu0 %v297
        %473 = vmatmul.f32.gmra.mxu0 %v455
        %v474 = vpop.f32.mrf.mxu0
        %v475 = vadd.f32 %v452, %v474
        %476 = vdwg.mxu0
        %v477 = vtanh.pop %v475
        %v478 = vmul.f32 %v477, %v477
        %v479 = vsel %vm406, %v478, 0.0
        %480 = vadd.xlane.f32.xlu0 %v479
        %v481 = vpop.xlane.xlu0 %480
        %v482 = vrsqrt.pop %v481
        %v483 = vmul.f32 %v482, %v481
        %v484 = vmul.f32 %v483, %v482
        %v485 = vmul.f32 0.5, %v484
        %v486 = vsub.f32 1.5, %v485
        %v487 = vmul.f32 %v482, %v486
        %vm488 = vweird.f32 %v481
        %vm489 = vweird.f32 %v482
        %vm490 = vmor %vm488, %vm489
        %v491 = vsel %vm490, %v482, %v487
        %v492 = vmul.f32 %v477, %v491
        %494 = vrot.lane.b32.xlu0 %v478, 96
        %v495 = vpop.permute.xlu0 %494
        %v497 = vsel %vm406, %v495, 0.0
        %498 = vadd.xlane.f32.xlu0 %v497
        %v499 = vpop.xlane.xlu0 %498
        %v500 = vrsqrt.pop %v499
        %v501 = vmul.f32 %v500, %v499
        %v502 = vmul.f32 %v501, %v500
        %v503 = vmul.f32 0.5, %v502
        %v504 = vsub.f32 1.5, %v503
        %v505 = vmul.f32 %v500, %v504
        %vm506 = vweird.f32 %v499
        %vm507 = vweird.f32 %v500
        %vm508 = vmor %vm506, %vm507
        %v509 = vsel %vm508, %v500, %v505
        %v510 = vmul.f32 %v477, %v509
        %v511 = vsel %vm406, %v492, %v510
        %v512 = vsub.f32 %v511, %v407
        %v513 = vmul.f32 %v512, %v512
        %v514 = vadd.f32 %v513, 0.0
        %515 = vset.pattern.permute.xlu0 2
        %516 = vperm.xlu0 %515, %v319
        %v517 = vpop.permute.xlu0 %516
        %vm518 = vcmp.eq.s32.totalorder %v517, 1
        %v519 = vsel %vm518, %v305, %v303
        %520 = vset.pattern.permute.xlu0 3
        %521 = vperm.xlu0 %520, %v319
        %v522 = vpop.permute.xlu0 %521
        %vm523 = vcmp.eq.s32.totalorder %v522, 1
        %v524 = vsel %vm523, %v305, %v303
        %525 = vset.pattern.permute.xlu0 2
        %526 = vperm.xlu0 %525, %v331
        %v527 = vpop.permute.xlu0 %526
        %vm528 = vcmp.eq.s32.totalorder %v527, 1
        %v529 = vsel %vm528, %v307, %v519
        %530 = vset.pattern.permute.xlu0 3
        %531 = vperm.xlu0 %530, %v331
        %v532 = vpop.permute.xlu0 %531
        %vm533 = vcmp.eq.s32.totalorder %v532, 1
        %v534 = vsel %vm533, %v307, %v524
        %535 = vset.pattern.permute.xlu0 2
        %536 = vperm.xlu0 %535, %v343
        %v537 = vpop.permute.xlu0 %536
        %vm538 = vcmp.eq.s32.totalorder %v537, 1
        %v539 = vsel %vm538, %v309, %v529
        %540 = vset.pattern.permute.xlu0 3
        %541 = vperm.xlu0 %540, %v343
        %v542 = vpop.permute.xlu0 %541
        %vm543 = vcmp.eq.s32.totalorder %v542, 1
        %v544 = vsel %vm543, %v309, %v534
        %545 = vset.pattern.permute.xlu0 2
        %546 = vperm.xlu0 %545, %v355
        %v547 = vpop.permute.xlu0 %546
        %vm548 = vcmp.eq.s32.totalorder %v547, 1
        %v549 = vsel %vm548, %v311, %v539
        %550 = vset.pattern.permute.xlu0 3
        %551 = vperm.xlu0 %550, %v355
        %v552 = vpop.permute.xlu0 %551
        %vm553 = vcmp.eq.s32.totalorder %v552, 1
        %v554 = vsel %vm553, %v311, %v544
        %555 = vset.pattern.permute.xlu0 2
        %556 = vperm.xlu0 %555, %v367
        %v557 = vpop.permute.xlu0 %556
        %vm558 = vcmp.eq.s32.totalorder %v557, 1
        %v559 = vsel %vm558, %v313, %v549
        %560 = vset.pattern.permute.xlu0 3
        %561 = vperm.xlu0 %560, %v367
        %v562 = vpop.permute.xlu0 %561
        %vm563 = vcmp.eq.s32.totalorder %v562, 1
        %v564 = vsel %vm563, %v313, %v554
        %565 = vset.pattern.permute.xlu0 2
        %566 = vperm.xlu0 %565, %v379
        %v567 = vpop.permute.xlu0 %566
        %vm568 = vcmp.eq.s32.totalorder %v567, 1
        %v569 = vsel %vm568, %v315, %v559
        %570 = vset.pattern.permute.xlu0 3
        %571 = vperm.xlu0 %570, %v379
        %v572 = vpop.permute.xlu0 %571
        %vm573 = vcmp.eq.s32.totalorder %v572, 1
        %v574 = vsel %vm573, %v315, %v564
        %575 = vset.pattern.permute.xlu0 2
        %576 = vperm.xlu0 %575, %v391
        %v577 = vpop.permute.xlu0 %576
        %vm578 = vcmp.eq.s32.totalorder %v577, 1
        %v579 = vsel %vm578, %v317, %v569
        %580 = vset.pattern.permute.xlu0 3
        %581 = vperm.xlu0 %580, %v391
        %v582 = vpop.permute.xlu0 %581
        %vm583 = vcmp.eq.s32.totalorder %v582, 1
        %v584 = vsel %vm583, %v317, %v574
        %vm585 = vcmp.eq.s32.totalorder %v302, 8
        %v586 = vsel %vm585, 1, 0
        %587 = vset.pattern.permute.xlu0 2
        %588 = vperm.xlu0 %587, %v586
        %v589 = vpop.permute.xlu0 %588
        %vm590 = vcmp.eq.s32.totalorder %v589, 1
        %v591 = vsel %vm590, %v450, %v579
        %592 = vset.pattern.permute.xlu0 3
        %593 = vperm.xlu0 %592, %v586
        %v594 = vpop.permute.xlu0 %593
        %vm595 = vcmp.eq.s32.totalorder %v594, 1
        %v596 = vsel %vm595, %v450, %v584
        %598 = vrot.lane.b32.xlu0 %v596, 32
        %v599 = vpop.permute.xlu0 %598
        %v601 = vsel %vm406, %v591, %v599
        %v603 = vsel %vm411, %v601, 0
        %605 = vmatpush.msra.mxu0 0.0
        %606 = vmatpush.msra.mxu0 0.0
        %607 = vmatpush.msra.mxu0 0.0
        %608 = vmatpush.msra.mxu0 0.0
        %609 = vmatpush.msra.mxu0 0.0
        %610 = vmatpush.msra.mxu0 0.0
        %611 = vmatpush.msra.mxu0 0.0
        %612 = vmatpush.msra.mxu0 0.0
        %613 = vmatpush.msra.mxu0 %v295
        %614 = vmatpush.msra.mxu0 %v294
        %615 = vmatpush.msra.mxu0 %v293
        %616 = vmatpush.msra.mxu0 %v292
        %617 = vmatpush.msra.mxu0 %v291
        %618 = vmatpush.msra.mxu0 %v290
        %619 = vmatpush.msra.mxu0 %v289
        %620 = vmatpush.msra.mxu0 %v288
        %621 = vmatmul.f32.gmra.mxu0 %v603
        %v622 = vpop.f32.mrf.mxu0
        %v623 = vadd.f32 %v409, %v622
        %624 = vdwg.mxu0
        %v625 = vtanh.pop %v623
        %v626 = vmul.f32 %v625, %v625
        %v627 = vsel %vm406, %v626, 0.0
        %628 = vadd.xlane.f32.xlu0 %v627
        %v629 = vpop.xlane.xlu0 %628
        %v630 = vrsqrt.pop %v629
        %v631 = vmul.f32 %v630, %v629
        %v632 = vmul.f32 %v631, %v630
        %v633 = vmul.f32 0.5, %v632
        %v634 = vsub.f32 1.5, %v633
        %v635 = vmul.f32 %v630, %v634
        %vm636 = vweird.f32 %v629
        %vm637 = vweird.f32 %v630
        %vm638 = vmor %vm636, %vm637
        %v639 = vsel %vm638, %v630, %v635
        %v640 = vmul.f32 %v625, %v639
        %v642 = vsel %vm406, %v640, 0
        %644 = vmatpush.msra.mxu0 0.0
        %645 = vmatpush.msra.mxu0 0.0
        %646 = vmatpush.msra.mxu0 0.0
        %647 = vmatpush.msra.mxu0 0.0
        %648 = vmatpush.msra.mxu0 0.0
        %649 = vmatpush.msra.mxu0 0.0
        %650 = vmatpush.msra.mxu0 0.0
        %651 = vmatpush.msra.mxu0 0.0
        %652 = vmatpush.msra.mxu0 0.0
        %653 = vmatpush.msra.mxu0 0.0
        %654 = vmatpush.msra.mxu0 0.0
        %655 = vmatpush.msra.mxu0 0.0
        %656 = vmatpush.msra.mxu0 %v300
        %657 = vmatpush.msra.mxu0 %v299
        %658 = vmatpush.msra.mxu0 %v298
        %659 = vmatpush.msra.mxu0 %v297
        %660 = vmatmul.f32.gmra.mxu0 %v642
        %v661 = vpop.f32.mrf.mxu0
        %v662 = vadd.f32 %v452, %v661
        %663 = vdwg.mxu0
        %v664 = vtanh.pop %v662
        %v665 = vmul.f32 %v664, %v664
        %v666 = vsel %vm406, %v665, 0.0
        %667 = vadd.xlane.f32.xlu0 %v666
        %v668 = vpop.xlane.xlu0 %667
        %v669 = vrsqrt.pop %v668
        %v670 = vmul.f32 %v669, %v668
        %v671 = vmul.f32 %v670, %v669
        %v672 = vmul.f32 0.5, %v671
        %v673 = vsub.f32 1.5, %v672
        %v674 = vmul.f32 %v669, %v673
        %vm675 = vweird.f32 %v668
        %vm676 = vweird.f32 %v669
        %vm677 = vmor %vm675, %vm676
        %v678 = vsel %vm677, %v669, %v674
        %v679 = vmul.f32 %v664, %v678
        %681 = vrot.lane.b32.xlu0 %v665, 96
        %v682 = vpop.permute.xlu0 %681
        %v684 = vsel %vm406, %v682, 0.0
        %685 = vadd.xlane.f32.xlu0 %v684
        %v686 = vpop.xlane.xlu0 %685
        %v687 = vrsqrt.pop %v686
        %v688 = vmul.f32 %v687, %v686
        %v689 = vmul.f32 %v688, %v687
        %v690 = vmul.f32 0.5, %v689
        %v691 = vsub.f32 1.5, %v690
        %v692 = vmul.f32 %v687, %v691
        %vm693 = vweird.f32 %v686
        %vm694 = vweird.f32 %v687
        %vm695 = vmor %vm693, %vm694
        %v696 = vsel %vm695, %v687, %v692
        %v697 = vmul.f32 %v664, %v696
        %v698 = vsel %vm406, %v679, %v697
        %v699 = vsub.f32 %v698, %v601
        %v700 = vmul.f32 %v699, %v699
        %v701 = vadd.f32 %v514, %v700
        %702 = vset.pattern.permute.xlu0 4
        %703 = vperm.xlu0 %702, %v319
        %v704 = vpop.permute.xlu0 %703
        %vm705 = vcmp.eq.s32.totalorder %v704, 1
        %v706 = vsel %vm705, %v305, %v303
        %707 = vset.pattern.permute.xlu0 5
        %708 = vperm.xlu0 %707, %v319
        %v709 = vpop.permute.xlu0 %708
        %vm710 = vcmp.eq.s32.totalorder %v709, 1
        %v711 = vsel %vm710, %v305, %v303
        %712 = vset.pattern.permute.xlu0 4
        %713 = vperm.xlu0 %712, %v331
        %v714 = vpop.permute.xlu0 %713
        %vm715 = vcmp.eq.s32.totalorder %v714, 1
        %v716 = vsel %vm715, %v307, %v706
        %717 = vset.pattern.permute.xlu0 5
        %718 = vperm.xlu0 %717, %v331
        %v719 = vpop.permute.xlu0 %718
        %vm720 = vcmp.eq.s32.totalorder %v719, 1
        %v721 = vsel %vm720, %v307, %v711
        %722 = vset.pattern.permute.xlu0 4
        %723 = vperm.xlu0 %722, %v343
        %v724 = vpop.permute.xlu0 %723
        %vm725 = vcmp.eq.s32.totalorder %v724, 1
        %v726 = vsel %vm725, %v309, %v716
        %727 = vset.pattern.permute.xlu0 5
        %728 = vperm.xlu0 %727, %v343
        %v729 = vpop.permute.xlu0 %728
        %vm730 = vcmp.eq.s32.totalorder %v729, 1
        %v731 = vsel %vm730, %v309, %v721
        %732 = vset.pattern.permute.xlu0 4
        %733 = vperm.xlu0 %732, %v355
        %v734 = vpop.permute.xlu0 %733
        %vm735 = vcmp.eq.s32.totalorder %v734, 1
        %v736 = vsel %vm735, %v311, %v726
        %737 = vset.pattern.permute.xlu0 5
        %738 = vperm.xlu0 %737, %v355
        %v739 = vpop.permute.xlu0 %738
        %vm740 = vcmp.eq.s32.totalorder %v739, 1
        %v741 = vsel %vm740, %v311, %v731
        %742 = vset.pattern.permute.xlu0 4
        %743 = vperm.xlu0 %742, %v367
        %v744 = vpop.permute.xlu0 %743
        %vm745 = vcmp.eq.s32.totalorder %v744, 1
        %v746 = vsel %vm745, %v313, %v736
        %747 = vset.pattern.permute.xlu0 5
        %748 = vperm.xlu0 %747, %v367
        %v749 = vpop.permute.xlu0 %748
        %vm750 = vcmp.eq.s32.totalorder %v749, 1
        %v751 = vsel %vm750, %v313, %v741
        %752 = vset.pattern.permute.xlu0 4
        %753 = vperm.xlu0 %752, %v379
        %v754 = vpop.permute.xlu0 %753
        %vm755 = vcmp.eq.s32.totalorder %v754, 1
        %v756 = vsel %vm755, %v315, %v746
        %757 = vset.pattern.permute.xlu0 5
        %758 = vperm.xlu0 %757, %v379
        %v759 = vpop.permute.xlu0 %758
        %vm760 = vcmp.eq.s32.totalorder %v759, 1
        %v761 = vsel %vm760, %v315, %v751
        %762 = vset.pattern.permute.xlu0 4
        %763 = vperm.xlu0 %762, %v391
        %v764 = vpop.permute.xlu0 %763
        %vm765 = vcmp.eq.s32.totalorder %v764, 1
        %v766 = vsel %vm765, %v317, %v756
        %767 = vset.pattern.permute.xlu0 5
        %768 = vperm.xlu0 %767, %v391
        %v769 = vpop.permute.xlu0 %768
        %vm770 = vcmp.eq.s32.totalorder %v769, 1
        %v771 = vsel %vm770, %v317, %v761
        %772 = vset.pattern.permute.xlu0 4
        %773 = vperm.xlu0 %772, %v586
        %v774 = vpop.permute.xlu0 %773
        %vm775 = vcmp.eq.s32.totalorder %v774, 1
        %v776 = vsel %vm775, %v450, %v766
        %777 = vset.pattern.permute.xlu0 5
        %778 = vperm.xlu0 %777, %v586
        %v779 = vpop.permute.xlu0 %778
        %vm780 = vcmp.eq.s32.totalorder %v779, 1
        %v781 = vsel %vm780, %v450, %v771
        %vm782 = vcmp.eq.s32.totalorder %v302, 9
        %v783 = vsel %vm782, 1, 0
        %784 = vset.pattern.permute.xlu0 4
        %785 = vperm.xlu0 %784, %v783
        %v786 = vpop.permute.xlu0 %785
        %vm787 = vcmp.eq.s32.totalorder %v786, 1
        %v788 = vsel %vm787, %v640, %v776
        %789 = vset.pattern.permute.xlu0 5
        %790 = vperm.xlu0 %789, %v783
        %v791 = vpop.permute.xlu0 %790
        %vm792 = vcmp.eq.s32.totalorder %v791, 1
        %v793 = vsel %vm792, %v640, %v781
        %795 = vrot.lane.b32.xlu0 %v793, 32
        %v796 = vpop.permute.xlu0 %795
        %v798 = vsel %vm406, %v788, %v796
        %v800 = vsel %vm411, %v798, 0
        %802 = vmatpush.msra.mxu0 0.0
        %803 = vmatpush.msra.mxu0 0.0
        %804 = vmatpush.msra.mxu0 0.0
        %805 = vmatpush.msra.mxu0 0.0
        %806 = vmatpush.msra.mxu0 0.0
        %807 = vmatpush.msra.mxu0 0.0
        %808 = vmatpush.msra.mxu0 0.0
        %809 = vmatpush.msra.mxu0 0.0
        %810 = vmatpush.msra.mxu0 %v295
        %811 = vmatpush.msra.mxu0 %v294
        %812 = vmatpush.msra.mxu0 %v293
        %813 = vmatpush.msra.mxu0 %v292
        %814 = vmatpush.msra.mxu0 %v291
        %815 = vmatpush.msra.mxu0 %v290
        %816 = vmatpush.msra.mxu0 %v289
        %817 = vmatpush.msra.mxu0 %v288
        %818 = vmatmul.f32.gmra.mxu0 %v800
        %v819 = vpop.f32.mrf.mxu0
        %v820 = vadd.f32 %v409, %v819
        %821 = vdwg.mxu0
        %v822 = vtanh.pop %v820
        %v823 = vmul.f32 %v822, %v822
        %v824 = vsel %vm406, %v823, 0.0
        %825 = vadd.xlane.f32.xlu0 %v824
        %v826 = vpop.xlane.xlu0 %825
        %v827 = vrsqrt.pop %v826
        %v828 = vmul.f32 %v827, %v826
        %v829 = vmul.f32 %v828, %v827
        %v830 = vmul.f32 0.5, %v829
        %v831 = vsub.f32 1.5, %v830
        %v832 = vmul.f32 %v827, %v831
        %vm833 = vweird.f32 %v826
        %vm834 = vweird.f32 %v827
        %vm835 = vmor %vm833, %vm834
        %v836 = vsel %vm835, %v827, %v832
        %v837 = vmul.f32 %v822, %v836
        %v839 = vsel %vm406, %v837, 0
        %841 = vmatpush.msra.mxu0 0.0
        %842 = vmatpush.msra.mxu0 0.0
        %843 = vmatpush.msra.mxu0 0.0
        %844 = vmatpush.msra.mxu0 0.0
        %845 = vmatpush.msra.mxu0 0.0
        %846 = vmatpush.msra.mxu0 0.0
        %847 = vmatpush.msra.mxu0 0.0
        %848 = vmatpush.msra.mxu0 0.0
        %849 = vmatpush.msra.mxu0 0.0
        %850 = vmatpush.msra.mxu0 0.0
        %851 = vmatpush.msra.mxu0 0.0
        %852 = vmatpush.msra.mxu0 0.0
        %853 = vmatpush.msra.mxu0 %v300
        %854 = vmatpush.msra.mxu0 %v299
        %855 = vmatpush.msra.mxu0 %v298
        %856 = vmatpush.msra.mxu0 %v297
        %857 = vmatmul.f32.gmra.mxu0 %v839
        %v858 = vpop.f32.mrf.mxu0
        %v859 = vadd.f32 %v452, %v858
        %860 = vdwg.mxu0
        %v861 = vtanh.pop %v859
        %v862 = vmul.f32 %v861, %v861
        %v863 = vsel %vm406, %v862, 0.0
        %864 = vadd.xlane.f32.xlu0 %v863
        %v865 = vpop.xlane.xlu0 %864
        %v866 = vrsqrt.pop %v865
        %v867 = vmul.f32 %v866, %v865
        %v868 = vmul.f32 %v867, %v866
        %v869 = vmul.f32 0.5, %v868
        %v870 = vsub.f32 1.5, %v869
        %v871 = vmul.f32 %v866, %v870
        %vm872 = vweird.f32 %v865
        %vm873 = vweird.f32 %v866
        %vm874 = vmor %vm872, %vm873
        %v875 = vsel %vm874, %v866, %v871
        %v876 = vmul.f32 %v861, %v875
        %878 = vrot.lane.b32.xlu0 %v862, 96
        %v879 = vpop.permute.xlu0 %878
        %v881 = vsel %vm406, %v879, 0.0
        %882 = vadd.xlane.f32.xlu0 %v881
        %v883 = vpop.xlane.xlu0 %882
        %v884 = vrsqrt.pop %v883
        %v885 = vmul.f32 %v884, %v883
        %v886 = vmul.f32 %v885, %v884
        %v887 = vmul.f32 0.5, %v886
        %v888 = vsub.f32 1.5, %v887
        %v889 = vmul.f32 %v884, %v888
        %vm890 = vweird.f32 %v883
        %vm891 = vweird.f32 %v884
        %vm892 = vmor %vm890, %vm891
        %v893 = vsel %vm892, %v884, %v889
        %v894 = vmul.f32 %v861, %v893
        %v895 = vsel %vm406, %v876, %v894
        %v896 = vsub.f32 %v895, %v798
        %v897 = vmul.f32 %v896, %v896
        %v898 = vadd.f32 %v701, %v897
        %899 = vset.pattern.permute.xlu0 6
        %900 = vperm.xlu0 %899, %v319
        %v901 = vpop.permute.xlu0 %900
        %vm902 = vcmp.eq.s32.totalorder %v901, 1
        %v903 = vsel %vm902, %v305, %v303
        %904 = vset.pattern.permute.xlu0 7
        %905 = vperm.xlu0 %904, %v319
        %v906 = vpop.permute.xlu0 %905
        %vm907 = vcmp.eq.s32.totalorder %v906, 1
        %v908 = vsel %vm907, %v305, %v303
        %909 = vset.pattern.permute.xlu0 6
        %910 = vperm.xlu0 %909, %v331
        %v911 = vpop.permute.xlu0 %910
        %vm912 = vcmp.eq.s32.totalorder %v911, 1
        %v913 = vsel %vm912, %v307, %v903
        %914 = vset.pattern.permute.xlu0 7
        %915 = vperm.xlu0 %914, %v331
        %v916 = vpop.permute.xlu0 %915
        %vm917 = vcmp.eq.s32.totalorder %v916, 1
        %v918 = vsel %vm917, %v307, %v908
        %919 = vset.pattern.permute.xlu0 6
        %920 = vperm.xlu0 %919, %v343
        %v921 = vpop.permute.xlu0 %920
        %vm922 = vcmp.eq.s32.totalorder %v921, 1
        %v923 = vsel %vm922, %v309, %v913
        %924 = vset.pattern.permute.xlu0 7
        %925 = vperm.xlu0 %924, %v343
        %v926 = vpop.permute.xlu0 %925
        %vm927 = vcmp.eq.s32.totalorder %v926, 1
        %v928 = vsel %vm927, %v309, %v918
        %929 = vset.pattern.permute.xlu0 6
        %930 = vperm.xlu0 %929, %v355
        %v931 = vpop.permute.xlu0 %930
        %vm932 = vcmp.eq.s32.totalorder %v931, 1
        %v933 = vsel %vm932, %v311, %v923
        %934 = vset.pattern.permute.xlu0 7
        %935 = vperm.xlu0 %934, %v355
        %v936 = vpop.permute.xlu0 %935
        %vm937 = vcmp.eq.s32.totalorder %v936, 1
        %v938 = vsel %vm937, %v311, %v928
        %939 = vset.pattern.permute.xlu0 6
        %940 = vperm.xlu0 %939, %v367
        %v941 = vpop.permute.xlu0 %940
        %vm942 = vcmp.eq.s32.totalorder %v941, 1
        %v943 = vsel %vm942, %v313, %v933
        %944 = vset.pattern.permute.xlu0 7
        %945 = vperm.xlu0 %944, %v367
        %v946 = vpop.permute.xlu0 %945
        %vm947 = vcmp.eq.s32.totalorder %v946, 1
        %v948 = vsel %vm947, %v313, %v938
        %949 = vset.pattern.permute.xlu0 6
        %950 = vperm.xlu0 %949, %v379
        %v951 = vpop.permute.xlu0 %950
        %vm952 = vcmp.eq.s32.totalorder %v951, 1
        %v953 = vsel %vm952, %v315, %v943
        %954 = vset.pattern.permute.xlu0 7
        %955 = vperm.xlu0 %954, %v379
        %v956 = vpop.permute.xlu0 %955
        %vm957 = vcmp.eq.s32.totalorder %v956, 1
        %v958 = vsel %vm957, %v315, %v948
        %959 = vset.pattern.permute.xlu0 6
        %960 = vperm.xlu0 %959, %v391
        %v961 = vpop.permute.xlu0 %960
        %vm962 = vcmp.eq.s32.totalorder %v961, 1
        %v963 = vsel %vm962, %v317, %v953
        %964 = vset.pattern.permute.xlu0 7
        %965 = vperm.xlu0 %964, %v391
        %v966 = vpop.permute.xlu0 %965
        %vm967 = vcmp.eq.s32.totalorder %v966, 1
        %v968 = vsel %vm967, %v317, %v958
        %969 = vset.pattern.permute.xlu0 6
        %970 = vperm.xlu0 %969, %v586
        %v971 = vpop.permute.xlu0 %970
        %vm972 = vcmp.eq.s32.totalorder %v971, 1
        %v973 = vsel %vm972, %v450, %v963
        %974 = vset.pattern.permute.xlu0 7
        %975 = vperm.xlu0 %974, %v586
        %v976 = vpop.permute.xlu0 %975
        %vm977 = vcmp.eq.s32.totalorder %v976, 1
        %v978 = vsel %vm977, %v450, %v968
        %979 = vset.pattern.permute.xlu0 6
        %980 = vperm.xlu0 %979, %v783
        %v981 = vpop.permute.xlu0 %980
        %vm982 = vcmp.eq.s32.totalorder %v981, 1
        %v983 = vsel %vm982, %v640, %v973
        %984 = vset.pattern.permute.xlu0 7
        %985 = vperm.xlu0 %984, %v783
        %v986 = vpop.permute.xlu0 %985
        %vm987 = vcmp.eq.s32.totalorder %v986, 1
        %v988 = vsel %vm987, %v640, %v978
        %vm989 = vcmp.eq.s32.totalorder %v302, 10
        %v990 = vsel %vm989, 1, 0
        %991 = vset.pattern.permute.xlu0 6
        %992 = vperm.xlu0 %991, %v990
        %v993 = vpop.permute.xlu0 %992
        %vm994 = vcmp.eq.s32.totalorder %v993, 1
        %v995 = vsel %vm994, %v837, %v983
        %996 = vset.pattern.permute.xlu0 7
        %997 = vperm.xlu0 %996, %v990
        %v998 = vpop.permute.xlu0 %997
        %vm999 = vcmp.eq.s32.totalorder %v998, 1
        %v1000 = vsel %vm999, %v837, %v988
        %1002 = vrot.lane.b32.xlu0 %v1000, 32
        %v1003 = vpop.permute.xlu0 %1002
        %v1005 = vsel %vm406, %v995, %v1003
        %v1007 = vsel %vm411, %v1005, 0
        %1009 = vmatpush.msra.mxu0 0.0
        %1010 = vmatpush.msra.mxu0 0.0
        %1011 = vmatpush.msra.mxu0 0.0
        %1012 = vmatpush.msra.mxu0 0.0
        %1013 = vmatpush.msra.mxu0 0.0
        %1014 = vmatpush.msra.mxu0 0.0
        %1015 = vmatpush.msra.mxu0 0.0
        %1016 = vmatpush.msra.mxu0 0.0
        %1017 = vmatpush.msra.mxu0 %v295
        %1018 = vmatpush.msra.mxu0 %v294
        %1019 = vmatpush.msra.mxu0 %v293
        %1020 = vmatpush.msra.mxu0 %v292
        %1021 = vmatpush.msra.mxu0 %v291
        %1022 = vmatpush.msra.mxu0 %v290
        %1023 = vmatpush.msra.mxu0 %v289
        %1024 = vmatpush.msra.mxu0 %v288
        %1025 = vmatmul.f32.gmra.mxu0 %v1007
        %v1026 = vpop.f32.mrf.mxu0
        %v1027 = vadd.f32 %v409, %v1026
        %1028 = vdwg.mxu0
        %v1029 = vtanh.pop %v1027
        %v1030 = vmul.f32 %v1029, %v1029
        %v1031 = vsel %vm406, %v1030, 0.0
        %1032 = vadd.xlane.f32.xlu0 %v1031
        %v1033 = vpop.xlane.xlu0 %1032
        %v1034 = vrsqrt.pop %v1033
        %v1035 = vmul.f32 %v1034, %v1033
        %v1036 = vmul.f32 %v1035, %v1034
        %v1037 = vmul.f32 0.5, %v1036
        %v1038 = vsub.f32 1.5, %v1037
        %v1039 = vmul.f32 %v1034, %v1038
        %vm1040 = vweird.f32 %v1033
        %vm1041 = vweird.f32 %v1034
        %vm1042 = vmor %vm1040, %vm1041
        %v1043 = vsel %vm1042, %v1034, %v1039
        %v1044 = vmul.f32 %v1029, %v1043
        %v1046 = vsel %vm406, %v1044, 0
        %1048 = vmatpush.msra.mxu0 0.0
        %1049 = vmatpush.msra.mxu0 0.0
        %1050 = vmatpush.msra.mxu0 0.0
        %1051 = vmatpush.msra.mxu0 0.0
        %1052 = vmatpush.msra.mxu0 0.0
        %1053 = vmatpush.msra.mxu0 0.0
        %1054 = vmatpush.msra.mxu0 0.0
        %1055 = vmatpush.msra.mxu0 0.0
        %1056 = vmatpush.msra.mxu0 0.0
        %1057 = vmatpush.msra.mxu0 0.0
        %1058 = vmatpush.msra.mxu0 0.0
        %1059 = vmatpush.msra.mxu0 0.0
        %1060 = vmatpush.msra.mxu0 %v300
        %1061 = vmatpush.msra.mxu0 %v299
        %1062 = vmatpush.msra.mxu0 %v298
        %1063 = vmatpush.msra.mxu0 %v297
        %1064 = vmatmul.f32.gmra.mxu0 %v1046
        %v1065 = vpop.f32.mrf.mxu0
        %v1066 = vadd.f32 %v452, %v1065
        %1067 = vdwg.mxu0
        %v1068 = vtanh.pop %v1066
        %v1069 = vmul.f32 %v1068, %v1068
        %v1070 = vsel %vm406, %v1069, 0.0
        %1071 = vadd.xlane.f32.xlu0 %v1070
        %v1072 = vpop.xlane.xlu0 %1071
        %v1073 = vrsqrt.pop %v1072
        %v1074 = vmul.f32 %v1073, %v1072
        %v1075 = vmul.f32 %v1074, %v1073
        %v1076 = vmul.f32 0.5, %v1075
        %v1077 = vsub.f32 1.5, %v1076
        %v1078 = vmul.f32 %v1073, %v1077
        %vm1079 = vweird.f32 %v1072
        %vm1080 = vweird.f32 %v1073
        %vm1081 = vmor %vm1079, %vm1080
        %v1082 = vsel %vm1081, %v1073, %v1078
        %v1083 = vmul.f32 %v1068, %v1082
        %1085 = vrot.lane.b32.xlu0 %v1069, 96
        %v1086 = vpop.permute.xlu0 %1085
        %v1088 = vsel %vm406, %v1086, 0.0
        %1089 = vadd.xlane.f32.xlu0 %v1088
        %v1090 = vpop.xlane.xlu0 %1089
        %v1091 = vrsqrt.pop %v1090
        %v1092 = vmul.f32 %v1091, %v1090
        %v1093 = vmul.f32 %v1092, %v1091
        %v1094 = vmul.f32 0.5, %v1093
        %v1095 = vsub.f32 1.5, %v1094
        %v1096 = vmul.f32 %v1091, %v1095
        %vm1097 = vweird.f32 %v1090
        %vm1098 = vweird.f32 %v1091
        %vm1099 = vmor %vm1097, %vm1098
        %v1100 = vsel %vm1099, %v1091, %v1096
        %v1101 = vmul.f32 %v1068, %v1100
        %v1102 = vsel %vm406, %v1083, %v1101
        %v1103 = vsub.f32 %v1102, %v1005
        %v1104 = vmul.f32 %v1103, %v1103
        %v1105 = vadd.f32 %v898, %v1104
        %1106 = vset.pattern.permute.xlu0 8
        %1107 = vperm.xlu0 %1106, %v319
        %v1108 = vpop.permute.xlu0 %1107
        %vm1109 = vcmp.eq.s32.totalorder %v1108, 1
        %v1110 = vsel %vm1109, %v305, %v303
        %1111 = vset.pattern.permute.xlu0 9
        %1112 = vperm.xlu0 %1111, %v319
        %v1113 = vpop.permute.xlu0 %1112
        %vm1114 = vcmp.eq.s32.totalorder %v1113, 1
        %v1115 = vsel %vm1114, %v305, %v303
        %1116 = vset.pattern.permute.xlu0 8
        %1117 = vperm.xlu0 %1116, %v331
        %v1118 = vpop.permute.xlu0 %1117
        %vm1119 = vcmp.eq.s32.totalorder %v1118, 1
        %v1120 = vsel %vm1119, %v307, %v1110
        %1121 = vset.pattern.permute.xlu0 9
        %1122 = vperm.xlu0 %1121, %v331
        %v1123 = vpop.permute.xlu0 %1122
        %vm1124 = vcmp.eq.s32.totalorder %v1123, 1
        %v1125 = vsel %vm1124, %v307, %v1115
        %1126 = vset.pattern.permute.xlu0 8
        %1127 = vperm.xlu0 %1126, %v343
        %v1128 = vpop.permute.xlu0 %1127
        %vm1129 = vcmp.eq.s32.totalorder %v1128, 1
        %v1130 = vsel %vm1129, %v309, %v1120
        %1131 = vset.pattern.permute.xlu0 9
        %1132 = vperm.xlu0 %1131, %v343
        %v1133 = vpop.permute.xlu0 %1132
        %vm1134 = vcmp.eq.s32.totalorder %v1133, 1
        %v1135 = vsel %vm1134, %v309, %v1125
        %1136 = vset.pattern.permute.xlu0 8
        %1137 = vperm.xlu0 %1136, %v355
        %v1138 = vpop.permute.xlu0 %1137
        %vm1139 = vcmp.eq.s32.totalorder %v1138, 1
        %v1140 = vsel %vm1139, %v311, %v1130
        %1141 = vset.pattern.permute.xlu0 9
        %1142 = vperm.xlu0 %1141, %v355
        %v1143 = vpop.permute.xlu0 %1142
        %vm1144 = vcmp.eq.s32.totalorder %v1143, 1
        %v1145 = vsel %vm1144, %v311, %v1135
        %1146 = vset.pattern.permute.xlu0 8
        %1147 = vperm.xlu0 %1146, %v367
        %v1148 = vpop.permute.xlu0 %1147
        %vm1149 = vcmp.eq.s32.totalorder %v1148, 1
        %v1150 = vsel %vm1149, %v313, %v1140
        %1151 = vset.pattern.permute.xlu0 9
        %1152 = vperm.xlu0 %1151, %v367
        %v1153 = vpop.permute.xlu0 %1152
        %vm1154 = vcmp.eq.s32.totalorder %v1153, 1
        %v1155 = vsel %vm1154, %v313, %v1145
        %1156 = vset.pattern.permute.xlu0 8
        %1157 = vperm.xlu0 %1156, %v379
        %v1158 = vpop.permute.xlu0 %1157
        %vm1159 = vcmp.eq.s32.totalorder %v1158, 1
        %v1160 = vsel %vm1159, %v315, %v1150
        %1161 = vset.pattern.permute.xlu0 9
        %1162 = vperm.xlu0 %1161, %v379
        %v1163 = vpop.permute.xlu0 %1162
        %vm1164 = vcmp.eq.s32.totalorder %v1163, 1
        %v1165 = vsel %vm1164, %v315, %v1155
        %1166 = vset.pattern.permute.xlu0 8
        %1167 = vperm.xlu0 %1166, %v391
        %v1168 = vpop.permute.xlu0 %1167
        %vm1169 = vcmp.eq.s32.totalorder %v1168, 1
        %v1170 = vsel %vm1169, %v317, %v1160
        %1171 = vset.pattern.permute.xlu0 9
        %1172 = vperm.xlu0 %1171, %v391
        %v1173 = vpop.permute.xlu0 %1172
        %vm1174 = vcmp.eq.s32.totalorder %v1173, 1
        %v1175 = vsel %vm1174, %v317, %v1165
        %1176 = vset.pattern.permute.xlu0 8
        %1177 = vperm.xlu0 %1176, %v586
        %v1178 = vpop.permute.xlu0 %1177
        %vm1179 = vcmp.eq.s32.totalorder %v1178, 1
        %v1180 = vsel %vm1179, %v450, %v1170
        %1181 = vset.pattern.permute.xlu0 9
        %1182 = vperm.xlu0 %1181, %v586
        %v1183 = vpop.permute.xlu0 %1182
        %vm1184 = vcmp.eq.s32.totalorder %v1183, 1
        %v1185 = vsel %vm1184, %v450, %v1175
        %1186 = vset.pattern.permute.xlu0 8
        %1187 = vperm.xlu0 %1186, %v783
        %v1188 = vpop.permute.xlu0 %1187
        %vm1189 = vcmp.eq.s32.totalorder %v1188, 1
        %v1190 = vsel %vm1189, %v640, %v1180
        %1191 = vset.pattern.permute.xlu0 9
        %1192 = vperm.xlu0 %1191, %v783
        %v1193 = vpop.permute.xlu0 %1192
        %vm1194 = vcmp.eq.s32.totalorder %v1193, 1
        %v1195 = vsel %vm1194, %v640, %v1185
        %1196 = vset.pattern.permute.xlu0 8
        %1197 = vperm.xlu0 %1196, %v990
        %v1198 = vpop.permute.xlu0 %1197
        %vm1199 = vcmp.eq.s32.totalorder %v1198, 1
        %v1200 = vsel %vm1199, %v837, %v1190
        %1201 = vset.pattern.permute.xlu0 9
        %1202 = vperm.xlu0 %1201, %v990
        %v1203 = vpop.permute.xlu0 %1202
        %vm1204 = vcmp.eq.s32.totalorder %v1203, 1
        %v1205 = vsel %vm1204, %v837, %v1195
        %vm1206 = vcmp.eq.s32.totalorder %v302, 11
        %v1207 = vsel %vm1206, 1, 0
        %1208 = vset.pattern.permute.xlu0 8
        %1209 = vperm.xlu0 %1208, %v1207
        %v1210 = vpop.permute.xlu0 %1209
        %vm1211 = vcmp.eq.s32.totalorder %v1210, 1
        %v1212 = vsel %vm1211, %v1044, %v1200
        %1213 = vset.pattern.permute.xlu0 9
        %1214 = vperm.xlu0 %1213, %v1207
        %v1215 = vpop.permute.xlu0 %1214
        %vm1216 = vcmp.eq.s32.totalorder %v1215, 1
        %v1217 = vsel %vm1216, %v1044, %v1205
        %1219 = vrot.lane.b32.xlu0 %v1217, 32
        %v1220 = vpop.permute.xlu0 %1219
        %v1222 = vsel %vm406, %v1212, %v1220
        %v1224 = vsel %vm411, %v1222, 0
        %1226 = vmatpush.msra.mxu0 0.0
        %1227 = vmatpush.msra.mxu0 0.0
        %1228 = vmatpush.msra.mxu0 0.0
        %1229 = vmatpush.msra.mxu0 0.0
        %1230 = vmatpush.msra.mxu0 0.0
        %1231 = vmatpush.msra.mxu0 0.0
        %1232 = vmatpush.msra.mxu0 0.0
        %1233 = vmatpush.msra.mxu0 0.0
        %1234 = vmatpush.msra.mxu0 %v295
        %1235 = vmatpush.msra.mxu0 %v294
        %1236 = vmatpush.msra.mxu0 %v293
        %1237 = vmatpush.msra.mxu0 %v292
        %1238 = vmatpush.msra.mxu0 %v291
        %1239 = vmatpush.msra.mxu0 %v290
        %1240 = vmatpush.msra.mxu0 %v289
        %1241 = vmatpush.msra.mxu0 %v288
        %1242 = vmatmul.f32.gmra.mxu0 %v1224
        %v1243 = vpop.f32.mrf.mxu0
        %v1244 = vadd.f32 %v409, %v1243
        %1245 = vdwg.mxu0
        %v1246 = vtanh.pop %v1244
        %v1247 = vmul.f32 %v1246, %v1246
        %v1248 = vsel %vm406, %v1247, 0.0
        %1249 = vadd.xlane.f32.xlu0 %v1248
        %v1250 = vpop.xlane.xlu0 %1249
        %v1251 = vrsqrt.pop %v1250
        %v1252 = vmul.f32 %v1251, %v1250
        %v1253 = vmul.f32 %v1252, %v1251
        %v1254 = vmul.f32 0.5, %v1253
        %v1255 = vsub.f32 1.5, %v1254
        %v1256 = vmul.f32 %v1251, %v1255
        %vm1257 = vweird.f32 %v1250
        %vm1258 = vweird.f32 %v1251
        %vm1259 = vmor %vm1257, %vm1258
        %v1260 = vsel %vm1259, %v1251, %v1256
        %v1261 = vmul.f32 %v1246, %v1260
        %v1263 = vsel %vm406, %v1261, 0
        %1265 = vmatpush.msra.mxu0 0.0
        %1266 = vmatpush.msra.mxu0 0.0
        %1267 = vmatpush.msra.mxu0 0.0
        %1268 = vmatpush.msra.mxu0 0.0
        %1269 = vmatpush.msra.mxu0 0.0
        %1270 = vmatpush.msra.mxu0 0.0
        %1271 = vmatpush.msra.mxu0 0.0
        %1272 = vmatpush.msra.mxu0 0.0
        %1273 = vmatpush.msra.mxu0 0.0
        %1274 = vmatpush.msra.mxu0 0.0
        %1275 = vmatpush.msra.mxu0 0.0
        %1276 = vmatpush.msra.mxu0 0.0
        %1277 = vmatpush.msra.mxu0 %v300
        %1278 = vmatpush.msra.mxu0 %v299
        %1279 = vmatpush.msra.mxu0 %v298
        %1280 = vmatpush.msra.mxu0 %v297
        %1281 = vmatmul.f32.gmra.mxu0 %v1263
        %v1282 = vpop.f32.mrf.mxu0
        %v1283 = vadd.f32 %v452, %v1282
        %1284 = vdwg.mxu0
        %v1285 = vtanh.pop %v1283
        %v1286 = vmul.f32 %v1285, %v1285
        %v1287 = vsel %vm406, %v1286, 0.0
        %1288 = vadd.xlane.f32.xlu0 %v1287
        %v1289 = vpop.xlane.xlu0 %1288
        %v1290 = vrsqrt.pop %v1289
        %v1291 = vmul.f32 %v1290, %v1289
        %v1292 = vmul.f32 %v1291, %v1290
        %v1293 = vmul.f32 0.5, %v1292
        %v1294 = vsub.f32 1.5, %v1293
        %v1295 = vmul.f32 %v1290, %v1294
        %vm1296 = vweird.f32 %v1289
        %vm1297 = vweird.f32 %v1290
        %vm1298 = vmor %vm1296, %vm1297
        %v1299 = vsel %vm1298, %v1290, %v1295
        %v1300 = vmul.f32 %v1285, %v1299
        %1302 = vrot.lane.b32.xlu0 %v1286, 96
        %v1303 = vpop.permute.xlu0 %1302
        %v1305 = vsel %vm406, %v1303, 0.0
        %1306 = vadd.xlane.f32.xlu0 %v1305
        %v1307 = vpop.xlane.xlu0 %1306
        %v1308 = vrsqrt.pop %v1307
        %v1309 = vmul.f32 %v1308, %v1307
        %v1310 = vmul.f32 %v1309, %v1308
        %v1311 = vmul.f32 0.5, %v1310
        %v1312 = vsub.f32 1.5, %v1311
        %v1313 = vmul.f32 %v1308, %v1312
        %vm1314 = vweird.f32 %v1307
        %vm1315 = vweird.f32 %v1308
        %vm1316 = vmor %vm1314, %vm1315
        %v1317 = vsel %vm1316, %v1308, %v1313
        %v1318 = vmul.f32 %v1285, %v1317
        %v1319 = vsel %vm406, %v1300, %v1318
        %v1320 = vsub.f32 %v1319, %v1222
        %v1321 = vmul.f32 %v1320, %v1320
        %v1322 = vadd.f32 %v1105, %v1321
        %1323 = vset.pattern.permute.xlu0 10
        %1324 = vperm.xlu0 %1323, %v319
        %v1325 = vpop.permute.xlu0 %1324
        %vm1326 = vcmp.eq.s32.totalorder %v1325, 1
        %v1327 = vsel %vm1326, %v305, %v303
        %1328 = vset.pattern.permute.xlu0 11
        %1329 = vperm.xlu0 %1328, %v319
        %v1330 = vpop.permute.xlu0 %1329
        %vm1331 = vcmp.eq.s32.totalorder %v1330, 1
        %v1332 = vsel %vm1331, %v305, %v303
        %1333 = vset.pattern.permute.xlu0 10
        %1334 = vperm.xlu0 %1333, %v331
        %v1335 = vpop.permute.xlu0 %1334
        %vm1336 = vcmp.eq.s32.totalorder %v1335, 1
        %v1337 = vsel %vm1336, %v307, %v1327
        %1338 = vset.pattern.permute.xlu0 11
        %1339 = vperm.xlu0 %1338, %v331
        %v1340 = vpop.permute.xlu0 %1339
        %vm1341 = vcmp.eq.s32.totalorder %v1340, 1
        %v1342 = vsel %vm1341, %v307, %v1332
        %1343 = vset.pattern.permute.xlu0 10
        %1344 = vperm.xlu0 %1343, %v343
        %v1345 = vpop.permute.xlu0 %1344
        %vm1346 = vcmp.eq.s32.totalorder %v1345, 1
        %v1347 = vsel %vm1346, %v309, %v1337
        %1348 = vset.pattern.permute.xlu0 11
        %1349 = vperm.xlu0 %1348, %v343
        %v1350 = vpop.permute.xlu0 %1349
        %vm1351 = vcmp.eq.s32.totalorder %v1350, 1
        %v1352 = vsel %vm1351, %v309, %v1342
        %1353 = vset.pattern.permute.xlu0 10
        %1354 = vperm.xlu0 %1353, %v355
        %v1355 = vpop.permute.xlu0 %1354
        %vm1356 = vcmp.eq.s32.totalorder %v1355, 1
        %v1357 = vsel %vm1356, %v311, %v1347
        %1358 = vset.pattern.permute.xlu0 11
        %1359 = vperm.xlu0 %1358, %v355
        %v1360 = vpop.permute.xlu0 %1359
        %vm1361 = vcmp.eq.s32.totalorder %v1360, 1
        %v1362 = vsel %vm1361, %v311, %v1352
        %1363 = vset.pattern.permute.xlu0 10
        %1364 = vperm.xlu0 %1363, %v367
        %v1365 = vpop.permute.xlu0 %1364
        %vm1366 = vcmp.eq.s32.totalorder %v1365, 1
        %v1367 = vsel %vm1366, %v313, %v1357
        %1368 = vset.pattern.permute.xlu0 11
        %1369 = vperm.xlu0 %1368, %v367
        %v1370 = vpop.permute.xlu0 %1369
        %vm1371 = vcmp.eq.s32.totalorder %v1370, 1
        %v1372 = vsel %vm1371, %v313, %v1362
        %1373 = vset.pattern.permute.xlu0 10
        %1374 = vperm.xlu0 %1373, %v379
        %v1375 = vpop.permute.xlu0 %1374
        %vm1376 = vcmp.eq.s32.totalorder %v1375, 1
        %v1377 = vsel %vm1376, %v315, %v1367
        %1378 = vset.pattern.permute.xlu0 11
        %1379 = vperm.xlu0 %1378, %v379
        %v1380 = vpop.permute.xlu0 %1379
        %vm1381 = vcmp.eq.s32.totalorder %v1380, 1
        %v1382 = vsel %vm1381, %v315, %v1372
        %1383 = vset.pattern.permute.xlu0 10
        %1384 = vperm.xlu0 %1383, %v391
        %v1385 = vpop.permute.xlu0 %1384
        %vm1386 = vcmp.eq.s32.totalorder %v1385, 1
        %v1387 = vsel %vm1386, %v317, %v1377
        %1388 = vset.pattern.permute.xlu0 11
        %1389 = vperm.xlu0 %1388, %v391
        %v1390 = vpop.permute.xlu0 %1389
        %vm1391 = vcmp.eq.s32.totalorder %v1390, 1
        %v1392 = vsel %vm1391, %v317, %v1382
        %1393 = vset.pattern.permute.xlu0 10
        %1394 = vperm.xlu0 %1393, %v586
        %v1395 = vpop.permute.xlu0 %1394
        %vm1396 = vcmp.eq.s32.totalorder %v1395, 1
        %v1397 = vsel %vm1396, %v450, %v1387
        %1398 = vset.pattern.permute.xlu0 11
        %1399 = vperm.xlu0 %1398, %v586
        %v1400 = vpop.permute.xlu0 %1399
        %vm1401 = vcmp.eq.s32.totalorder %v1400, 1
        %v1402 = vsel %vm1401, %v450, %v1392
        %1403 = vset.pattern.permute.xlu0 10
        %1404 = vperm.xlu0 %1403, %v783
        %v1405 = vpop.permute.xlu0 %1404
        %vm1406 = vcmp.eq.s32.totalorder %v1405, 1
        %v1407 = vsel %vm1406, %v640, %v1397
        %1408 = vset.pattern.permute.xlu0 11
        %1409 = vperm.xlu0 %1408, %v783
        %v1410 = vpop.permute.xlu0 %1409
        %vm1411 = vcmp.eq.s32.totalorder %v1410, 1
        %v1412 = vsel %vm1411, %v640, %v1402
        %1413 = vset.pattern.permute.xlu0 10
        %1414 = vperm.xlu0 %1413, %v990
        %v1415 = vpop.permute.xlu0 %1414
        %vm1416 = vcmp.eq.s32.totalorder %v1415, 1
        %v1417 = vsel %vm1416, %v837, %v1407
        %1418 = vset.pattern.permute.xlu0 11
        %1419 = vperm.xlu0 %1418, %v990
        %v1420 = vpop.permute.xlu0 %1419
        %vm1421 = vcmp.eq.s32.totalorder %v1420, 1
        %v1422 = vsel %vm1421, %v837, %v1412
        %1423 = vset.pattern.permute.xlu0 10
        %1424 = vperm.xlu0 %1423, %v1207
        %v1425 = vpop.permute.xlu0 %1424
        %vm1426 = vcmp.eq.s32.totalorder %v1425, 1
        %v1427 = vsel %vm1426, %v1044, %v1417
        %1428 = vset.pattern.permute.xlu0 11
        %1429 = vperm.xlu0 %1428, %v1207
        %v1430 = vpop.permute.xlu0 %1429
        %vm1431 = vcmp.eq.s32.totalorder %v1430, 1
        %v1432 = vsel %vm1431, %v1044, %v1422
        %vm1433 = vcmp.eq.s32.totalorder %v302, 12
        %v1434 = vsel %vm1433, 1, 0
        %1435 = vset.pattern.permute.xlu0 10
        %1436 = vperm.xlu0 %1435, %v1434
        %v1437 = vpop.permute.xlu0 %1436
        %vm1438 = vcmp.eq.s32.totalorder %v1437, 1
        %v1439 = vsel %vm1438, %v1261, %v1427
        %1440 = vset.pattern.permute.xlu0 11
        %1441 = vperm.xlu0 %1440, %v1434
        %v1442 = vpop.permute.xlu0 %1441
        %vm1443 = vcmp.eq.s32.totalorder %v1442, 1
        %v1444 = vsel %vm1443, %v1261, %v1432
        %1446 = vrot.lane.b32.xlu0 %v1444, 32
        %v1447 = vpop.permute.xlu0 %1446
        %v1449 = vsel %vm406, %v1439, %v1447
        %v1451 = vsel %vm411, %v1449, 0
        %1453 = vmatpush.msra.mxu0 0.0
        %1454 = vmatpush.msra.mxu0 0.0
        %1455 = vmatpush.msra.mxu0 0.0
        %1456 = vmatpush.msra.mxu0 0.0
        %1457 = vmatpush.msra.mxu0 0.0
        %1458 = vmatpush.msra.mxu0 0.0
        %1459 = vmatpush.msra.mxu0 0.0
        %1460 = vmatpush.msra.mxu0 0.0
        %1461 = vmatpush.msra.mxu0 %v295
        %1462 = vmatpush.msra.mxu0 %v294
        %1463 = vmatpush.msra.mxu0 %v293
        %1464 = vmatpush.msra.mxu0 %v292
        %1465 = vmatpush.msra.mxu0 %v291
        %1466 = vmatpush.msra.mxu0 %v290
        %1467 = vmatpush.msra.mxu0 %v289
        %1468 = vmatpush.msra.mxu0 %v288
        %1469 = vmatmul.f32.gmra.mxu0 %v1451
        %v1470 = vpop.f32.mrf.mxu0
        %v1471 = vadd.f32 %v409, %v1470
        %1472 = vdwg.mxu0
        %v1473 = vtanh.pop %v1471
        %v1474 = vmul.f32 %v1473, %v1473
        %v1475 = vsel %vm406, %v1474, 0.0
        %1476 = vadd.xlane.f32.xlu0 %v1475
        %v1477 = vpop.xlane.xlu0 %1476
        %v1478 = vrsqrt.pop %v1477
        %v1479 = vmul.f32 %v1478, %v1477
        %v1480 = vmul.f32 %v1479, %v1478
        %v1481 = vmul.f32 0.5, %v1480
        %v1482 = vsub.f32 1.5, %v1481
        %v1483 = vmul.f32 %v1478, %v1482
        %vm1484 = vweird.f32 %v1477
        %vm1485 = vweird.f32 %v1478
        %vm1486 = vmor %vm1484, %vm1485
        %v1487 = vsel %vm1486, %v1478, %v1483
        %v1488 = vmul.f32 %v1473, %v1487
        %v1490 = vsel %vm406, %v1488, 0
        %1492 = vmatpush.msra.mxu0 0.0
        %1493 = vmatpush.msra.mxu0 0.0
        %1494 = vmatpush.msra.mxu0 0.0
        %1495 = vmatpush.msra.mxu0 0.0
        %1496 = vmatpush.msra.mxu0 0.0
        %1497 = vmatpush.msra.mxu0 0.0
        %1498 = vmatpush.msra.mxu0 0.0
        %1499 = vmatpush.msra.mxu0 0.0
        %1500 = vmatpush.msra.mxu0 0.0
        %1501 = vmatpush.msra.mxu0 0.0
        %1502 = vmatpush.msra.mxu0 0.0
        %1503 = vmatpush.msra.mxu0 0.0
        %1504 = vmatpush.msra.mxu0 %v300
        %1505 = vmatpush.msra.mxu0 %v299
        %1506 = vmatpush.msra.mxu0 %v298
        %1507 = vmatpush.msra.mxu0 %v297
        %1508 = vmatmul.f32.gmra.mxu0 %v1490
        %v1509 = vpop.f32.mrf.mxu0
        %v1510 = vadd.f32 %v452, %v1509
        %1511 = vdwg.mxu0
        %v1512 = vtanh.pop %v1510
        %v1513 = vmul.f32 %v1512, %v1512
        %v1514 = vsel %vm406, %v1513, 0.0
        %1515 = vadd.xlane.f32.xlu0 %v1514
        %v1516 = vpop.xlane.xlu0 %1515
        %v1517 = vrsqrt.pop %v1516
        %v1518 = vmul.f32 %v1517, %v1516
        %v1519 = vmul.f32 %v1518, %v1517
        %v1520 = vmul.f32 0.5, %v1519
        %v1521 = vsub.f32 1.5, %v1520
        %v1522 = vmul.f32 %v1517, %v1521
        %vm1523 = vweird.f32 %v1516
        %vm1524 = vweird.f32 %v1517
        %vm1525 = vmor %vm1523, %vm1524
        %v1526 = vsel %vm1525, %v1517, %v1522
        %v1527 = vmul.f32 %v1512, %v1526
        %1529 = vrot.lane.b32.xlu0 %v1513, 96
        %v1530 = vpop.permute.xlu0 %1529
        %v1532 = vsel %vm406, %v1530, 0.0
        %1533 = vadd.xlane.f32.xlu0 %v1532
        %v1534 = vpop.xlane.xlu0 %1533
        %v1535 = vrsqrt.pop %v1534
        %v1536 = vmul.f32 %v1535, %v1534
        %v1537 = vmul.f32 %v1536, %v1535
        %v1538 = vmul.f32 0.5, %v1537
        %v1539 = vsub.f32 1.5, %v1538
        %v1540 = vmul.f32 %v1535, %v1539
        %vm1541 = vweird.f32 %v1534
        %vm1542 = vweird.f32 %v1535
        %vm1543 = vmor %vm1541, %vm1542
        %v1544 = vsel %vm1543, %v1535, %v1540
        %v1545 = vmul.f32 %v1512, %v1544
        %v1546 = vsel %vm406, %v1527, %v1545
        %v1547 = vsub.f32 %v1546, %v1449
        %v1548 = vmul.f32 %v1547, %v1547
        %v1549 = vadd.f32 %v1322, %v1548
        %1550 = vset.pattern.permute.xlu0 12
        %1551 = vperm.xlu0 %1550, %v319
        %v1552 = vpop.permute.xlu0 %1551
        %vm1553 = vcmp.eq.s32.totalorder %v1552, 1
        %v1554 = vsel %vm1553, %v305, %v303
        %1555 = vset.pattern.permute.xlu0 13
        %1556 = vperm.xlu0 %1555, %v319
        %v1557 = vpop.permute.xlu0 %1556
        %vm1558 = vcmp.eq.s32.totalorder %v1557, 1
        %v1559 = vsel %vm1558, %v305, %v303
        %1560 = vset.pattern.permute.xlu0 12
        %1561 = vperm.xlu0 %1560, %v331
        %v1562 = vpop.permute.xlu0 %1561
        %vm1563 = vcmp.eq.s32.totalorder %v1562, 1
        %v1564 = vsel %vm1563, %v307, %v1554
        %1565 = vset.pattern.permute.xlu0 13
        %1566 = vperm.xlu0 %1565, %v331
        %v1567 = vpop.permute.xlu0 %1566
        %vm1568 = vcmp.eq.s32.totalorder %v1567, 1
        %v1569 = vsel %vm1568, %v307, %v1559
        %1570 = vset.pattern.permute.xlu0 12
        %1571 = vperm.xlu0 %1570, %v343
        %v1572 = vpop.permute.xlu0 %1571
        %vm1573 = vcmp.eq.s32.totalorder %v1572, 1
        %v1574 = vsel %vm1573, %v309, %v1564
        %1575 = vset.pattern.permute.xlu0 13
        %1576 = vperm.xlu0 %1575, %v343
        %v1577 = vpop.permute.xlu0 %1576
        %vm1578 = vcmp.eq.s32.totalorder %v1577, 1
        %v1579 = vsel %vm1578, %v309, %v1569
        %1580 = vset.pattern.permute.xlu0 12
        %1581 = vperm.xlu0 %1580, %v355
        %v1582 = vpop.permute.xlu0 %1581
        %vm1583 = vcmp.eq.s32.totalorder %v1582, 1
        %v1584 = vsel %vm1583, %v311, %v1574
        %1585 = vset.pattern.permute.xlu0 13
        %1586 = vperm.xlu0 %1585, %v355
        %v1587 = vpop.permute.xlu0 %1586
        %vm1588 = vcmp.eq.s32.totalorder %v1587, 1
        %v1589 = vsel %vm1588, %v311, %v1579
        %1590 = vset.pattern.permute.xlu0 12
        %1591 = vperm.xlu0 %1590, %v367
        %v1592 = vpop.permute.xlu0 %1591
        %vm1593 = vcmp.eq.s32.totalorder %v1592, 1
        %v1594 = vsel %vm1593, %v313, %v1584
        %1595 = vset.pattern.permute.xlu0 13
        %1596 = vperm.xlu0 %1595, %v367
        %v1597 = vpop.permute.xlu0 %1596
        %vm1598 = vcmp.eq.s32.totalorder %v1597, 1
        %v1599 = vsel %vm1598, %v313, %v1589
        %1600 = vset.pattern.permute.xlu0 12
        %1601 = vperm.xlu0 %1600, %v379
        %v1602 = vpop.permute.xlu0 %1601
        %vm1603 = vcmp.eq.s32.totalorder %v1602, 1
        %v1604 = vsel %vm1603, %v315, %v1594
        %1605 = vset.pattern.permute.xlu0 13
        %1606 = vperm.xlu0 %1605, %v379
        %v1607 = vpop.permute.xlu0 %1606
        %vm1608 = vcmp.eq.s32.totalorder %v1607, 1
        %v1609 = vsel %vm1608, %v315, %v1599
        %1610 = vset.pattern.permute.xlu0 12
        %1611 = vperm.xlu0 %1610, %v391
        %v1612 = vpop.permute.xlu0 %1611
        %vm1613 = vcmp.eq.s32.totalorder %v1612, 1
        %v1614 = vsel %vm1613, %v317, %v1604
        %1615 = vset.pattern.permute.xlu0 13
        %1616 = vperm.xlu0 %1615, %v391
        %v1617 = vpop.permute.xlu0 %1616
        %vm1618 = vcmp.eq.s32.totalorder %v1617, 1
        %v1619 = vsel %vm1618, %v317, %v1609
        %1620 = vset.pattern.permute.xlu0 12
        %1621 = vperm.xlu0 %1620, %v586
        %v1622 = vpop.permute.xlu0 %1621
        %vm1623 = vcmp.eq.s32.totalorder %v1622, 1
        %v1624 = vsel %vm1623, %v450, %v1614
        %1625 = vset.pattern.permute.xlu0 13
        %1626 = vperm.xlu0 %1625, %v586
        %v1627 = vpop.permute.xlu0 %1626
        %vm1628 = vcmp.eq.s32.totalorder %v1627, 1
        %v1629 = vsel %vm1628, %v450, %v1619
        %1630 = vset.pattern.permute.xlu0 12
        %1631 = vperm.xlu0 %1630, %v783
        %v1632 = vpop.permute.xlu0 %1631
        %vm1633 = vcmp.eq.s32.totalorder %v1632, 1
        %v1634 = vsel %vm1633, %v640, %v1624
        %1635 = vset.pattern.permute.xlu0 13
        %1636 = vperm.xlu0 %1635, %v783
        %v1637 = vpop.permute.xlu0 %1636
        %vm1638 = vcmp.eq.s32.totalorder %v1637, 1
        %v1639 = vsel %vm1638, %v640, %v1629
        %1640 = vset.pattern.permute.xlu0 12
        %1641 = vperm.xlu0 %1640, %v990
        %v1642 = vpop.permute.xlu0 %1641
        %vm1643 = vcmp.eq.s32.totalorder %v1642, 1
        %v1644 = vsel %vm1643, %v837, %v1634
        %1645 = vset.pattern.permute.xlu0 13
        %1646 = vperm.xlu0 %1645, %v990
        %v1647 = vpop.permute.xlu0 %1646
        %vm1648 = vcmp.eq.s32.totalorder %v1647, 1
        %v1649 = vsel %vm1648, %v837, %v1639
        %1650 = vset.pattern.permute.xlu0 12
        %1651 = vperm.xlu0 %1650, %v1207
        %v1652 = vpop.permute.xlu0 %1651
        %vm1653 = vcmp.eq.s32.totalorder %v1652, 1
        %v1654 = vsel %vm1653, %v1044, %v1644
        %1655 = vset.pattern.permute.xlu0 13
        %1656 = vperm.xlu0 %1655, %v1207
        %v1657 = vpop.permute.xlu0 %1656
        %vm1658 = vcmp.eq.s32.totalorder %v1657, 1
        %v1659 = vsel %vm1658, %v1044, %v1649
        %1660 = vset.pattern.permute.xlu0 12
        %1661 = vperm.xlu0 %1660, %v1434
        %v1662 = vpop.permute.xlu0 %1661
        %vm1663 = vcmp.eq.s32.totalorder %v1662, 1
        %v1664 = vsel %vm1663, %v1261, %v1654
        %1665 = vset.pattern.permute.xlu0 13
        %1666 = vperm.xlu0 %1665, %v1434
        %v1667 = vpop.permute.xlu0 %1666
        %vm1668 = vcmp.eq.s32.totalorder %v1667, 1
        %v1669 = vsel %vm1668, %v1261, %v1659
        %vm1670 = vcmp.eq.s32.totalorder %v302, 13
        %v1671 = vsel %vm1670, 1, 0
        %1672 = vset.pattern.permute.xlu0 12
        %1673 = vperm.xlu0 %1672, %v1671
        %v1674 = vpop.permute.xlu0 %1673
        %vm1675 = vcmp.eq.s32.totalorder %v1674, 1
        %v1676 = vsel %vm1675, %v1488, %v1664
        %1677 = vset.pattern.permute.xlu0 13
        %1678 = vperm.xlu0 %1677, %v1671
        %v1679 = vpop.permute.xlu0 %1678
        %vm1680 = vcmp.eq.s32.totalorder %v1679, 1
        %v1681 = vsel %vm1680, %v1488, %v1669
        %1683 = vrot.lane.b32.xlu0 %v1681, 32
        %v1684 = vpop.permute.xlu0 %1683
        %v1686 = vsel %vm406, %v1676, %v1684
        %v1688 = vsel %vm411, %v1686, 0
        %1690 = vmatpush.msra.mxu0 0.0
        %1691 = vmatpush.msra.mxu0 0.0
        %1692 = vmatpush.msra.mxu0 0.0
        %1693 = vmatpush.msra.mxu0 0.0
        %1694 = vmatpush.msra.mxu0 0.0
        %1695 = vmatpush.msra.mxu0 0.0
        %1696 = vmatpush.msra.mxu0 0.0
        %1697 = vmatpush.msra.mxu0 0.0
        %1698 = vmatpush.msra.mxu0 %v295
        %1699 = vmatpush.msra.mxu0 %v294
        %1700 = vmatpush.msra.mxu0 %v293
        %1701 = vmatpush.msra.mxu0 %v292
        %1702 = vmatpush.msra.mxu0 %v291
        %1703 = vmatpush.msra.mxu0 %v290
        %1704 = vmatpush.msra.mxu0 %v289
        %1705 = vmatpush.msra.mxu0 %v288
        %1706 = vmatmul.f32.gmra.mxu0 %v1688
        %v1707 = vpop.f32.mrf.mxu0
        %v1708 = vadd.f32 %v409, %v1707
        %1709 = vdwg.mxu0
        %v1710 = vtanh.pop %v1708
        %v1711 = vmul.f32 %v1710, %v1710
        %v1712 = vsel %vm406, %v1711, 0.0
        %1713 = vadd.xlane.f32.xlu0 %v1712
        %v1714 = vpop.xlane.xlu0 %1713
        %v1715 = vrsqrt.pop %v1714
        %v1716 = vmul.f32 %v1715, %v1714
        %v1717 = vmul.f32 %v1716, %v1715
        %v1718 = vmul.f32 0.5, %v1717
        %v1719 = vsub.f32 1.5, %v1718
        %v1720 = vmul.f32 %v1715, %v1719
        %vm1721 = vweird.f32 %v1714
        %vm1722 = vweird.f32 %v1715
        %vm1723 = vmor %vm1721, %vm1722
        %v1724 = vsel %vm1723, %v1715, %v1720
        %v1725 = vmul.f32 %v1710, %v1724
        %v1727 = vsel %vm406, %v1725, 0
        %1729 = vmatpush.msra.mxu0 0.0
        %1730 = vmatpush.msra.mxu0 0.0
        %1731 = vmatpush.msra.mxu0 0.0
        %1732 = vmatpush.msra.mxu0 0.0
        %1733 = vmatpush.msra.mxu0 0.0
        %1734 = vmatpush.msra.mxu0 0.0
        %1735 = vmatpush.msra.mxu0 0.0
        %1736 = vmatpush.msra.mxu0 0.0
        %1737 = vmatpush.msra.mxu0 0.0
        %1738 = vmatpush.msra.mxu0 0.0
        %1739 = vmatpush.msra.mxu0 0.0
        %1740 = vmatpush.msra.mxu0 0.0
        %1741 = vmatpush.msra.mxu0 %v300
        %1742 = vmatpush.msra.mxu0 %v299
        %1743 = vmatpush.msra.mxu0 %v298
        %1744 = vmatpush.msra.mxu0 %v297
        %1745 = vmatmul.f32.gmra.mxu0 %v1727
        %v1746 = vpop.f32.mrf.mxu0
        %v1747 = vadd.f32 %v452, %v1746
        %1748 = vdwg.mxu0
        %v1749 = vtanh.pop %v1747
        %v1750 = vmul.f32 %v1749, %v1749
        %v1751 = vsel %vm406, %v1750, 0.0
        %1752 = vadd.xlane.f32.xlu0 %v1751
        %v1753 = vpop.xlane.xlu0 %1752
        %v1754 = vrsqrt.pop %v1753
        %v1755 = vmul.f32 %v1754, %v1753
        %v1756 = vmul.f32 %v1755, %v1754
        %v1757 = vmul.f32 0.5, %v1756
        %v1758 = vsub.f32 1.5, %v1757
        %v1759 = vmul.f32 %v1754, %v1758
        %vm1760 = vweird.f32 %v1753
        %vm1761 = vweird.f32 %v1754
        %vm1762 = vmor %vm1760, %vm1761
        %v1763 = vsel %vm1762, %v1754, %v1759
        %v1764 = vmul.f32 %v1749, %v1763
        %1766 = vrot.lane.b32.xlu0 %v1750, 96
        %v1767 = vpop.permute.xlu0 %1766
        %v1769 = vsel %vm406, %v1767, 0.0
        %1770 = vadd.xlane.f32.xlu0 %v1769
        %v1771 = vpop.xlane.xlu0 %1770
        %v1772 = vrsqrt.pop %v1771
        %v1773 = vmul.f32 %v1772, %v1771
        %v1774 = vmul.f32 %v1773, %v1772
        %v1775 = vmul.f32 0.5, %v1774
        %v1776 = vsub.f32 1.5, %v1775
        %v1777 = vmul.f32 %v1772, %v1776
        %vm1778 = vweird.f32 %v1771
        %vm1779 = vweird.f32 %v1772
        %vm1780 = vmor %vm1778, %vm1779
        %v1781 = vsel %vm1780, %v1772, %v1777
        %v1782 = vmul.f32 %v1749, %v1781
        %v1783 = vsel %vm406, %v1764, %v1782
        %v1784 = vsub.f32 %v1783, %v1686
        %v1785 = vmul.f32 %v1784, %v1784
        %v1786 = vadd.f32 %v1549, %v1785
        %v1787 = vsel %vm411, %v1786, 0.0
        %1788 = vadd.xlane.f32.xlu0 %v1787
        %v1789 = vpop.xlane.xlu0 %1788
        %v1790 = vmul.f32 %v1789, 0.5
        %1791 = vst [vmem:[%s283] sm:$0xff] %v1790
        %s1792 = sand.u32 %s167, 1
        %s1793 = scalar_lea.sflag [#allocation4], %s1792
        %s1794 = sand.u32 %s167, 1
        %s1795 = smul.addr %s1794, 8
        %s1796 = scalar_lea.vmem [#allocation5], %s1795
        // Predicated region
        $region49: #{tpu_custom_call.1} parent=43 // pred_check
          %p1797 = pneg %p177
        $region50: #{tpu_custom_call.1} parent=43 // pred_check_branch
          %1799 = sbr.rel (%p1797) target = $region52
        $region51: #{tpu_custom_call.1} parent=43 // pred_region
          %1801 = vsyncadd %s1793, 0
          %s1802 = smul.addr %s23, 8
          %s1803 = scalar_lea.hbm %s6, %s1802
          %s1805 = sshll.u32 %s1796, 4
          %s1806 = int_to_ptr.vmem [resolvable:$true] %s1805
          %s1807 = sshll.u32 %s1803, 4
          %s1808 = int_to_ptr.hbm [resolvable:$true] %s1807
          %1810 = dma.vmem_to_hbm [thread:$0]  %s1806, 128, %s1808, %s1793
        $region52: #{tpu_custom_call.1} parent=43 // pred_fallthru
          _
      $region44: #{tpu_custom_call.1} parent=5 // pred_fallthru
        _
      %p1811 = scmp.le.s32.totalorder 2, %s18
      // Predicated region
      $region53: #{tpu_custom_call.1} parent=5 // pred_check
        %p1812 = pneg %p1811
      $region54: #{tpu_custom_call.1} parent=5 // pred_check_branch
        %1814 = sbr.rel (%p1812) target = $region56
      $region55: #{tpu_custom_call.1} parent=5 // pred_region
        %s1815 = ssub.s32 %s18, 2
        // Predicated region
        $region57: #{tpu_custom_call.1} parent=55 // pred_check
          %p1816 = pneg %p183
        $region58: #{tpu_custom_call.1} parent=55 // pred_check_branch
          %1818 = sbr.rel (%p1816) target = $region60
        $region59: #{tpu_custom_call.1} parent=55 // pred_region
          %s1819 = sand.u32 %s168, 1
          %s1820 = scalar_lea.sflag [#allocation4], %s1819
          %s1821 = sand.u32 %s168, 1
          %s1822 = smul.addr %s1821, 8
          %s1823 = scalar_lea.vmem [#allocation5], %s1822
          %1825 = dma.done %s1820, 128
        $region60: #{tpu_custom_call.1} parent=55 // pred_fallthru
          _
      $region56: #{tpu_custom_call.1} parent=5 // pred_fallthru
        _
    $region6: #{tpu_custom_call.1} parent=1 // loop_footer
      %s22 = sadd.s32 1, %s18
    $region7: #{tpu_custom_call.1} parent=1 // loop_footer_branch
      %17 = sbr.rel target = $region3
    $region8: #{tpu_custom_call.1} parent=1 // loop_exit
      _
    %1826 = vsyncpa [#allocation3], 1
    %s1827 = scalar_lea.sflag [#allocation3], 1
    %1828 = vsyncpa %s1827, 1
    %1829 = vsyncpa [#allocation4], 1
    %s1830 = scalar_lea.sflag [#allocation4], 1
    %1831 = vsyncpa %s1830, 1

</llo_original>
